<compile_context>
chip_gen: v7x
topology: tpu7x:2x2x1
jax: 0.10.0
libtpu: 0.0.40
codegen_flags: <defaults>
</compile_context>

<pallas_src>
import numpy as np
import jax
import jax.numpy as jnp
from jax import lax
from jax.experimental import pallas as pl
from jax.experimental.pallas import tpu as pltpu


def _round_up(x, m):
    return (x + m - 1) // m * m


def _fused_encoder_kernel(*refs):
    """Fully fused encoder over the whole (batch-folded) input.

    refs layout:
      p0_ref : (N*R1p, 9*C0)      layer-0 im2col patches (built in the wrapper)
      w0_ref : (9*C0, C1)         layer-0 flattened weights
      b0_ref : (1, C1)
      then per later layer l:
        sel_ref : (9*N*Rop, N*Rip)  stacked one-hot gather (block-diag over batch)
        w_ref   : (9, Cin, Cout)
        b_ref   : (1, Cout)
      o_ref  : (N*R_last_p, C_last)
    """
    o_ref = refs[-1]
    p0_ref, w0_ref, b0_ref = refs[0], refs[1], refs[2]
    layer_refs = refs[3:-1]
    n_layers = len(layer_refs) // 3

    # Layer 0: one matmul on the wrapper-built im2col patches.
    a = jnp.dot(p0_ref[...], w0_ref[...], preferred_element_type=jnp.float32)
    a = jnp.maximum(a + b0_ref[...], 0.0)

    # Layers 1..: one stacked gather matmul + 9 per-tap weight matmuls.
    for l in range(n_layers):                          # statically unrolled
        sel_ref = layer_refs[3 * l + 0]
        w_ref = layer_refs[3 * l + 1]
        b_ref = layer_refs[3 * l + 2]
        rows_out = sel_ref.shape[0] // 9               # N * R_out_pad (multiple of 8)
        cout = w_ref.shape[2]

        g = jnp.dot(sel_ref[...], a, preferred_element_type=jnp.float32)  # (9*rows, cin)
        acc = jnp.zeros((rows_out, cout), jnp.float32)
        for k in range(9):                             # 8-aligned static row slices
            acc = acc + jnp.dot(g[k * rows_out:(k + 1) * rows_out, :], w_ref[k],
                                preferred_element_type=jnp.float32)
        a = jnp.maximum(acc + b_ref[...], 0.0)         # bias + ReLU in f32 (VPU)

    o_ref[...] = a.astype(o_ref.dtype)                 # single tiny store


def _build_sel_stack(h_in, w_in, r_in_pad, h_out, w_out, r_out_pad, n_batch):
    """(9*N*r_out_pad, N*r_in_pad) f32 stacked one-hot gather (block-diag over batch).

    Row (k, n, ro) selects input row (n, 2*ho+kh-1, 2*wo+kw-1) of the padded,
    batch-folded activation; taps that fall in the zero padding and the r_out_pad
    padding rows are all-zero rows (contribute exactly zero).
    """
    sel = np.zeros((9, n_batch * r_out_pad, n_batch * r_in_pad), np.float32)
    for kh in range(3):
        for kw in range(3):
            k = kh * 3 + kw
            for ho in range(h_out):
                hi = 2 * ho + kh - 1
                if hi < 0 or hi >= h_in:
                    continue
                for wo in range(w_out):
                    wi = 2 * wo + kw - 1
                    if wi < 0 or wi >= w_in:
                        continue
                    for b in range(n_batch):
                        sel[k, b * r_out_pad + ho * w_out + wo,
                            b * r_in_pad + hi * w_in + wi] = 1.0
    return sel.reshape(9 * n_batch * r_out_pad, n_batch * r_in_pad)


def encoder_forward(x_nchw, params):
    """params: list of 4 (w, b) with w (3,3,Cin,Cout), b (Cout,). Returns NCHW."""
    n, c0, h0, w0 = x_nchw.shape
    x_nhwc = jnp.transpose(x_nchw, (0, 2, 3, 1)).astype(jnp.float32)

    # ---- layer-0 im2col in the wrapper (static strided slices on a tiny input) ----
    wgt0, bias0 = params[0]
    cin0, cout0 = wgt0.shape[2], wgt0.shape[3]
    h1, w1 = (h0 + 1) // 2, (w0 + 1) // 2              # k=3, s=2, p=1
    xp = jnp.pad(x_nhwc, ((0, 0), (1, 1), (1, 1), (0, 0)))
    taps = []
    for kh in range(3):
        for kw in range(3):
            taps.append(xp[:, kh:kh + 2 * h1 - 1:2, kw:kw + 2 * w1 - 1:2, :])
    r1 = h1 * w1
    r1_pad = _round_up(r1, 8)
    patches = jnp.concatenate(taps, axis=-1).reshape(n, r1, 9 * cin0)
    if r1_pad != r1:
        patches = jnp.pad(patches, ((0, 0), (0, r1_pad - r1), (0, 0)))
    patches = patches.reshape(n * r1_pad, 9 * cin0)

    flat_inputs = [patches,
                   wgt0.reshape(9 * cin0, cout0).astype(jnp.float32),
                   bias0.reshape(1, cout0).astype(jnp.float32)]

    h_cur, w_cur, r_pad_cur = h1, w1, r1_pad
    for (wgt, bias) in params[1:]:
        cin, cout = wgt.shape[2], wgt.shape[3]
        h_o, w_o = (h_cur + 1) // 2, (w_cur + 1) // 2
        r_o_pad = _round_up(h_o * w_o, 8)
        sel = _build_sel_stack(h_cur, w_cur, r_pad_cur, h_o, w_o, r_o_pad, n)
        flat_inputs += [jnp.asarray(sel),
                        wgt.reshape(9, cin, cout).astype(jnp.float32),
                        bias.reshape(1, cout).astype(jnp.float32)]
        h_cur, w_cur, r_pad_cur = h_o, w_o, r_o_pad

    cout_f = params[-1][0].shape[3]
    rows_f = n * r_pad_cur

    def _full_spec(arr):
        nd = arr.ndim
        return pl.BlockSpec(arr.shape, lambda i, nd=nd: (0,) * nd)

    out = pl.pallas_call(
        _fused_encoder_kernel,
        out_shape=jax.ShapeDtypeStruct((rows_f, cout_f), jnp.float32),
        grid=(1,),                                     # batch folded into rows: 1 step
        in_specs=[_full_spec(a) for a in flat_inputs],
        out_specs=pl.BlockSpec((rows_f, cout_f), lambda i: (0, 0)),
        compiler_params=pltpu.CompilerParams(dimension_semantics=("arbitrary",)),
    )(*flat_inputs)

    # Drop the per-sample row padding, return NCHW.
    out = out.reshape(n, r_pad_cur, cout_f)[:, :h_cur * w_cur, :]
    return jnp.transpose(out.reshape(n, h_cur, w_cur, cout_f), (0, 3, 1, 2))


def _reference_forward(x_nchw, params):
    """Pure-JAX reference (XLA conv) for correctness check."""
    x = x_nchw
    for (w, b) in params:
        w_oihw = jnp.transpose(w, (3, 2, 0, 1))
        y = lax.conv_general_dilated(
            x, w_oihw, window_strides=(2, 2), padding=((1, 1), (1, 1)),
            dimension_numbers=("NCHW", "OIHW", "NCHW"))
        x = jnp.maximum(y + b.reshape(1, -1, 1, 1), 0.0)
    return x


if __name__ == "__main__":
    key = jax.random.PRNGKey(0)
    keys = jax.random.split(key, 9)
    kx, kws = keys[0], keys[1:]

    # Encoder(input_dim=1, filter_dim=32, output_dim=10); N=2, H=W=16.
    x = jax.random.normal(kx, (2, 1, 16, 16), dtype=jnp.float32)

    dims = [1, 32, 32, 32, 10]
    params = []
    for i in range(4):
        cin, cout = dims[i], dims[i + 1]
        wgt = jax.random.normal(kws[2 * i], (3, 3, cin, cout), dtype=jnp.float32) * 0.1
        b = jax.random.normal(kws[2 * i + 1], (cout,), dtype=jnp.float32) * 0.01
        params.append((wgt, b))

    fwd = jax.jit(encoder_forward)
    out = jax.block_until_ready(fwd(x, params))

    ref = _reference_forward(x, params)
    assert out.shape == (2, 10, 1, 1), out.shape
    assert jnp.allclose(out, ref, atol=1e-4, rtol=1e-4), "mismatch vs XLA reference"

    print("KERNEL_OK")
</pallas_src>

<mosaic_0001>
module attributes {stable_mosaic.version = 11 : i64} {
  func.func @_fused_encoder_kernel(%arg0: i32, %arg1: memref<128x9xf32, #tpu.memory_space<vmem>>, %arg2: memref<9x32xf32, #tpu.memory_space<vmem>>, %arg3: memref<1x32xf32, #tpu.memory_space<vmem>>, %arg4: memref<288x128xf32, #tpu.memory_space<vmem>>, %arg5: memref<9x32x32xf32, #tpu.memory_space<vmem>>, %arg6: memref<1x32xf32, #tpu.memory_space<vmem>>, %arg7: memref<144x32xf32, #tpu.memory_space<vmem>>, %arg8: memref<9x32x32xf32, #tpu.memory_space<vmem>>, %arg9: memref<1x32xf32, #tpu.memory_space<vmem>>, %arg10: memref<144x16xf32, #tpu.memory_space<vmem>>, %arg11: memref<9x32x10xf32, #tpu.memory_space<vmem>>, %arg12: memref<1x10xf32, #tpu.memory_space<vmem>>, %arg13: memref<16x10xf32, #tpu.memory_space<vmem>>) attributes {dimension_semantics = [#tpu.dimension_semantics<arbitrary>], iteration_bounds = array<i64: 1>, scalar_prefetch = 0 : i64, scratch_operands = 0 : i64, tpu.core_type = #tpu.core_type<tc>, window_params = [{pipeline_mode = #tpu.pipeline_mode<synchronous>, transform_indices = @transform_0, window_bounds = array<i64: 128, 9>}, {pipeline_mode = #tpu.pipeline_mode<synchronous>, transform_indices = @transform_1, window_bounds = array<i64: 9, 32>}, {pipeline_mode = #tpu.pipeline_mode<synchronous>, transform_indices = @transform_2, window_bounds = array<i64: 1, 32>}, {pipeline_mode = #tpu.pipeline_mode<synchronous>, transform_indices = @transform_3, window_bounds = array<i64: 288, 128>}, {pipeline_mode = #tpu.pipeline_mode<synchronous>, transform_indices = @transform_4, window_bounds = array<i64: 9, 32, 32>}, {pipeline_mode = #tpu.pipeline_mode<synchronous>, transform_indices = @transform_5, window_bounds = array<i64: 1, 32>}, {pipeline_mode = #tpu.pipeline_mode<synchronous>, transform_indices = @transform_6, window_bounds = array<i64: 144, 32>}, {pipeline_mode = #tpu.pipeline_mode<synchronous>, transform_indices = @transform_7, window_bounds = array<i64: 9, 32, 32>}, {pipeline_mode = #tpu.pipeline_mode<synchronous>, transform_indices = @transform_8, window_bounds = array<i64: 1, 32>}, {pipeline_mode = #tpu.pipeline_mode<synchronous>, transform_indices = @transform_9, window_bounds = array<i64: 144, 16>}, {pipeline_mode = #tpu.pipeline_mode<synchronous>, transform_indices = @transform_10, window_bounds = array<i64: 9, 32, 10>}, {pipeline_mode = #tpu.pipeline_mode<synchronous>, transform_indices = @transform_11, window_bounds = array<i64: 1, 10>}, {pipeline_mode = #tpu.pipeline_mode<synchronous>, transform_indices = @transform_12, window_bounds = array<i64: 16, 10>}]} {
    %c0 = arith.constant 0 : index
    %c0_0 = arith.constant 0 : index
    %0 = vector.load %arg1[%c0, %c0_0] : memref<128x9xf32, #tpu.memory_space<vmem>>, vector<128x9xf32>
    %c0_1 = arith.constant 0 : index
    %c0_2 = arith.constant 0 : index
    %1 = vector.load %arg2[%c0_1, %c0_2] : memref<9x32xf32, #tpu.memory_space<vmem>>, vector<9x32xf32>
    %cst = arith.constant dense<0.000000e+00> : vector<128x32xf32>
    %2 = tpu.matmul %0, %1, %cst {dimension_numbers = #tpu.dot_dimension_numbers<[1], [0], [0], [1], [0, 0, 1, 1], [], []>} : vector<128x9xf32>, vector<9x32xf32>, vector<128x32xf32> -> vector<128x32xf32>
    %c0_3 = arith.constant 0 : index
    %c0_4 = arith.constant 0 : index
    %3 = vector.load %arg3[%c0_3, %c0_4] : memref<1x32xf32, #tpu.memory_space<vmem>>, vector<1x32xf32>
    %4 = vector.broadcast %3 : vector<1x32xf32> to vector<128x32xf32>
    %5 = arith.addf %2, %4 : vector<128x32xf32>
    %cst_5 = arith.constant 0.000000e+00 : f32
    %6 = vector.broadcast %cst_5 : f32 to vector<128x32xf32>
    %7 = arith.maximumf %5, %6 : vector<128x32xf32>
    %c0_6 = arith.constant 0 : index
    %c0_7 = arith.constant 0 : index
    %8 = vector.load %arg4[%c0_6, %c0_7] : memref<288x128xf32, #tpu.memory_space<vmem>>, vector<288x128xf32>
    %cst_8 = arith.constant dense<0.000000e+00> : vector<288x32xf32>
    %9 = tpu.matmul %8, %7, %cst_8 {dimension_numbers = #tpu.dot_dimension_numbers<[1], [0], [0], [1], [0, 0, 1, 1], [], []>} : vector<288x128xf32>, vector<128x32xf32>, vector<288x32xf32> -> vector<288x32xf32>
    %cst_9 = arith.constant 0.000000e+00 : f32
    %10 = vector.broadcast %cst_9 : f32 to vector<32x32xf32>
    %11 = vector.extract_strided_slice %9 {offsets = [0, 0], sizes = [32, 32], strides = [1, 1]} : vector<288x32xf32> to vector<32x32xf32>
    %c0_10 = arith.constant 0 : index
    %c0_11 = arith.constant 0 : index
    %c0_12 = arith.constant 0 : index
    %12 = vector.load %arg5[%c0_10, %c0_11, %c0_12] : memref<9x32x32xf32, #tpu.memory_space<vmem>>, vector<1x32x32xf32>
    %13 = vector.shape_cast %12 : vector<1x32x32xf32> to vector<32x32xf32>
    %cst_13 = arith.constant dense<0.000000e+00> : vector<32x32xf32>
    %14 = tpu.matmul %11, %13, %cst_13 {dimension_numbers = #tpu.dot_dimension_numbers<[1], [0], [0], [1], [0, 0, 1, 1], [], []>} : vector<32x32xf32>, vector<32x32xf32>, vector<32x32xf32> -> vector<32x32xf32>
    %15 = arith.addf %10, %14 : vector<32x32xf32>
    %16 = vector.extract_strided_slice %9 {offsets = [32, 0], sizes = [32, 32], strides = [1, 1]} : vector<288x32xf32> to vector<32x32xf32>
    %c1 = arith.constant 1 : index
    %c0_14 = arith.constant 0 : index
    %c0_15 = arith.constant 0 : index
    %17 = vector.load %arg5[%c1, %c0_14, %c0_15] : memref<9x32x32xf32, #tpu.memory_space<vmem>>, vector<1x32x32xf32>
    %18 = vector.shape_cast %17 : vector<1x32x32xf32> to vector<32x32xf32>
    %cst_16 = arith.constant dense<0.000000e+00> : vector<32x32xf32>
    %19 = tpu.matmul %16, %18, %cst_16 {dimension_numbers = #tpu.dot_dimension_numbers<[1], [0], [0], [1], [0, 0, 1, 1], [], []>} : vector<32x32xf32>, vector<32x32xf32>, vector<32x32xf32> -> vector<32x32xf32>
    %20 = arith.addf %15, %19 : vector<32x32xf32>
    %21 = vector.extract_strided_slice %9 {offsets = [64, 0], sizes = [32, 32], strides = [1, 1]} : vector<288x32xf32> to vector<32x32xf32>
    %c2 = arith.constant 2 : index
    %c0_17 = arith.constant 0 : index
    %c0_18 = arith.constant 0 : index
    %22 = vector.load %arg5[%c2, %c0_17, %c0_18] : memref<9x32x32xf32, #tpu.memory_space<vmem>>, vector<1x32x32xf32>
    %23 = vector.shape_cast %22 : vector<1x32x32xf32> to vector<32x32xf32>
    %cst_19 = arith.constant dense<0.000000e+00> : vector<32x32xf32>
    %24 = tpu.matmul %21, %23, %cst_19 {dimension_numbers = #tpu.dot_dimension_numbers<[1], [0], [0], [1], [0, 0, 1, 1], [], []>} : vector<32x32xf32>, vector<32x32xf32>, vector<32x32xf32> -> vector<32x32xf32>
    %25 = arith.addf %20, %24 : vector<32x32xf32>
    %26 = vector.extract_strided_slice %9 {offsets = [96, 0], sizes = [32, 32], strides = [1, 1]} : vector<288x32xf32> to vector<32x32xf32>
    %c3 = arith.constant 3 : index
    %c0_20 = arith.constant 0 : index
    %c0_21 = arith.constant 0 : index
    %27 = vector.load %arg5[%c3, %c0_20, %c0_21] : memref<9x32x32xf32, #tpu.memory_space<vmem>>, vector<1x32x32xf32>
    %28 = vector.shape_cast %27 : vector<1x32x32xf32> to vector<32x32xf32>
    %cst_22 = arith.constant dense<0.000000e+00> : vector<32x32xf32>
    %29 = tpu.matmul %26, %28, %cst_22 {dimension_numbers = #tpu.dot_dimension_numbers<[1], [0], [0], [1], [0, 0, 1, 1], [], []>} : vector<32x32xf32>, vector<32x32xf32>, vector<32x32xf32> -> vector<32x32xf32>
    %30 = arith.addf %25, %29 : vector<32x32xf32>
    %31 = vector.extract_strided_slice %9 {offsets = [128, 0], sizes = [32, 32], strides = [1, 1]} : vector<288x32xf32> to vector<32x32xf32>
    %c4 = arith.constant 4 : index
    %c0_23 = arith.constant 0 : index
    %c0_24 = arith.constant 0 : index
    %32 = vector.load %arg5[%c4, %c0_23, %c0_24] : memref<9x32x32xf32, #tpu.memory_space<vmem>>, vector<1x32x32xf32>
    %33 = vector.shape_cast %32 : vector<1x32x32xf32> to vector<32x32xf32>
    %cst_25 = arith.constant dense<0.000000e+00> : vector<32x32xf32>
    %34 = tpu.matmul %31, %33, %cst_25 {dimension_numbers = #tpu.dot_dimension_numbers<[1], [0], [0], [1], [0, 0, 1, 1], [], []>} : vector<32x32xf32>, vector<32x32xf32>, vector<32x32xf32> -> vector<32x32xf32>
    %35 = arith.addf %30, %34 : vector<32x32xf32>
    %36 = vector.extract_strided_slice %9 {offsets = [160, 0], sizes = [32, 32], strides = [1, 1]} : vector<288x32xf32> to vector<32x32xf32>
    %c5 = arith.constant 5 : index
    %c0_26 = arith.constant 0 : index
    %c0_27 = arith.constant 0 : index
    %37 = vector.load %arg5[%c5, %c0_26, %c0_27] : memref<9x32x32xf32, #tpu.memory_space<vmem>>, vector<1x32x32xf32>
    %38 = vector.shape_cast %37 : vector<1x32x32xf32> to vector<32x32xf32>
    %cst_28 = arith.constant dense<0.000000e+00> : vector<32x32xf32>
    %39 = tpu.matmul %36, %38, %cst_28 {dimension_numbers = #tpu.dot_dimension_numbers<[1], [0], [0], [1], [0, 0, 1, 1], [], []>} : vector<32x32xf32>, vector<32x32xf32>, vector<32x32xf32> -> vector<32x32xf32>
    %40 = arith.addf %35, %39 : vector<32x32xf32>
    %41 = vector.extract_strided_slice %9 {offsets = [192, 0], sizes = [32, 32], strides = [1, 1]} : vector<288x32xf32> to vector<32x32xf32>
    %c6 = arith.constant 6 : index
    %c0_29 = arith.constant 0 : index
    %c0_30 = arith.constant 0 : index
    %42 = vector.load %arg5[%c6, %c0_29, %c0_30] : memref<9x32x32xf32, #tpu.memory_space<vmem>>, vector<1x32x32xf32>
    %43 = vector.shape_cast %42 : vector<1x32x32xf32> to vector<32x32xf32>
    %cst_31 = arith.constant dense<0.000000e+00> : vector<32x32xf32>
    %44 = tpu.matmul %41, %43, %cst_31 {dimension_numbers = #tpu.dot_dimension_numbers<[1], [0], [0], [1], [0, 0, 1, 1], [], []>} : vector<32x32xf32>, vector<32x32xf32>, vector<32x32xf32> -> vector<32x32xf32>
    %45 = arith.addf %40, %44 : vector<32x32xf32>
    %46 = vector.extract_strided_slice %9 {offsets = [224, 0], sizes = [32, 32], strides = [1, 1]} : vector<288x32xf32> to vector<32x32xf32>
    %c7 = arith.constant 7 : index
    %c0_32 = arith.constant 0 : index
    %c0_33 = arith.constant 0 : index
    %47 = vector.load %arg5[%c7, %c0_32, %c0_33] : memref<9x32x32xf32, #tpu.memory_space<vmem>>, vector<1x32x32xf32>
    %48 = vector.shape_cast %47 : vector<1x32x32xf32> to vector<32x32xf32>
    %cst_34 = arith.constant dense<0.000000e+00> : vector<32x32xf32>
    %49 = tpu.matmul %46, %48, %cst_34 {dimension_numbers = #tpu.dot_dimension_numbers<[1], [0], [0], [1], [0, 0, 1, 1], [], []>} : vector<32x32xf32>, vector<32x32xf32>, vector<32x32xf32> -> vector<32x32xf32>
    %50 = arith.addf %45, %49 : vector<32x32xf32>
    %51 = vector.extract_strided_slice %9 {offsets = [256, 0], sizes = [32, 32], strides = [1, 1]} : vector<288x32xf32> to vector<32x32xf32>
    %c8 = arith.constant 8 : index
    %c0_35 = arith.constant 0 : index
    %c0_36 = arith.constant 0 : index
    %52 = vector.load %arg5[%c8, %c0_35, %c0_36] : memref<9x32x32xf32, #tpu.memory_space<vmem>>, vector<1x32x32xf32>
    %53 = vector.shape_cast %52 : vector<1x32x32xf32> to vector<32x32xf32>
    %cst_37 = arith.constant dense<0.000000e+00> : vector<32x32xf32>
    %54 = tpu.matmul %51, %53, %cst_37 {dimension_numbers = #tpu.dot_dimension_numbers<[1], [0], [0], [1], [0, 0, 1, 1], [], []>} : vector<32x32xf32>, vector<32x32xf32>, vector<32x32xf32> -> vector<32x32xf32>
    %55 = arith.addf %50, %54 : vector<32x32xf32>
    %c0_38 = arith.constant 0 : index
    %c0_39 = arith.constant 0 : index
    %56 = vector.load %arg6[%c0_38, %c0_39] : memref<1x32xf32, #tpu.memory_space<vmem>>, vector<1x32xf32>
    %57 = vector.broadcast %56 : vector<1x32xf32> to vector<32x32xf32>
    %58 = arith.addf %55, %57 : vector<32x32xf32>
    %cst_40 = arith.constant 0.000000e+00 : f32
    %59 = vector.broadcast %cst_40 : f32 to vector<32x32xf32>
    %60 = arith.maximumf %58, %59 : vector<32x32xf32>
    %c0_41 = arith.constant 0 : index
    %c0_42 = arith.constant 0 : index
    %61 = vector.load %arg7[%c0_41, %c0_42] : memref<144x32xf32, #tpu.memory_space<vmem>>, vector<144x32xf32>
    %cst_43 = arith.constant dense<0.000000e+00> : vector<144x32xf32>
    %62 = tpu.matmul %61, %60, %cst_43 {dimension_numbers = #tpu.dot_dimension_numbers<[1], [0], [0], [1], [0, 0, 1, 1], [], []>} : vector<144x32xf32>, vector<32x32xf32>, vector<144x32xf32> -> vector<144x32xf32>
    %cst_44 = arith.constant 0.000000e+00 : f32
    %63 = vector.broadcast %cst_44 : f32 to vector<16x32xf32>
    %64 = vector.extract_strided_slice %62 {offsets = [0, 0], sizes = [16, 32], strides = [1, 1]} : vector<144x32xf32> to vector<16x32xf32>
    %c0_45 = arith.constant 0 : index
    %c0_46 = arith.constant 0 : index
    %c0_47 = arith.constant 0 : index
    %65 = vector.load %arg8[%c0_45, %c0_46, %c0_47] : memref<9x32x32xf32, #tpu.memory_space<vmem>>, vector<1x32x32xf32>
    %66 = vector.shape_cast %65 : vector<1x32x32xf32> to vector<32x32xf32>
    %cst_48 = arith.constant dense<0.000000e+00> : vector<16x32xf32>
    %67 = tpu.matmul %64, %66, %cst_48 {dimension_numbers = #tpu.dot_dimension_numbers<[1], [0], [0], [1], [0, 0, 1, 1], [], []>} : vector<16x32xf32>, vector<32x32xf32>, vector<16x32xf32> -> vector<16x32xf32>
    %68 = arith.addf %63, %67 : vector<16x32xf32>
    %69 = vector.extract_strided_slice %62 {offsets = [16, 0], sizes = [16, 32], strides = [1, 1]} : vector<144x32xf32> to vector<16x32xf32>
    %c1_49 = arith.constant 1 : index
    %c0_50 = arith.constant 0 : index
    %c0_51 = arith.constant 0 : index
    %70 = vector.load %arg8[%c1_49, %c0_50, %c0_51] : memref<9x32x32xf32, #tpu.memory_space<vmem>>, vector<1x32x32xf32>
    %71 = vector.shape_cast %70 : vector<1x32x32xf32> to vector<32x32xf32>
    %cst_52 = arith.constant dense<0.000000e+00> : vector<16x32xf32>
    %72 = tpu.matmul %69, %71, %cst_52 {dimension_numbers = #tpu.dot_dimension_numbers<[1], [0], [0], [1], [0, 0, 1, 1], [], []>} : vector<16x32xf32>, vector<32x32xf32>, vector<16x32xf32> -> vector<16x32xf32>
    %73 = arith.addf %68, %72 : vector<16x32xf32>
    %74 = vector.extract_strided_slice %62 {offsets = [32, 0], sizes = [16, 32], strides = [1, 1]} : vector<144x32xf32> to vector<16x32xf32>
    %c2_53 = arith.constant 2 : index
    %c0_54 = arith.constant 0 : index
    %c0_55 = arith.constant 0 : index
    %75 = vector.load %arg8[%c2_53, %c0_54, %c0_55] : memref<9x32x32xf32, #tpu.memory_space<vmem>>, vector<1x32x32xf32>
    %76 = vector.shape_cast %75 : vector<1x32x32xf32> to vector<32x32xf32>
    %cst_56 = arith.constant dense<0.000000e+00> : vector<16x32xf32>
    %77 = tpu.matmul %74, %76, %cst_56 {dimension_numbers = #tpu.dot_dimension_numbers<[1], [0], [0], [1], [0, 0, 1, 1], [], []>} : vector<16x32xf32>, vector<32x32xf32>, vector<16x32xf32> -> vector<16x32xf32>
    %78 = arith.addf %73, %77 : vector<16x32xf32>
    %79 = vector.extract_strided_slice %62 {offsets = [48, 0], sizes = [16, 32], strides = [1, 1]} : vector<144x32xf32> to vector<16x32xf32>
    %c3_57 = arith.constant 3 : index
    %c0_58 = arith.constant 0 : index
    %c0_59 = arith.constant 0 : index
    %80 = vector.load %arg8[%c3_57, %c0_58, %c0_59] : memref<9x32x32xf32, #tpu.memory_space<vmem>>, vector<1x32x32xf32>
    %81 = vector.shape_cast %80 : vector<1x32x32xf32> to vector<32x32xf32>
    %cst_60 = arith.constant dense<0.000000e+00> : vector<16x32xf32>
    %82 = tpu.matmul %79, %81, %cst_60 {dimension_numbers = #tpu.dot_dimension_numbers<[1], [0], [0], [1], [0, 0, 1, 1], [], []>} : vector<16x32xf32>, vector<32x32xf32>, vector<16x32xf32> -> vector<16x32xf32>
    %83 = arith.addf %78, %82 : vector<16x32xf32>
    %84 = vector.extract_strided_slice %62 {offsets = [64, 0], sizes = [16, 32], strides = [1, 1]} : vector<144x32xf32> to vector<16x32xf32>
    %c4_61 = arith.constant 4 : index
    %c0_62 = arith.constant 0 : index
    %c0_63 = arith.constant 0 : index
    %85 = vector.load %arg8[%c4_61, %c0_62, %c0_63] : memref<9x32x32xf32, #tpu.memory_space<vmem>>, vector<1x32x32xf32>
    %86 = vector.shape_cast %85 : vector<1x32x32xf32> to vector<32x32xf32>
    %cst_64 = arith.constant dense<0.000000e+00> : vector<16x32xf32>
    %87 = tpu.matmul %84, %86, %cst_64 {dimension_numbers = #tpu.dot_dimension_numbers<[1], [0], [0], [1], [0, 0, 1, 1], [], []>} : vector<16x32xf32>, vector<32x32xf32>, vector<16x32xf32> -> vector<16x32xf32>
    %88 = arith.addf %83, %87 : vector<16x32xf32>
    %89 = vector.extract_strided_slice %62 {offsets = [80, 0], sizes = [16, 32], strides = [1, 1]} : vector<144x32xf32> to vector<16x32xf32>
    %c5_65 = arith.constant 5 : index
    %c0_66 = arith.constant 0 : index
    %c0_67 = arith.constant 0 : index
    %90 = vector.load %arg8[%c5_65, %c0_66, %c0_67] : memref<9x32x32xf32, #tpu.memory_space<vmem>>, vector<1x32x32xf32>
    %91 = vector.shape_cast %90 : vector<1x32x32xf32> to vector<32x32xf32>
    %cst_68 = arith.constant dense<0.000000e+00> : vector<16x32xf32>
    %92 = tpu.matmul %89, %91, %cst_68 {dimension_numbers = #tpu.dot_dimension_numbers<[1], [0], [0], [1], [0, 0, 1, 1], [], []>} : vector<16x32xf32>, vector<32x32xf32>, vector<16x32xf32> -> vector<16x32xf32>
    %93 = arith.addf %88, %92 : vector<16x32xf32>
    %94 = vector.extract_strided_slice %62 {offsets = [96, 0], sizes = [16, 32], strides = [1, 1]} : vector<144x32xf32> to vector<16x32xf32>
    %c6_69 = arith.constant 6 : index
    %c0_70 = arith.constant 0 : index
    %c0_71 = arith.constant 0 : index
    %95 = vector.load %arg8[%c6_69, %c0_70, %c0_71] : memref<9x32x32xf32, #tpu.memory_space<vmem>>, vector<1x32x32xf32>
    %96 = vector.shape_cast %95 : vector<1x32x32xf32> to vector<32x32xf32>
    %cst_72 = arith.constant dense<0.000000e+00> : vector<16x32xf32>
    %97 = tpu.matmul %94, %96, %cst_72 {dimension_numbers = #tpu.dot_dimension_numbers<[1], [0], [0], [1], [0, 0, 1, 1], [], []>} : vector<16x32xf32>, vector<32x32xf32>, vector<16x32xf32> -> vector<16x32xf32>
    %98 = arith.addf %93, %97 : vector<16x32xf32>
    %99 = vector.extract_strided_slice %62 {offsets = [112, 0], sizes = [16, 32], strides = [1, 1]} : vector<144x32xf32> to vector<16x32xf32>
    %c7_73 = arith.constant 7 : index
    %c0_74 = arith.constant 0 : index
    %c0_75 = arith.constant 0 : index
    %100 = vector.load %arg8[%c7_73, %c0_74, %c0_75] : memref<9x32x32xf32, #tpu.memory_space<vmem>>, vector<1x32x32xf32>
    %101 = vector.shape_cast %100 : vector<1x32x32xf32> to vector<32x32xf32>
    %cst_76 = arith.constant dense<0.000000e+00> : vector<16x32xf32>
    %102 = tpu.matmul %99, %101, %cst_76 {dimension_numbers = #tpu.dot_dimension_numbers<[1], [0], [0], [1], [0, 0, 1, 1], [], []>} : vector<16x32xf32>, vector<32x32xf32>, vector<16x32xf32> -> vector<16x32xf32>
    %103 = arith.addf %98, %102 : vector<16x32xf32>
    %104 = vector.extract_strided_slice %62 {offsets = [128, 0], sizes = [16, 32], strides = [1, 1]} : vector<144x32xf32> to vector<16x32xf32>
    %c8_77 = arith.constant 8 : index
    %c0_78 = arith.constant 0 : index
    %c0_79 = arith.constant 0 : index
    %105 = vector.load %arg8[%c8_77, %c0_78, %c0_79] : memref<9x32x32xf32, #tpu.memory_space<vmem>>, vector<1x32x32xf32>
    %106 = vector.shape_cast %105 : vector<1x32x32xf32> to vector<32x32xf32>
    %cst_80 = arith.constant dense<0.000000e+00> : vector<16x32xf32>
    %107 = tpu.matmul %104, %106, %cst_80 {dimension_numbers = #tpu.dot_dimension_numbers<[1], [0], [0], [1], [0, 0, 1, 1], [], []>} : vector<16x32xf32>, vector<32x32xf32>, vector<16x32xf32> -> vector<16x32xf32>
    %108 = arith.addf %103, %107 : vector<16x32xf32>
    %c0_81 = arith.constant 0 : index
    %c0_82 = arith.constant 0 : index
    %109 = vector.load %arg9[%c0_81, %c0_82] : memref<1x32xf32, #tpu.memory_space<vmem>>, vector<1x32xf32>
    %110 = vector.broadcast %109 : vector<1x32xf32> to vector<16x32xf32>
    %111 = arith.addf %108, %110 : vector<16x32xf32>
    %cst_83 = arith.constant 0.000000e+00 : f32
    %112 = vector.broadcast %cst_83 : f32 to vector<16x32xf32>
    %113 = arith.maximumf %111, %112 : vector<16x32xf32>
    %c0_84 = arith.constant 0 : index
    %c0_85 = arith.constant 0 : index
    %114 = vector.load %arg10[%c0_84, %c0_85] : memref<144x16xf32, #tpu.memory_space<vmem>>, vector<144x16xf32>
    %cst_86 = arith.constant dense<0.000000e+00> : vector<144x32xf32>
    %115 = tpu.matmul %114, %113, %cst_86 {dimension_numbers = #tpu.dot_dimension_numbers<[1], [0], [0], [1], [0, 0, 1, 1], [], []>} : vector<144x16xf32>, vector<16x32xf32>, vector<144x32xf32> -> vector<144x32xf32>
    %cst_87 = arith.constant 0.000000e+00 : f32
    %116 = vector.broadcast %cst_87 : f32 to vector<16x10xf32>
    %117 = vector.extract_strided_slice %115 {offsets = [0, 0], sizes = [16, 32], strides = [1, 1]} : vector<144x32xf32> to vector<16x32xf32>
    %c0_88 = arith.constant 0 : index
    %c0_89 = arith.constant 0 : index
    %c0_90 = arith.constant 0 : index
    %118 = vector.load %arg11[%c0_88, %c0_89, %c0_90] : memref<9x32x10xf32, #tpu.memory_space<vmem>>, vector<1x32x10xf32>
    %119 = vector.shape_cast %118 : vector<1x32x10xf32> to vector<32x10xf32>
    %cst_91 = arith.constant dense<0.000000e+00> : vector<16x10xf32>
    %120 = tpu.matmul %117, %119, %cst_91 {dimension_numbers = #tpu.dot_dimension_numbers<[1], [0], [0], [1], [0, 0, 1, 1], [], []>} : vector<16x32xf32>, vector<32x10xf32>, vector<16x10xf32> -> vector<16x10xf32>
    %121 = arith.addf %116, %120 : vector<16x10xf32>
    %122 = vector.extract_strided_slice %115 {offsets = [16, 0], sizes = [16, 32], strides = [1, 1]} : vector<144x32xf32> to vector<16x32xf32>
    %c1_92 = arith.constant 1 : index
    %c0_93 = arith.constant 0 : index
    %c0_94 = arith.constant 0 : index
    %123 = vector.load %arg11[%c1_92, %c0_93, %c0_94] : memref<9x32x10xf32, #tpu.memory_space<vmem>>, vector<1x32x10xf32>
    %124 = vector.shape_cast %123 : vector<1x32x10xf32> to vector<32x10xf32>
    %cst_95 = arith.constant dense<0.000000e+00> : vector<16x10xf32>
    %125 = tpu.matmul %122, %124, %cst_95 {dimension_numbers = #tpu.dot_dimension_numbers<[1], [0], [0], [1], [0, 0, 1, 1], [], []>} : vector<16x32xf32>, vector<32x10xf32>, vector<16x10xf32> -> vector<16x10xf32>
    %126 = arith.addf %121, %125 : vector<16x10xf32>
    %127 = vector.extract_strided_slice %115 {offsets = [32, 0], sizes = [16, 32], strides = [1, 1]} : vector<144x32xf32> to vector<16x32xf32>
    %c2_96 = arith.constant 2 : index
    %c0_97 = arith.constant 0 : index
    %c0_98 = arith.constant 0 : index
    %128 = vector.load %arg11[%c2_96, %c0_97, %c0_98] : memref<9x32x10xf32, #tpu.memory_space<vmem>>, vector<1x32x10xf32>
    %129 = vector.shape_cast %128 : vector<1x32x10xf32> to vector<32x10xf32>
    %cst_99 = arith.constant dense<0.000000e+00> : vector<16x10xf32>
    %130 = tpu.matmul %127, %129, %cst_99 {dimension_numbers = #tpu.dot_dimension_numbers<[1], [0], [0], [1], [0, 0, 1, 1], [], []>} : vector<16x32xf32>, vector<32x10xf32>, vector<16x10xf32> -> vector<16x10xf32>
    %131 = arith.addf %126, %130 : vector<16x10xf32>
    %132 = vector.extract_strided_slice %115 {offsets = [48, 0], sizes = [16, 32], strides = [1, 1]} : vector<144x32xf32> to vector<16x32xf32>
    %c3_100 = arith.constant 3 : index
    %c0_101 = arith.constant 0 : index
    %c0_102 = arith.constant 0 : index
    %133 = vector.load %arg11[%c3_100, %c0_101, %c0_102] : memref<9x32x10xf32, #tpu.memory_space<vmem>>, vector<1x32x10xf32>
    %134 = vector.shape_cast %133 : vector<1x32x10xf32> to vector<32x10xf32>
    %cst_103 = arith.constant dense<0.000000e+00> : vector<16x10xf32>
    %135 = tpu.matmul %132, %134, %cst_103 {dimension_numbers = #tpu.dot_dimension_numbers<[1], [0], [0], [1], [0, 0, 1, 1], [], []>} : vector<16x32xf32>, vector<32x10xf32>, vector<16x10xf32> -> vector<16x10xf32>
    %136 = arith.addf %131, %135 : vector<16x10xf32>
    %137 = vector.extract_strided_slice %115 {offsets = [64, 0], sizes = [16, 32], strides = [1, 1]} : vector<144x32xf32> to vector<16x32xf32>
    %c4_104 = arith.constant 4 : index
    %c0_105 = arith.constant 0 : index
    %c0_106 = arith.constant 0 : index
    %138 = vector.load %arg11[%c4_104, %c0_105, %c0_106] : memref<9x32x10xf32, #tpu.memory_space<vmem>>, vector<1x32x10xf32>
    %139 = vector.shape_cast %138 : vector<1x32x10xf32> to vector<32x10xf32>
    %cst_107 = arith.constant dense<0.000000e+00> : vector<16x10xf32>
    %140 = tpu.matmul %137, %139, %cst_107 {dimension_numbers = #tpu.dot_dimension_numbers<[1], [0], [0], [1], [0, 0, 1, 1], [], []>} : vector<16x32xf32>, vector<32x10xf32>, vector<16x10xf32> -> vector<16x10xf32>
    %141 = arith.addf %136, %140 : vector<16x10xf32>
    %142 = vector.extract_strided_slice %115 {offsets = [80, 0], sizes = [16, 32], strides = [1, 1]} : vector<144x32xf32> to vector<16x32xf32>
    %c5_108 = arith.constant 5 : index
    %c0_109 = arith.constant 0 : index
    %c0_110 = arith.constant 0 : index
    %143 = vector.load %arg11[%c5_108, %c0_109, %c0_110] : memref<9x32x10xf32, #tpu.memory_space<vmem>>, vector<1x32x10xf32>
    %144 = vector.shape_cast %143 : vector<1x32x10xf32> to vector<32x10xf32>
    %cst_111 = arith.constant dense<0.000000e+00> : vector<16x10xf32>
    %145 = tpu.matmul %142, %144, %cst_111 {dimension_numbers = #tpu.dot_dimension_numbers<[1], [0], [0], [1], [0, 0, 1, 1], [], []>} : vector<16x32xf32>, vector<32x10xf32>, vector<16x10xf32> -> vector<16x10xf32>
    %146 = arith.addf %141, %145 : vector<16x10xf32>
    %147 = vector.extract_strided_slice %115 {offsets = [96, 0], sizes = [16, 32], strides = [1, 1]} : vector<144x32xf32> to vector<16x32xf32>
    %c6_112 = arith.constant 6 : index
    %c0_113 = arith.constant 0 : index
    %c0_114 = arith.constant 0 : index
    %148 = vector.load %arg11[%c6_112, %c0_113, %c0_114] : memref<9x32x10xf32, #tpu.memory_space<vmem>>, vector<1x32x10xf32>
    %149 = vector.shape_cast %148 : vector<1x32x10xf32> to vector<32x10xf32>
    %cst_115 = arith.constant dense<0.000000e+00> : vector<16x10xf32>
    %150 = tpu.matmul %147, %149, %cst_115 {dimension_numbers = #tpu.dot_dimension_numbers<[1], [0], [0], [1], [0, 0, 1, 1], [], []>} : vector<16x32xf32>, vector<32x10xf32>, vector<16x10xf32> -> vector<16x10xf32>
    %151 = arith.addf %146, %150 : vector<16x10xf32>
    %152 = vector.extract_strided_slice %115 {offsets = [112, 0], sizes = [16, 32], strides = [1, 1]} : vector<144x32xf32> to vector<16x32xf32>
    %c7_116 = arith.constant 7 : index
    %c0_117 = arith.constant 0 : index
    %c0_118 = arith.constant 0 : index
    %153 = vector.load %arg11[%c7_116, %c0_117, %c0_118] : memref<9x32x10xf32, #tpu.memory_space<vmem>>, vector<1x32x10xf32>
    %154 = vector.shape_cast %153 : vector<1x32x10xf32> to vector<32x10xf32>
    %cst_119 = arith.constant dense<0.000000e+00> : vector<16x10xf32>
    %155 = tpu.matmul %152, %154, %cst_119 {dimension_numbers = #tpu.dot_dimension_numbers<[1], [0], [0], [1], [0, 0, 1, 1], [], []>} : vector<16x32xf32>, vector<32x10xf32>, vector<16x10xf32> -> vector<16x10xf32>
    %156 = arith.addf %151, %155 : vector<16x10xf32>
    %157 = vector.extract_strided_slice %115 {offsets = [128, 0], sizes = [16, 32], strides = [1, 1]} : vector<144x32xf32> to vector<16x32xf32>
    %c8_120 = arith.constant 8 : index
    %c0_121 = arith.constant 0 : index
    %c0_122 = arith.constant 0 : index
    %158 = vector.load %arg11[%c8_120, %c0_121, %c0_122] : memref<9x32x10xf32, #tpu.memory_space<vmem>>, vector<1x32x10xf32>
    %159 = vector.shape_cast %158 : vector<1x32x10xf32> to vector<32x10xf32>
    %cst_123 = arith.constant dense<0.000000e+00> : vector<16x10xf32>
    %160 = tpu.matmul %157, %159, %cst_123 {dimension_numbers = #tpu.dot_dimension_numbers<[1], [0], [0], [1], [0, 0, 1, 1], [], []>} : vector<16x32xf32>, vector<32x10xf32>, vector<16x10xf32> -> vector<16x10xf32>
    %161 = arith.addf %156, %160 : vector<16x10xf32>
    %c0_124 = arith.constant 0 : index
    %c0_125 = arith.constant 0 : index
    %162 = vector.load %arg12[%c0_124, %c0_125] : memref<1x10xf32, #tpu.memory_space<vmem>>, vector<1x10xf32>
    %163 = vector.broadcast %162 : vector<1x10xf32> to vector<16x10xf32>
    %164 = arith.addf %161, %163 : vector<16x10xf32>
    %cst_126 = arith.constant 0.000000e+00 : f32
    %165 = vector.broadcast %cst_126 : f32 to vector<16x10xf32>
    %166 = arith.maximumf %164, %165 : vector<16x10xf32>
    %c0_127 = arith.constant 0 : index
    %c0_128 = arith.constant 0 : index
    %167 = vector.load %arg13[%c0_127, %c0_128] : memref<16x10xf32, #tpu.memory_space<vmem>>, vector<16x10xf32>
    tpu.vector_store %arg13[%c0_127, %c0_128], %166 {strides = array<i32>} : memref<16x10xf32, #tpu.memory_space<vmem>>, vector<16x10xf32>,
    return
  }
  func.func @transform_0(%arg0: i32) -> (i32, i32) {
    %c0_i32 = arith.constant 0 : i32
    %c0_i32_0 = arith.constant 0 : i32
    %c0_i32_1 = arith.constant 0 : i32
    return %c0_i32, %c0_i32_0 : i32, i32
  }
  func.func @transform_1(%arg0: i32) -> (i32, i32) {
    %c0_i32 = arith.constant 0 : i32
    %c0_i32_0 = arith.constant 0 : i32
    %c0_i32_1 = arith.constant 0 : i32
    return %c0_i32, %c0_i32_0 : i32, i32
  }
  func.func @transform_2(%arg0: i32) -> (i32, i32) {
    %c0_i32 = arith.constant 0 : i32
    %c0_i32_0 = arith.constant 0 : i32
    %c0_i32_1 = arith.constant 0 : i32
    return %c0_i32, %c0_i32_0 : i32, i32
  }
  func.func @transform_3(%arg0: i32) -> (i32, i32) {
    %c0_i32 = arith.constant 0 : i32
    %c0_i32_0 = arith.constant 0 : i32
    %c0_i32_1 = arith.constant 0 : i32
    return %c0_i32, %c0_i32_0 : i32, i32
  }
  func.func @transform_4(%arg0: i32) -> (i32, i32, i32) {
    %c0_i32 = arith.constant 0 : i32
    %c0_i32_0 = arith.constant 0 : i32
    %c0_i32_1 = arith.constant 0 : i32
    %c0_i32_2 = arith.constant 0 : i32
    return %c0_i32, %c0_i32_0, %c0_i32_1 : i32, i32, i32
  }
  func.func @transform_5(%arg0: i32) -> (i32, i32) {
    %c0_i32 = arith.constant 0 : i32
    %c0_i32_0 = arith.constant 0 : i32
    %c0_i32_1 = arith.constant 0 : i32
    return %c0_i32, %c0_i32_0 : i32, i32
  }
  func.func @transform_6(%arg0: i32) -> (i32, i32) {
    %c0_i32 = arith.constant 0 : i32
    %c0_i32_0 = arith.constant 0 : i32
    %c0_i32_1 = arith.constant 0 : i32
    return %c0_i32, %c0_i32_0 : i32, i32
  }
  func.func @transform_7(%arg0: i32) -> (i32, i32, i32) {
    %c0_i32 = arith.constant 0 : i32
    %c0_i32_0 = arith.constant 0 : i32
    %c0_i32_1 = arith.constant 0 : i32
    %c0_i32_2 = arith.constant 0 : i32
    return %c0_i32, %c0_i32_0, %c0_i32_1 : i32, i32, i32
  }
  func.func @transform_8(%arg0: i32) -> (i32, i32) {
    %c0_i32 = arith.constant 0 : i32
    %c0_i32_0 = arith.constant 0 : i32
    %c0_i32_1 = arith.constant 0 : i32
    return %c0_i32, %c0_i32_0 : i32, i32
  }
  func.func @transform_9(%arg0: i32) -> (i32, i32) {
    %c0_i32 = arith.constant 0 : i32
    %c0_i32_0 = arith.constant 0 : i32
    %c0_i32_1 = arith.constant 0 : i32
    return %c0_i32, %c0_i32_0 : i32, i32
  }
  func.func @transform_10(%arg0: i32) -> (i32, i32, i32) {
    %c0_i32 = arith.constant 0 : i32
    %c0_i32_0 = arith.constant 0 : i32
    %c0_i32_1 = arith.constant 0 : i32
    %c0_i32_2 = arith.constant 0 : i32
    return %c0_i32, %c0_i32_0, %c0_i32_1 : i32, i32, i32
  }
  func.func @transform_11(%arg0: i32) -> (i32, i32) {
    %c0_i32 = arith.constant 0 : i32
    %c0_i32_0 = arith.constant 0 : i32
    %c0_i32_1 = arith.constant 0 : i32
    return %c0_i32, %c0_i32_0 : i32, i32
  }
  func.func @transform_12(%arg0: i32) -> (i32, i32) {
    %c0_i32 = arith.constant 0 : i32
    %c0_i32_0 = arith.constant 0 : i32
    %c0_i32_1 = arith.constant 0 : i32
    return %c0_i32, %c0_i32_0 : i32, i32
  }
}

</mosaic_0001>

<llo_original>
// kernel: encoder_forward.1
$region0: #{encoder_forward.1}
  #allocation0 [shape = 'u32[]', space=smem, size = 0x4, offset = 0x4, fixed_abs, tag = 'smem constant byte address 0x4 - core index']
  #allocation1 [shape = 'u32[144,128]{1,0:T(1,128)}', space=vmem, size = 0x12000, scoped, tag = 'internal scratch']
  %s0 = inlined_call_operand.vmem [shape: f32[128,9], index: 0, kind: input, shape index: {}]
  %s1 = inlined_call_operand.vmem [shape: f32[9,32], index: 1, kind: input, shape index: {}]
  %s2 = inlined_call_operand.vmem [shape: f32[1,32], index: 2, kind: input, shape index: {}]
  %s3 = inlined_call_operand.vmem [shape: f32[288,128], index: 3, kind: input, shape index: {}]
  %s4 = inlined_call_operand.vmem [shape: f32[9,32,32], index: 4, kind: input, shape index: {}]
  %s5 = inlined_call_operand.vmem [shape: f32[1,32], index: 5, kind: input, shape index: {}]
  %s6 = inlined_call_operand.vmem [shape: f32[144,32], index: 6, kind: input, shape index: {}]
  %s7 = inlined_call_operand.vmem [shape: f32[9,32,32], index: 7, kind: input, shape index: {}]
  %s8 = inlined_call_operand.vmem [shape: f32[1,32], index: 8, kind: input, shape index: {}]
  %s9 = inlined_call_operand.vmem [shape: f32[144,16], index: 9, kind: input, shape index: {}]
  %s10 = inlined_call_operand.vmem [shape: f32[9,32,10], index: 10, kind: input, shape index: {}]
  %s11 = inlined_call_operand.vmem [shape: f32[1,10], index: 11, kind: input, shape index: {}]
  %s12 = inlined_call_operand.vmem [shape: f32[16,10], index: 12, kind: output, shape index: {}]
  %s13 = sld [smem:[#allocation0]]
  $region58: #{encoder_forward.1} parent=0
    _
  %s15 = ssub.s32 1, %s13
  %s16 = scalar_select 0, %s15, %s13
  // Predicated region
  $region2: #{encoder_forward.1} parent=0 // pred_check
    _
  $region3: #{encoder_forward.1} parent=0 // pred_check_branch
    %18 = sbr.rel (0) target = $region5
  $region4: #{encoder_forward.1} parent=0 // pred_region
    _
  $region5: #{encoder_forward.1} parent=0 // pred_fallthru
    _
  // Predicated region
  $region6: #{encoder_forward.1} parent=0 // pred_check
    _
  $region7: #{encoder_forward.1} parent=0 // pred_check_branch
    %20 = sbr.rel (0) target = $region9
  $region8: #{encoder_forward.1} parent=0 // pred_region
    _
  $region9: #{encoder_forward.1} parent=0 // pred_fallthru
    _
  // Predicated region
  $region10: #{encoder_forward.1} parent=0 // pred_check
    _
  $region11: #{encoder_forward.1} parent=0 // pred_check_branch
    %22 = sbr.rel (0) target = $region13
  $region12: #{encoder_forward.1} parent=0 // pred_region
    _
  $region13: #{encoder_forward.1} parent=0 // pred_fallthru
    _
  // Predicated region
  $region14: #{encoder_forward.1} parent=0 // pred_check
    _
  $region15: #{encoder_forward.1} parent=0 // pred_check_branch
    %24 = sbr.rel (0) target = $region17
  $region16: #{encoder_forward.1} parent=0 // pred_region
    _
  $region17: #{encoder_forward.1} parent=0 // pred_fallthru
    _
  // Predicated region
  $region18: #{encoder_forward.1} parent=0 // pred_check
    _
  $region19: #{encoder_forward.1} parent=0 // pred_check_branch
    %26 = sbr.rel (0) target = $region21
  $region20: #{encoder_forward.1} parent=0 // pred_region
    _
  $region21: #{encoder_forward.1} parent=0 // pred_fallthru
    _
  // Predicated region
  $region22: #{encoder_forward.1} parent=0 // pred_check
    _
  $region23: #{encoder_forward.1} parent=0 // pred_check_branch
    %28 = sbr.rel (0) target = $region25
  $region24: #{encoder_forward.1} parent=0 // pred_region
    _
  $region25: #{encoder_forward.1} parent=0 // pred_fallthru
    _
  // Predicated region
  $region26: #{encoder_forward.1} parent=0 // pred_check
    _
  $region27: #{encoder_forward.1} parent=0 // pred_check_branch
    %30 = sbr.rel (0) target = $region29
  $region28: #{encoder_forward.1} parent=0 // pred_region
    _
  $region29: #{encoder_forward.1} parent=0 // pred_fallthru
    _
  // Predicated region
  $region30: #{encoder_forward.1} parent=0 // pred_check
    _
  $region31: #{encoder_forward.1} parent=0 // pred_check_branch
    %32 = sbr.rel (0) target = $region33
  $region32: #{encoder_forward.1} parent=0 // pred_region
    _
  $region33: #{encoder_forward.1} parent=0 // pred_fallthru
    _
  // Predicated region
  $region34: #{encoder_forward.1} parent=0 // pred_check
    _
  $region35: #{encoder_forward.1} parent=0 // pred_check_branch
    %34 = sbr.rel (0) target = $region37
  $region36: #{encoder_forward.1} parent=0 // pred_region
    _
  $region37: #{encoder_forward.1} parent=0 // pred_fallthru
    _
  // Predicated region
  $region38: #{encoder_forward.1} parent=0 // pred_check
    _
  $region39: #{encoder_forward.1} parent=0 // pred_check_branch
    %36 = sbr.rel (0) target = $region41
  $region40: #{encoder_forward.1} parent=0 // pred_region
    _
  $region41: #{encoder_forward.1} parent=0 // pred_fallthru
    _
  // Predicated region
  $region42: #{encoder_forward.1} parent=0 // pred_check
    _
  $region43: #{encoder_forward.1} parent=0 // pred_check_branch
    %38 = sbr.rel (0) target = $region45
  $region44: #{encoder_forward.1} parent=0 // pred_region
    _
  $region45: #{encoder_forward.1} parent=0 // pred_fallthru
    _
  // Predicated region
  $region46: #{encoder_forward.1} parent=0 // pred_check
    _
  $region47: #{encoder_forward.1} parent=0 // pred_check_branch
    %40 = sbr.rel (0) target = $region49
  $region48: #{encoder_forward.1} parent=0 // pred_region
    _
  $region49: #{encoder_forward.1} parent=0 // pred_fallthru
    _
  %v41 = vld [vmem:[%s0] sm:$0xff]
  %v42 = vld [vmem:[%s0 + $0x8] sm:$0xff]
  %v43 = vld [vmem:[%s0 + $0x10] sm:$0xff]
  %v44 = vld [vmem:[%s0 + $0x18] sm:$0xff]
  %v45 = vld [vmem:[%s0 + $0x20] sm:$0xff]
  %v46 = vld [vmem:[%s0 + $0x28] sm:$0xff]
  %v47 = vld [vmem:[%s0 + $0x30] sm:$0xff]
  %v48 = vld [vmem:[%s0 + $0x38] sm:$0xff]
  %v49 = vld [vmem:[%s0 + $0x40] sm:$0xff]
  %v50 = vld [vmem:[%s0 + $0x48] sm:$0xff]
  %v51 = vld [vmem:[%s0 + $0x50] sm:$0xff]
  %v52 = vld [vmem:[%s0 + $0x58] sm:$0xff]
  %v53 = vld [vmem:[%s0 + $0x60] sm:$0xff]
  %v54 = vld [vmem:[%s0 + $0x68] sm:$0xff]
  %v55 = vld [vmem:[%s0 + $0x70] sm:$0xff]
  %v56 = vld [vmem:[%s0 + $0x78] sm:$0xff]
  %v57 = vld [vmem:[%s1] sm:$0xff]
  %v58 = vld [vmem:[%s1 + $0x8] sm:$0x1]
  %v59 = vld [vmem:[%s2] sm:$0x1]
  %v61 = vlaneseq
  %v62 = vshrl.u32 %v61, 7
  %v63 = vsub.s32 0, %v62
  %v64 = vrot.slane %v59, %v63
  %vm66 = vcmask 72704
  %v68 = vsel %vm66, %v41, 0
  %v71 = vsel %vm66, %v42, 0
  %v74 = vsel %vm66, %v43, 0
  %v77 = vsel %vm66, %v44, 0
  %v80 = vsel %vm66, %v45, 0
  %v83 = vsel %vm66, %v46, 0
  %v86 = vsel %vm66, %v47, 0
  %v89 = vsel %vm66, %v48, 0
  %v92 = vsel %vm66, %v49, 0
  %v95 = vsel %vm66, %v50, 0
  %v98 = vsel %vm66, %v51, 0
  %v101 = vsel %vm66, %v52, 0
  %v104 = vsel %vm66, %v53, 0
  %v107 = vsel %vm66, %v54, 0
  %v110 = vsel %vm66, %v55, 0
  %v113 = vsel %vm66, %v56, 0
  %vm115 = vcmask 1040384
  %v117 = vsel %vm115, %v58, 0
  %119 = vmatprep.subr.mxu0 0.0
  %120 = vmatpush1.msra.mxu0 %v57
  %121 = vmatprep.subr.mxu0 0.0
  %122 = vmatpush1.msra.mxu0 %v117
  %123 = vmatprep.subr.mxu0 0.0
  %124 = vmatpush1.msra.mxu0 0.0
  %125 = vmatprep.subr.mxu0 0.0
  %126 = vmatpush1.msra.mxu0 0.0
  %127 = vmatprep.subr.mxu0 0.0
  %128 = vmatpush1.msra.mxu0 0.0
  %129 = vmatprep.subr.mxu0 0.0
  %130 = vmatpush1.msra.mxu0 0.0
  %131 = vmatprep.subr.mxu0 0.0
  %132 = vmatpush1.msra.mxu0 0.0
  %133 = vmatprep.subr.mxu0 0.0
  %134 = vmatpush1.msra.mxu0 0.0
  %135 = vmatprep.subr.mxu0 0.0
  %136 = vmatpush1.msra.mxu0 0.0
  %137 = vmatprep.subr.mxu0 0.0
  %138 = vmatpush1.msra.mxu0 0.0
  %139 = vmatprep.subr.mxu0 0.0
  %140 = vmatpush1.msra.mxu0 0.0
  %141 = vmatprep.subr.mxu0 0.0
  %142 = vmatpush1.msra.mxu0 0.0
  %143 = vmatprep.subr.mxu0 0.0
  %144 = vmatpush1.msra.mxu0 0.0
  %145 = vmatprep.subr.mxu0 0.0
  %146 = vmatpush1.msra.mxu0 0.0
  %147 = vmatprep.subr.mxu0 0.0
  %148 = vmatpush1.msra.mxu0 0.0
  %149 = vmatprep.subr.mxu0 0.0
  %150 = vmatpush1.msra.mxu0 0.0
  %151 = vmatprep.subr.mxu0 0.0
  %152 = vmatpush1.msra.mxu0 0.0
  %153 = vmatprep.subr.mxu0 0.0
  %154 = vmatpush1.msra.mxu0 0.0
  %155 = vmatprep.subr.mxu0 0.0
  %156 = vmatpush1.msra.mxu0 0.0
  %157 = vmatprep.subr.mxu0 0.0
  %158 = vmatpush1.msra.mxu0 0.0
  %159 = vmatprep.subr.mxu0 0.0
  %160 = vmatpush1.msra.mxu0 0.0
  %161 = vmatprep.subr.mxu0 0.0
  %162 = vmatpush1.msra.mxu0 0.0
  %163 = vmatprep.subr.mxu0 0.0
  %164 = vmatpush1.msra.mxu0 0.0
  %165 = vmatprep.subr.mxu0 0.0
  %166 = vmatpush1.msra.mxu0 0.0
  %167 = vmatprep.subr.mxu0 0.0
  %168 = vmatpush1.msra.mxu0 0.0
  %169 = vmatprep.subr.mxu0 0.0
  %170 = vmatpush1.msra.mxu0 0.0
  %171 = vmatprep.subr.mxu0 0.0
  %172 = vmatpush1.msra.mxu0 0.0
  %173 = vmatprep.subr.mxu0 0.0
  %174 = vmatpush1.msra.mxu0 0.0
  %175 = vmatprep.subr.mxu0 0.0
  %176 = vmatpush1.msra.mxu0 0.0
  %177 = vmatprep.subr.mxu0 0.0
  %178 = vmatpush1.msra.mxu0 0.0
  %179 = vmatprep.subr.mxu0 0.0
  %180 = vmatpush1.msra.mxu0 0.0
  %181 = vmatprep.subr.mxu0 0.0
  %182 = vmatpush1.msra.mxu0 0.0
  %183 = vmatprep.mubr.f32.mxu0 0.0
  %184 = vmatmul.mubr.f32.gmra.mrb[0].mxu0 %v68
  %v185 = vpop.f32.mrb[0].mxu0
  %v186 = vadd.f32 %v64, %v185
  %v187 = vpop.f32.mrb[0].mxu0
  %188 = vmatprep.mubr.f32.mxu0 0.0
  %189 = vmatmul.mubr.f32.gmra.mrb[0].mxu0 %v71
  %v190 = vpop.f32.mrb[0].mxu0
  %v191 = vadd.f32 %v64, %v190
  %v192 = vpop.f32.mrb[0].mxu0
  %193 = vmatprep.mubr.f32.mxu0 0.0
  %194 = vmatmul.mubr.f32.gmra.mrb[0].mxu0 %v74
  %v195 = vpop.f32.mrb[0].mxu0
  %v196 = vadd.f32 %v64, %v195
  %v197 = vpop.f32.mrb[0].mxu0
  %198 = vmatprep.mubr.f32.mxu0 0.0
  %199 = vmatmul.mubr.f32.gmra.mrb[0].mxu0 %v77
  %v200 = vpop.f32.mrb[0].mxu0
  %v201 = vadd.f32 %v64, %v200
  %v202 = vpop.f32.mrb[0].mxu0
  %203 = vmatprep.mubr.f32.mxu0 0.0
  %204 = vmatmul.mubr.f32.gmra.mrb[0].mxu0 %v80
  %v205 = vpop.f32.mrb[0].mxu0
  %v206 = vadd.f32 %v64, %v205
  %v207 = vpop.f32.mrb[0].mxu0
  %208 = vmatprep.mubr.f32.mxu0 0.0
  %209 = vmatmul.mubr.f32.gmra.mrb[0].mxu0 %v83
  %v210 = vpop.f32.mrb[0].mxu0
  %v211 = vadd.f32 %v64, %v210
  %v212 = vpop.f32.mrb[0].mxu0
  %213 = vmatprep.mubr.f32.mxu0 0.0
  %214 = vmatmul.mubr.f32.gmra.mrb[0].mxu0 %v86
  %v215 = vpop.f32.mrb[0].mxu0
  %v216 = vadd.f32 %v64, %v215
  %v217 = vpop.f32.mrb[0].mxu0
  %218 = vmatprep.mubr.f32.mxu0 0.0
  %219 = vmatmul.mubr.f32.gmra.mrb[0].mxu0 %v89
  %v220 = vpop.f32.mrb[0].mxu0
  %v221 = vadd.f32 %v64, %v220
  %v222 = vpop.f32.mrb[0].mxu0
  %223 = vmatprep.mubr.f32.mxu0 0.0
  %224 = vmatmul.mubr.f32.gmra.mrb[0].mxu0 %v92
  %v225 = vpop.f32.mrb[0].mxu0
  %v226 = vadd.f32 %v64, %v225
  %v227 = vpop.f32.mrb[0].mxu0
  %228 = vmatprep.mubr.f32.mxu0 0.0
  %229 = vmatmul.mubr.f32.gmra.mrb[0].mxu0 %v95
  %v230 = vpop.f32.mrb[0].mxu0
  %v231 = vadd.f32 %v64, %v230
  %v232 = vpop.f32.mrb[0].mxu0
  %233 = vmatprep.mubr.f32.mxu0 0.0
  %234 = vmatmul.mubr.f32.gmra.mrb[0].mxu0 %v98
  %v235 = vpop.f32.mrb[0].mxu0
  %v236 = vadd.f32 %v64, %v235
  %v237 = vpop.f32.mrb[0].mxu0
  %238 = vmatprep.mubr.f32.mxu0 0.0
  %239 = vmatmul.mubr.f32.gmra.mrb[0].mxu0 %v101
  %v240 = vpop.f32.mrb[0].mxu0
  %v241 = vadd.f32 %v64, %v240
  %v242 = vpop.f32.mrb[0].mxu0
  %243 = vmatprep.mubr.f32.mxu0 0.0
  %244 = vmatmul.mubr.f32.gmra.mrb[0].mxu0 %v104
  %v245 = vpop.f32.mrb[0].mxu0
  %v246 = vadd.f32 %v64, %v245
  %v247 = vpop.f32.mrb[0].mxu0
  %248 = vmatprep.mubr.f32.mxu0 0.0
  %249 = vmatmul.mubr.f32.gmra.mrb[0].mxu0 %v107
  %v250 = vpop.f32.mrb[0].mxu0
  %v251 = vadd.f32 %v64, %v250
  %v252 = vpop.f32.mrb[0].mxu0
  %253 = vmatprep.mubr.f32.mxu0 0.0
  %254 = vmatmul.mubr.f32.gmra.mrb[0].mxu0 %v110
  %v255 = vpop.f32.mrb[0].mxu0
  %v256 = vadd.f32 %v64, %v255
  %v257 = vpop.f32.mrb[0].mxu0
  %258 = vmatprep.mubr.f32.mxu0 0.0
  %259 = vmatmul.mubr.f32.gmra.mrb[0].mxu0 %v113
  %v260 = vpop.f32.mrb[0].mxu0
  %v261 = vadd.f32 %v64, %v260
  %v262 = vpop.f32.mrb[0].mxu0
  %263 = vdwg.mxu0
  %v264 = vmax.f32 %v186, 0.0
  %v265 = vmax.f32 %v191, 0.0
  %v266 = vmax.f32 %v196, 0.0
  %v267 = vmax.f32 %v201, 0.0
  %v268 = vmax.f32 %v206, 0.0
  %v269 = vmax.f32 %v211, 0.0
  %v270 = vmax.f32 %v216, 0.0
  %v271 = vmax.f32 %v221, 0.0
  %v272 = vmax.f32 %v226, 0.0
  %v273 = vmax.f32 %v231, 0.0
  %v274 = vmax.f32 %v236, 0.0
  %v275 = vmax.f32 %v241, 0.0
  %v276 = vmax.f32 %v246, 0.0
  %v277 = vmax.f32 %v251, 0.0
  %v278 = vmax.f32 %v256, 0.0
  %v279 = vmax.f32 %v261, 0.0
  %v280 = vld [vmem:[%s3] sm:$0xff]
  %v281 = vld [vmem:[%s3 + $0x8] sm:$0xff]
  %v282 = vld [vmem:[%s3 + $0x10] sm:$0xff]
  %v283 = vld [vmem:[%s3 + $0x18] sm:$0xff]
  %v284 = vld [vmem:[%s3 + $0x20] sm:$0xff]
  %v285 = vld [vmem:[%s3 + $0x28] sm:$0xff]
  %v286 = vld [vmem:[%s3 + $0x30] sm:$0xff]
  %v287 = vld [vmem:[%s3 + $0x38] sm:$0xff]
  %v288 = vld [vmem:[%s3 + $0x40] sm:$0xff]
  %v289 = vld [vmem:[%s3 + $0x48] sm:$0xff]
  %v290 = vld [vmem:[%s3 + $0x50] sm:$0xff]
  %v291 = vld [vmem:[%s3 + $0x58] sm:$0xff]
  %v292 = vld [vmem:[%s3 + $0x60] sm:$0xff]
  %v293 = vld [vmem:[%s3 + $0x68] sm:$0xff]
  %v294 = vld [vmem:[%s3 + $0x70] sm:$0xff]
  %v295 = vld [vmem:[%s3 + $0x78] sm:$0xff]
  %v296 = vld [vmem:[%s3 + $0x80] sm:$0xff]
  %v297 = vld [vmem:[%s3 + $0x88] sm:$0xff]
  %v298 = vld [vmem:[%s3 + $0x90] sm:$0xff]
  %v299 = vld [vmem:[%s3 + $0x98] sm:$0xff]
  %v300 = vld [vmem:[%s3 + $0xa0] sm:$0xff]
  %v301 = vld [vmem:[%s3 + $0xa8] sm:$0xff]
  %v302 = vld [vmem:[%s3 + $0xb0] sm:$0xff]
  %v303 = vld [vmem:[%s3 + $0xb8] sm:$0xff]
  %v304 = vld [vmem:[%s3 + $0xc0] sm:$0xff]
  %v305 = vld [vmem:[%s3 + $0xc8] sm:$0xff]
  %v306 = vld [vmem:[%s3 + $0xd0] sm:$0xff]
  %v307 = vld [vmem:[%s3 + $0xd8] sm:$0xff]
  %v308 = vld [vmem:[%s3 + $0xe0] sm:$0xff]
  %v309 = vld [vmem:[%s3 + $0xe8] sm:$0xff]
  %v310 = vld [vmem:[%s3 + $0xf0] sm:$0xff]
  %v311 = vld [vmem:[%s3 + $0xf8] sm:$0xff]
  %v312 = vld [vmem:[%s3 + $0x100] sm:$0xff]
  %v313 = vld [vmem:[%s3 + $0x108] sm:$0xff]
  %v314 = vld [vmem:[%s3 + $0x110] sm:$0xff]
  %v315 = vld [vmem:[%s3 + $0x118] sm:$0xff]
  %316 = vmatprep.subr.mxu0 0.0
  %317 = vmatpush1.msra.mxu0 %v264
  %318 = vmatprep.subr.mxu0 0.0
  %319 = vmatpush1.msra.mxu0 %v265
  %320 = vmatprep.subr.mxu0 0.0
  %321 = vmatpush1.msra.mxu0 %v266
  %322 = vmatprep.subr.mxu0 0.0
  %323 = vmatpush1.msra.mxu0 %v267
  %324 = vmatprep.subr.mxu0 0.0
  %325 = vmatpush1.msra.mxu0 %v268
  %326 = vmatprep.subr.mxu0 0.0
  %327 = vmatpush1.msra.mxu0 %v269
  %328 = vmatprep.subr.mxu0 0.0
  %329 = vmatpush1.msra.mxu0 %v270
  %330 = vmatprep.subr.mxu0 0.0
  %331 = vmatpush1.msra.mxu0 %v271
  %332 = vmatprep.subr.mxu0 0.0
  %333 = vmatpush1.msra.mxu0 %v272
  %334 = vmatprep.subr.mxu0 0.0
  %335 = vmatpush1.msra.mxu0 %v273
  %336 = vmatprep.subr.mxu0 0.0
  %337 = vmatpush1.msra.mxu0 %v274
  %338 = vmatprep.subr.mxu0 0.0
  %339 = vmatpush1.msra.mxu0 %v275
  %340 = vmatprep.subr.mxu0 0.0
  %341 = vmatpush1.msra.mxu0 %v276
  %342 = vmatprep.subr.mxu0 0.0
  %343 = vmatpush1.msra.mxu0 %v277
  %344 = vmatprep.subr.mxu0 0.0
  %345 = vmatpush1.msra.mxu0 %v278
  %346 = vmatprep.subr.mxu0 0.0
  %347 = vmatpush1.msra.mxu0 %v279
  %348 = vmatprep.subr.mxu0 0.0
  %349 = vmatpush1.msra.mxu0 0.0
  %350 = vmatprep.subr.mxu0 0.0
  %351 = vmatpush1.msra.mxu0 0.0
  %352 = vmatprep.subr.mxu0 0.0
  %353 = vmatpush1.msra.mxu0 0.0
  %354 = vmatprep.subr.mxu0 0.0
  %355 = vmatpush1.msra.mxu0 0.0
  %356 = vmatprep.subr.mxu0 0.0
  %357 = vmatpush1.msra.mxu0 0.0
  %358 = vmatprep.subr.mxu0 0.0
  %359 = vmatpush1.msra.mxu0 0.0
  %360 = vmatprep.subr.mxu0 0.0
  %361 = vmatpush1.msra.mxu0 0.0
  %362 = vmatprep.subr.mxu0 0.0
  %363 = vmatpush1.msra.mxu0 0.0
  %364 = vmatprep.subr.mxu0 0.0
  %365 = vmatpush1.msra.mxu0 0.0
  %366 = vmatprep.subr.mxu0 0.0
  %367 = vmatpush1.msra.mxu0 0.0
  %368 = vmatprep.subr.mxu0 0.0
  %369 = vmatpush1.msra.mxu0 0.0
  %370 = vmatprep.subr.mxu0 0.0
  %371 = vmatpush1.msra.mxu0 0.0
  %372 = vmatprep.subr.mxu0 0.0
  %373 = vmatpush1.msra.mxu0 0.0
  %374 = vmatprep.subr.mxu0 0.0
  %375 = vmatpush1.msra.mxu0 0.0
  %376 = vmatprep.subr.mxu0 0.0
  %377 = vmatpush1.msra.mxu0 0.0
  %378 = vmatprep.subr.mxu0 0.0
  %379 = vmatpush1.msra.mxu0 0.0
  %380 = vmatprep.mubr.f32.mxu0 0.0
  %381 = vmatmul.mubr.f32.gmra.mrb[0].mxu0 %v280
  %v382 = vpop.f32.mrb[0].mxu0
  %v383 = vadd.f32 0.0, %v382
  %v384 = vpop.f32.mrb[0].mxu0
  %385 = vmatprep.mubr.f32.mxu0 0.0
  %386 = vmatmul.mubr.f32.gmra.mrb[0].mxu0 %v281
  %v387 = vpop.f32.mrb[0].mxu0
  %v388 = vadd.f32 0.0, %v387
  %v389 = vpop.f32.mrb[0].mxu0
  %390 = vmatprep.mubr.f32.mxu0 0.0
  %391 = vmatmul.mubr.f32.gmra.mrb[0].mxu0 %v282
  %v392 = vpop.f32.mrb[0].mxu0
  %v393 = vadd.f32 0.0, %v392
  %v394 = vpop.f32.mrb[0].mxu0
  %395 = vmatprep.mubr.f32.mxu0 0.0
  %396 = vmatmul.mubr.f32.gmra.mrb[0].mxu0 %v283
  %v397 = vpop.f32.mrb[0].mxu0
  %v398 = vadd.f32 0.0, %v397
  %v399 = vpop.f32.mrb[0].mxu0
  %400 = vmatprep.mubr.f32.mxu0 0.0
  %401 = vmatmul.mubr.f32.gmra.mrb[0].mxu0 %v284
  %v402 = vpop.f32.mrb[0].mxu0
  %v403 = vadd.f32 0.0, %v402
  %v404 = vpop.f32.mrb[0].mxu0
  %405 = vmatprep.mubr.f32.mxu0 0.0
  %406 = vmatmul.mubr.f32.gmra.mrb[0].mxu0 %v285
  %v407 = vpop.f32.mrb[0].mxu0
  %v408 = vadd.f32 0.0, %v407
  %v409 = vpop.f32.mrb[0].mxu0
  %410 = vmatprep.mubr.f32.mxu0 0.0
  %411 = vmatmul.mubr.f32.gmra.mrb[0].mxu0 %v286
  %v412 = vpop.f32.mrb[0].mxu0
  %v413 = vadd.f32 0.0, %v412
  %v414 = vpop.f32.mrb[0].mxu0
  %415 = vmatprep.mubr.f32.mxu0 0.0
  %416 = vmatmul.mubr.f32.gmra.mrb[0].mxu0 %v287
  %v417 = vpop.f32.mrb[0].mxu0
  %v418 = vadd.f32 0.0, %v417
  %v419 = vpop.f32.mrb[0].mxu0
  %420 = vmatprep.mubr.f32.mxu0 0.0
  %421 = vmatmul.mubr.f32.gmra.mrb[0].mxu0 %v288
  %v422 = vpop.f32.mrb[0].mxu0
  %v423 = vadd.f32 0.0, %v422
  %v424 = vpop.f32.mrb[0].mxu0
  %425 = vmatprep.mubr.f32.mxu0 0.0
  %426 = vmatmul.mubr.f32.gmra.mrb[0].mxu0 %v289
  %v427 = vpop.f32.mrb[0].mxu0
  %v428 = vadd.f32 0.0, %v427
  %v429 = vpop.f32.mrb[0].mxu0
  %430 = vmatprep.mubr.f32.mxu0 0.0
  %431 = vmatmul.mubr.f32.gmra.mrb[0].mxu0 %v290
  %v432 = vpop.f32.mrb[0].mxu0
  %v433 = vadd.f32 0.0, %v432
  %v434 = vpop.f32.mrb[0].mxu0
  %435 = vmatprep.mubr.f32.mxu0 0.0
  %436 = vmatmul.mubr.f32.gmra.mrb[0].mxu0 %v291
  %v437 = vpop.f32.mrb[0].mxu0
  %v438 = vadd.f32 0.0, %v437
  %v439 = vpop.f32.mrb[0].mxu0
  %440 = vmatprep.mubr.f32.mxu0 0.0
  %441 = vmatmul.mubr.f32.gmra.mrb[0].mxu0 %v292
  %v442 = vpop.f32.mrb[0].mxu0
  %v443 = vadd.f32 0.0, %v442
  %v444 = vpop.f32.mrb[0].mxu0
  %445 = vmatprep.mubr.f32.mxu0 0.0
  %446 = vmatmul.mubr.f32.gmra.mrb[0].mxu0 %v293
  %v447 = vpop.f32.mrb[0].mxu0
  %v448 = vadd.f32 0.0, %v447
  %v449 = vpop.f32.mrb[0].mxu0
  %450 = vmatprep.mubr.f32.mxu0 0.0
  %451 = vmatmul.mubr.f32.gmra.mrb[0].mxu0 %v294
  %v452 = vpop.f32.mrb[0].mxu0
  %v453 = vadd.f32 0.0, %v452
  %v454 = vpop.f32.mrb[0].mxu0
  %455 = vmatprep.mubr.f32.mxu0 0.0
  %456 = vmatmul.mubr.f32.gmra.mrb[0].mxu0 %v295
  %v457 = vpop.f32.mrb[0].mxu0
  %v458 = vadd.f32 0.0, %v457
  %v459 = vpop.f32.mrb[0].mxu0
  %460 = vmatprep.mubr.f32.mxu0 0.0
  %461 = vmatmul.mubr.f32.gmra.mrb[0].mxu0 %v296
  %v462 = vpop.f32.mrb[0].mxu0
  %v463 = vadd.f32 0.0, %v462
  %v464 = vpop.f32.mrb[0].mxu0
  %465 = vmatprep.mubr.f32.mxu0 0.0
  %466 = vmatmul.mubr.f32.gmra.mrb[0].mxu0 %v297
  %v467 = vpop.f32.mrb[0].mxu0
  %v468 = vadd.f32 0.0, %v467
  %v469 = vpop.f32.mrb[0].mxu0
  %470 = vmatprep.mubr.f32.mxu0 0.0
  %471 = vmatmul.mubr.f32.gmra.mrb[0].mxu0 %v298
  %v472 = vpop.f32.mrb[0].mxu0
  %v473 = vadd.f32 0.0, %v472
  %v474 = vpop.f32.mrb[0].mxu0
  %475 = vmatprep.mubr.f32.mxu0 0.0
  %476 = vmatmul.mubr.f32.gmra.mrb[0].mxu0 %v299
  %v477 = vpop.f32.mrb[0].mxu0
  %v478 = vadd.f32 0.0, %v477
  %v479 = vpop.f32.mrb[0].mxu0
  %480 = vmatprep.mubr.f32.mxu0 0.0
  %481 = vmatmul.mubr.f32.gmra.mrb[0].mxu0 %v300
  %v482 = vpop.f32.mrb[0].mxu0
  %v483 = vadd.f32 0.0, %v482
  %v484 = vpop.f32.mrb[0].mxu0
  %485 = vmatprep.mubr.f32.mxu0 0.0
  %486 = vmatmul.mubr.f32.gmra.mrb[0].mxu0 %v301
  %v487 = vpop.f32.mrb[0].mxu0
  %v488 = vadd.f32 0.0, %v487
  %v489 = vpop.f32.mrb[0].mxu0
  %490 = vmatprep.mubr.f32.mxu0 0.0
  %491 = vmatmul.mubr.f32.gmra.mrb[0].mxu0 %v302
  %v492 = vpop.f32.mrb[0].mxu0
  %v493 = vadd.f32 0.0, %v492
  %v494 = vpop.f32.mrb[0].mxu0
  %495 = vmatprep.mubr.f32.mxu0 0.0
  %496 = vmatmul.mubr.f32.gmra.mrb[0].mxu0 %v303
  %v497 = vpop.f32.mrb[0].mxu0
  %v498 = vadd.f32 0.0, %v497
  %v499 = vpop.f32.mrb[0].mxu0
  %500 = vmatprep.mubr.f32.mxu0 0.0
  %501 = vmatmul.mubr.f32.gmra.mrb[0].mxu0 %v304
  %v502 = vpop.f32.mrb[0].mxu0
  %v503 = vadd.f32 0.0, %v502
  %v504 = vpop.f32.mrb[0].mxu0
  %505 = vmatprep.mubr.f32.mxu0 0.0
  %506 = vmatmul.mubr.f32.gmra.mrb[0].mxu0 %v305
  %v507 = vpop.f32.mrb[0].mxu0
  %v508 = vadd.f32 0.0, %v507
  %v509 = vpop.f32.mrb[0].mxu0
  %510 = vmatprep.mubr.f32.mxu0 0.0
  %511 = vmatmul.mubr.f32.gmra.mrb[0].mxu0 %v306
  %v512 = vpop.f32.mrb[0].mxu0
  %v513 = vadd.f32 0.0, %v512
  %v514 = vpop.f32.mrb[0].mxu0
  %515 = vmatprep.mubr.f32.mxu0 0.0
  %516 = vmatmul.mubr.f32.gmra.mrb[0].mxu0 %v307
  %v517 = vpop.f32.mrb[0].mxu0
  %v518 = vadd.f32 0.0, %v517
  %v519 = vpop.f32.mrb[0].mxu0
  %520 = vmatprep.mubr.f32.mxu0 0.0
  %521 = vmatmul.mubr.f32.gmra.mrb[0].mxu0 %v308
  %v522 = vpop.f32.mrb[0].mxu0
  %v523 = vadd.f32 0.0, %v522
  %v524 = vpop.f32.mrb[0].mxu0
  %525 = vmatprep.mubr.f32.mxu0 0.0
  %526 = vmatmul.mubr.f32.gmra.mrb[0].mxu0 %v309
  %v527 = vpop.f32.mrb[0].mxu0
  %v528 = vadd.f32 0.0, %v527
  %v529 = vpop.f32.mrb[0].mxu0
  %530 = vmatprep.mubr.f32.mxu0 0.0
  %531 = vmatmul.mubr.f32.gmra.mrb[0].mxu0 %v310
  %v532 = vpop.f32.mrb[0].mxu0
  %v533 = vadd.f32 0.0, %v532
  %v534 = vpop.f32.mrb[0].mxu0
  %535 = vmatprep.mubr.f32.mxu0 0.0
  %536 = vmatmul.mubr.f32.gmra.mrb[0].mxu0 %v311
  %v537 = vpop.f32.mrb[0].mxu0
  %v538 = vadd.f32 0.0, %v537
  %v539 = vpop.f32.mrb[0].mxu0
  %540 = vmatprep.mubr.f32.mxu0 0.0
  %541 = vmatmul.mubr.f32.gmra.mrb[0].mxu0 %v312
  %v542 = vpop.f32.mrb[0].mxu0
  %v543 = vadd.f32 0.0, %v542
  %v544 = vpop.f32.mrb[0].mxu0
  %545 = vmatprep.mubr.f32.mxu0 0.0
  %546 = vmatmul.mubr.f32.gmra.mrb[0].mxu0 %v313
  %v547 = vpop.f32.mrb[0].mxu0
  %v548 = vadd.f32 0.0, %v547
  %v549 = vpop.f32.mrb[0].mxu0
  %550 = vmatprep.mubr.f32.mxu0 0.0
  %551 = vmatmul.mubr.f32.gmra.mrb[0].mxu0 %v314
  %v552 = vpop.f32.mrb[0].mxu0
  %v553 = vadd.f32 0.0, %v552
  %v554 = vpop.f32.mrb[0].mxu0
  %555 = vmatprep.mubr.f32.mxu0 0.0
  %556 = vmatmul.mubr.f32.gmra.mrb[0].mxu0 %v315
  %v557 = vpop.f32.mrb[0].mxu0
  %v558 = vadd.f32 0.0, %v557
  %v559 = vpop.f32.mrb[0].mxu0
  %560 = vdwg.mxu0
  %v561 = vld [vmem:[%s4] sm:$0xff]
  %v562 = vld [vmem:[%s4 + $0x8] sm:$0xff]
  %v563 = vld [vmem:[%s4 + $0x10] sm:$0xff]
  %v564 = vld [vmem:[%s4 + $0x18] sm:$0xff]
  %s565 = scalar_lea.vmem %s4, 32
  %v566 = vld [vmem:[%s565] sm:$0xff]
  %v567 = vld [vmem:[%s565 + $0x8] sm:$0xff]
  %v568 = vld [vmem:[%s565 + $0x10] sm:$0xff]
  %v569 = vld [vmem:[%s565 + $0x18] sm:$0xff]
  %vm570 = vcmask 261120
  %v572 = vsel %vm570, %v403, 0
  %v575 = vsel %vm570, %v408, 0
  %v578 = vsel %vm570, %v413, 0
  %v581 = vsel %vm570, %v418, 0
  %583 = vmatprep.subr.mxu0 0.0
  %584 = vmatpush1.msra.mxu0 %v566
  %585 = vmatprep.subr.mxu0 0.0
  %586 = vmatpush1.msra.mxu0 %v567
  %587 = vmatprep.subr.mxu0 0.0
  %588 = vmatpush1.msra.mxu0 %v568
  %589 = vmatprep.subr.mxu0 0.0
  %590 = vmatpush1.msra.mxu0 %v569
  %591 = vmatprep.subr.mxu0 0.0
  %592 = vmatpush1.msra.mxu0 0.0
  %593 = vmatprep.subr.mxu0 0.0
  %594 = vmatpush1.msra.mxu0 0.0
  %595 = vmatprep.subr.mxu0 0.0
  %596 = vmatpush1.msra.mxu0 0.0
  %597 = vmatprep.subr.mxu0 0.0
  %598 = vmatpush1.msra.mxu0 0.0
  %599 = vmatprep.subr.mxu0 0.0
  %600 = vmatpush1.msra.mxu0 0.0
  %601 = vmatprep.subr.mxu0 0.0
  %602 = vmatpush1.msra.mxu0 0.0
  %603 = vmatprep.subr.mxu0 0.0
  %604 = vmatpush1.msra.mxu0 0.0
  %605 = vmatprep.subr.mxu0 0.0
  %606 = vmatpush1.msra.mxu0 0.0
  %607 = vmatprep.subr.mxu0 0.0
  %608 = vmatpush1.msra.mxu0 0.0
  %609 = vmatprep.subr.mxu0 0.0
  %610 = vmatpush1.msra.mxu0 0.0
  %611 = vmatprep.subr.mxu0 0.0
  %612 = vmatpush1.msra.mxu0 0.0
  %613 = vmatprep.subr.mxu0 0.0
  %614 = vmatpush1.msra.mxu0 0.0
  %615 = vmatprep.subr.mxu0 0.0
  %616 = vmatpush1.msra.mxu0 0.0
  %617 = vmatprep.subr.mxu0 0.0
  %618 = vmatpush1.msra.mxu0 0.0
  %619 = vmatprep.subr.mxu0 0.0
  %620 = vmatpush1.msra.mxu0 0.0
  %621 = vmatprep.subr.mxu0 0.0
  %622 = vmatpush1.msra.mxu0 0.0
  %623 = vmatprep.subr.mxu0 0.0
  %624 = vmatpush1.msra.mxu0 0.0
  %625 = vmatprep.subr.mxu0 0.0
  %626 = vmatpush1.msra.mxu0 0.0
  %627 = vmatprep.subr.mxu0 0.0
  %628 = vmatpush1.msra.mxu0 0.0
  %629 = vmatprep.subr.mxu0 0.0
  %630 = vmatpush1.msra.mxu0 0.0
  %631 = vmatprep.subr.mxu0 0.0
  %632 = vmatpush1.msra.mxu0 0.0
  %633 = vmatprep.subr.mxu0 0.0
  %634 = vmatpush1.msra.mxu0 0.0
  %635 = vmatprep.subr.mxu0 0.0
  %636 = vmatpush1.msra.mxu0 0.0
  %637 = vmatprep.subr.mxu0 0.0
  %638 = vmatpush1.msra.mxu0 0.0
  %639 = vmatprep.subr.mxu0 0.0
  %640 = vmatpush1.msra.mxu0 0.0
  %641 = vmatprep.subr.mxu0 0.0
  %642 = vmatpush1.msra.mxu0 0.0
  %643 = vmatprep.subr.mxu0 0.0
  %644 = vmatpush1.msra.mxu0 0.0
  %645 = vmatprep.subr.mxu0 0.0
  %646 = vmatpush1.msra.mxu0 0.0
  %647 = vmatprep.mubr.f32.mxu0 0.0
  %648 = vmatmul.mubr.f32.gmra.mrb[0].mxu0 %v572
  %v649 = vpop.f32.mrb[0].mxu0
  %v650 = vadd.f32 0.0, %v649
  %v651 = vpop.f32.mrb[0].mxu0
  %652 = vmatprep.mubr.f32.mxu0 0.0
  %653 = vmatmul.mubr.f32.gmra.mrb[0].mxu0 %v575
  %v654 = vpop.f32.mrb[0].mxu0
  %v655 = vadd.f32 0.0, %v654
  %v656 = vpop.f32.mrb[0].mxu0
  %657 = vmatprep.mubr.f32.mxu0 0.0
  %658 = vmatmul.mubr.f32.gmra.mrb[0].mxu0 %v578
  %v659 = vpop.f32.mrb[0].mxu0
  %v660 = vadd.f32 0.0, %v659
  %v661 = vpop.f32.mrb[0].mxu0
  %662 = vmatprep.mubr.f32.mxu0 0.0
  %663 = vmatmul.mubr.f32.gmra.mrb[0].mxu0 %v581
  %v664 = vpop.f32.mrb[0].mxu0
  %v665 = vadd.f32 0.0, %v664
  %v666 = vpop.f32.mrb[0].mxu0
  %667 = vdwg.mxu0
  %v669 = vsel %vm570, %v383, 0
  %v672 = vsel %vm570, %v388, 0
  %v675 = vsel %vm570, %v393, 0
  %v678 = vsel %vm570, %v398, 0
  %680 = vmatprep.subr.mxu0 0.0
  %681 = vmatpush1.msra.mxu0 %v561
  %682 = vmatprep.subr.mxu0 0.0
  %683 = vmatpush1.msra.mxu0 %v562
  %684 = vmatprep.subr.mxu0 0.0
  %685 = vmatpush1.msra.mxu0 %v563
  %686 = vmatprep.subr.mxu0 0.0
  %687 = vmatpush1.msra.mxu0 %v564
  %688 = vmatprep.subr.mxu0 0.0
  %689 = vmatpush1.msra.mxu0 0.0
  %690 = vmatprep.subr.mxu0 0.0
  %691 = vmatpush1.msra.mxu0 0.0
  %692 = vmatprep.subr.mxu0 0.0
  %693 = vmatpush1.msra.mxu0 0.0
  %694 = vmatprep.subr.mxu0 0.0
  %695 = vmatpush1.msra.mxu0 0.0
  %696 = vmatprep.subr.mxu0 0.0
  %697 = vmatpush1.msra.mxu0 0.0
  %698 = vmatprep.subr.mxu0 0.0
  %699 = vmatpush1.msra.mxu0 0.0
  %700 = vmatprep.subr.mxu0 0.0
  %701 = vmatpush1.msra.mxu0 0.0
  %702 = vmatprep.subr.mxu0 0.0
  %703 = vmatpush1.msra.mxu0 0.0
  %704 = vmatprep.subr.mxu0 0.0
  %705 = vmatpush1.msra.mxu0 0.0
  %706 = vmatprep.subr.mxu0 0.0
  %707 = vmatpush1.msra.mxu0 0.0
  %708 = vmatprep.subr.mxu0 0.0
  %709 = vmatpush1.msra.mxu0 0.0
  %710 = vmatprep.subr.mxu0 0.0
  %711 = vmatpush1.msra.mxu0 0.0
  %712 = vmatprep.subr.mxu0 0.0
  %713 = vmatpush1.msra.mxu0 0.0
  %714 = vmatprep.subr.mxu0 0.0
  %715 = vmatpush1.msra.mxu0 0.0
  %716 = vmatprep.subr.mxu0 0.0
  %717 = vmatpush1.msra.mxu0 0.0
  %718 = vmatprep.subr.mxu0 0.0
  %719 = vmatpush1.msra.mxu0 0.0
  %720 = vmatprep.subr.mxu0 0.0
  %721 = vmatpush1.msra.mxu0 0.0
  %722 = vmatprep.subr.mxu0 0.0
  %723 = vmatpush1.msra.mxu0 0.0
  %724 = vmatprep.subr.mxu0 0.0
  %725 = vmatpush1.msra.mxu0 0.0
  %726 = vmatprep.subr.mxu0 0.0
  %727 = vmatpush1.msra.mxu0 0.0
  %728 = vmatprep.subr.mxu0 0.0
  %729 = vmatpush1.msra.mxu0 0.0
  %730 = vmatprep.subr.mxu0 0.0
  %731 = vmatpush1.msra.mxu0 0.0
  %732 = vmatprep.subr.mxu0 0.0
  %733 = vmatpush1.msra.mxu0 0.0
  %734 = vmatprep.subr.mxu0 0.0
  %735 = vmatpush1.msra.mxu0 0.0
  %736 = vmatprep.subr.mxu0 0.0
  %737 = vmatpush1.msra.mxu0 0.0
  %738 = vmatprep.subr.mxu0 0.0
  %739 = vmatpush1.msra.mxu0 0.0
  %740 = vmatprep.subr.mxu0 0.0
  %741 = vmatpush1.msra.mxu0 0.0
  %742 = vmatprep.subr.mxu0 0.0
  %743 = vmatpush1.msra.mxu0 0.0
  %744 = vmatprep.mubr.f32.mxu0 0.0
  %745 = vmatmul.mubr.f32.gmra.mrb[0].mxu0 %v669
  %v746 = vpop.f32.mrb[0].mxu0
  %v747 = vadd.f32 %v650, %v746
  %v748 = vpop.f32.mrb[0].mxu0
  %749 = vmatprep.mubr.f32.mxu0 0.0
  %750 = vmatmul.mubr.f32.gmra.mrb[0].mxu0 %v672
  %v751 = vpop.f32.mrb[0].mxu0
  %v752 = vadd.f32 %v655, %v751
  %v753 = vpop.f32.mrb[0].mxu0
  %754 = vmatprep.mubr.f32.mxu0 0.0
  %755 = vmatmul.mubr.f32.gmra.mrb[0].mxu0 %v675
  %v756 = vpop.f32.mrb[0].mxu0
  %v757 = vadd.f32 %v660, %v756
  %v758 = vpop.f32.mrb[0].mxu0
  %759 = vmatprep.mubr.f32.mxu0 0.0
  %760 = vmatmul.mubr.f32.gmra.mrb[0].mxu0 %v678
  %v761 = vpop.f32.mrb[0].mxu0
  %v762 = vadd.f32 %v665, %v761
  %v763 = vpop.f32.mrb[0].mxu0
  %764 = vdwg.mxu0
  %s765 = scalar_lea.vmem %s4, 64
  %v766 = vld [vmem:[%s765] sm:$0xff]
  %v767 = vld [vmem:[%s765 + $0x8] sm:$0xff]
  %v768 = vld [vmem:[%s765 + $0x10] sm:$0xff]
  %v769 = vld [vmem:[%s765 + $0x18] sm:$0xff]
  %v771 = vsel %vm570, %v423, 0
  %v774 = vsel %vm570, %v428, 0
  %v777 = vsel %vm570, %v433, 0
  %v780 = vsel %vm570, %v438, 0
  %782 = vmatprep.subr.mxu0 0.0
  %783 = vmatpush1.msra.mxu0 %v766
  %784 = vmatprep.subr.mxu0 0.0
  %785 = vmatpush1.msra.mxu0 %v767
  %786 = vmatprep.subr.mxu0 0.0
  %787 = vmatpush1.msra.mxu0 %v768
  %788 = vmatprep.subr.mxu0 0.0
  %789 = vmatpush1.msra.mxu0 %v769
  %790 = vmatprep.subr.mxu0 0.0
  %791 = vmatpush1.msra.mxu0 0.0
  %792 = vmatprep.subr.mxu0 0.0
  %793 = vmatpush1.msra.mxu0 0.0
  %794 = vmatprep.subr.mxu0 0.0
  %795 = vmatpush1.msra.mxu0 0.0
  %796 = vmatprep.subr.mxu0 0.0
  %797 = vmatpush1.msra.mxu0 0.0
  %798 = vmatprep.subr.mxu0 0.0
  %799 = vmatpush1.msra.mxu0 0.0
  %800 = vmatprep.subr.mxu0 0.0
  %801 = vmatpush1.msra.mxu0 0.0
  %802 = vmatprep.subr.mxu0 0.0
  %803 = vmatpush1.msra.mxu0 0.0
  %804 = vmatprep.subr.mxu0 0.0
  %805 = vmatpush1.msra.mxu0 0.0
  %806 = vmatprep.subr.mxu0 0.0
  %807 = vmatpush1.msra.mxu0 0.0
  %808 = vmatprep.subr.mxu0 0.0
  %809 = vmatpush1.msra.mxu0 0.0
  %810 = vmatprep.subr.mxu0 0.0
  %811 = vmatpush1.msra.mxu0 0.0
  %812 = vmatprep.subr.mxu0 0.0
  %813 = vmatpush1.msra.mxu0 0.0
  %814 = vmatprep.subr.mxu0 0.0
  %815 = vmatpush1.msra.mxu0 0.0
  %816 = vmatprep.subr.mxu0 0.0
  %817 = vmatpush1.msra.mxu0 0.0
  %818 = vmatprep.subr.mxu0 0.0
  %819 = vmatpush1.msra.mxu0 0.0
  %820 = vmatprep.subr.mxu0 0.0
  %821 = vmatpush1.msra.mxu0 0.0
  %822 = vmatprep.subr.mxu0 0.0
  %823 = vmatpush1.msra.mxu0 0.0
  %824 = vmatprep.subr.mxu0 0.0
  %825 = vmatpush1.msra.mxu0 0.0
  %826 = vmatprep.subr.mxu0 0.0
  %827 = vmatpush1.msra.mxu0 0.0
  %828 = vmatprep.subr.mxu0 0.0
  %829 = vmatpush1.msra.mxu0 0.0
  %830 = vmatprep.subr.mxu0 0.0
  %831 = vmatpush1.msra.mxu0 0.0
  %832 = vmatprep.subr.mxu0 0.0
  %833 = vmatpush1.msra.mxu0 0.0
  %834 = vmatprep.subr.mxu0 0.0
  %835 = vmatpush1.msra.mxu0 0.0
  %836 = vmatprep.subr.mxu0 0.0
  %837 = vmatpush1.msra.mxu0 0.0
  %838 = vmatprep.subr.mxu0 0.0
  %839 = vmatpush1.msra.mxu0 0.0
  %840 = vmatprep.subr.mxu0 0.0
  %841 = vmatpush1.msra.mxu0 0.0
  %842 = vmatprep.subr.mxu0 0.0
  %843 = vmatpush1.msra.mxu0 0.0
  %844 = vmatprep.subr.mxu0 0.0
  %845 = vmatpush1.msra.mxu0 0.0
  %846 = vmatprep.mubr.f32.mxu0 0.0
  %847 = vmatmul.mubr.f32.gmra.mrb[0].mxu0 %v771
  %v848 = vpop.f32.mrb[0].mxu0
  %v849 = vadd.f32 0.0, %v848
  %v850 = vpop.f32.mrb[0].mxu0
  %851 = vmatprep.mubr.f32.mxu0 0.0
  %852 = vmatmul.mubr.f32.gmra.mrb[0].mxu0 %v774
  %v853 = vpop.f32.mrb[0].mxu0
  %v854 = vadd.f32 0.0, %v853
  %v855 = vpop.f32.mrb[0].mxu0
  %856 = vmatprep.mubr.f32.mxu0 0.0
  %857 = vmatmul.mubr.f32.gmra.mrb[0].mxu0 %v777
  %v858 = vpop.f32.mrb[0].mxu0
  %v859 = vadd.f32 0.0, %v858
  %v860 = vpop.f32.mrb[0].mxu0
  %861 = vmatprep.mubr.f32.mxu0 0.0
  %862 = vmatmul.mubr.f32.gmra.mrb[0].mxu0 %v780
  %v863 = vpop.f32.mrb[0].mxu0
  %v864 = vadd.f32 0.0, %v863
  %v865 = vpop.f32.mrb[0].mxu0
  %866 = vdwg.mxu0
  %v867 = vadd.f32 %v747, %v849
  %v868 = vadd.f32 %v752, %v854
  %v869 = vadd.f32 %v757, %v859
  %v870 = vadd.f32 %v762, %v864
  %s871 = scalar_lea.vmem %s4, 96
  %v872 = vld [vmem:[%s871] sm:$0xff]
  %v873 = vld [vmem:[%s871 + $0x8] sm:$0xff]
  %v874 = vld [vmem:[%s871 + $0x10] sm:$0xff]
  %v875 = vld [vmem:[%s871 + $0x18] sm:$0xff]
  %v877 = vsel %vm570, %v443, 0
  %v880 = vsel %vm570, %v448, 0
  %v883 = vsel %vm570, %v453, 0
  %v886 = vsel %vm570, %v458, 0
  %888 = vmatprep.subr.mxu0 0.0
  %889 = vmatpush1.msra.mxu0 %v872
  %890 = vmatprep.subr.mxu0 0.0
  %891 = vmatpush1.msra.mxu0 %v873
  %892 = vmatprep.subr.mxu0 0.0
  %893 = vmatpush1.msra.mxu0 %v874
  %894 = vmatprep.subr.mxu0 0.0
  %895 = vmatpush1.msra.mxu0 %v875
  %896 = vmatprep.subr.mxu0 0.0
  %897 = vmatpush1.msra.mxu0 0.0
  %898 = vmatprep.subr.mxu0 0.0
  %899 = vmatpush1.msra.mxu0 0.0
  %900 = vmatprep.subr.mxu0 0.0
  %901 = vmatpush1.msra.mxu0 0.0
  %902 = vmatprep.subr.mxu0 0.0
  %903 = vmatpush1.msra.mxu0 0.0
  %904 = vmatprep.subr.mxu0 0.0
  %905 = vmatpush1.msra.mxu0 0.0
  %906 = vmatprep.subr.mxu0 0.0
  %907 = vmatpush1.msra.mxu0 0.0
  %908 = vmatprep.subr.mxu0 0.0
  %909 = vmatpush1.msra.mxu0 0.0
  %910 = vmatprep.subr.mxu0 0.0
  %911 = vmatpush1.msra.mxu0 0.0
  %912 = vmatprep.subr.mxu0 0.0
  %913 = vmatpush1.msra.mxu0 0.0
  %914 = vmatprep.subr.mxu0 0.0
  %915 = vmatpush1.msra.mxu0 0.0
  %916 = vmatprep.subr.mxu0 0.0
  %917 = vmatpush1.msra.mxu0 0.0
  %918 = vmatprep.subr.mxu0 0.0
  %919 = vmatpush1.msra.mxu0 0.0
  %920 = vmatprep.subr.mxu0 0.0
  %921 = vmatpush1.msra.mxu0 0.0
  %922 = vmatprep.subr.mxu0 0.0
  %923 = vmatpush1.msra.mxu0 0.0
  %924 = vmatprep.subr.mxu0 0.0
  %925 = vmatpush1.msra.mxu0 0.0
  %926 = vmatprep.subr.mxu0 0.0
  %927 = vmatpush1.msra.mxu0 0.0
  %928 = vmatprep.subr.mxu0 0.0
  %929 = vmatpush1.msra.mxu0 0.0
  %930 = vmatprep.subr.mxu0 0.0
  %931 = vmatpush1.msra.mxu0 0.0
  %932 = vmatprep.subr.mxu0 0.0
  %933 = vmatpush1.msra.mxu0 0.0
  %934 = vmatprep.subr.mxu0 0.0
  %935 = vmatpush1.msra.mxu0 0.0
  %936 = vmatprep.subr.mxu0 0.0
  %937 = vmatpush1.msra.mxu0 0.0
  %938 = vmatprep.subr.mxu0 0.0
  %939 = vmatpush1.msra.mxu0 0.0
  %940 = vmatprep.subr.mxu0 0.0
  %941 = vmatpush1.msra.mxu0 0.0
  %942 = vmatprep.subr.mxu0 0.0
  %943 = vmatpush1.msra.mxu0 0.0
  %944 = vmatprep.subr.mxu0 0.0
  %945 = vmatpush1.msra.mxu0 0.0
  %946 = vmatprep.subr.mxu0 0.0
  %947 = vmatpush1.msra.mxu0 0.0
  %948 = vmatprep.subr.mxu0 0.0
  %949 = vmatpush1.msra.mxu0 0.0
  %950 = vmatprep.subr.mxu0 0.0
  %951 = vmatpush1.msra.mxu0 0.0
  %952 = vmatprep.mubr.f32.mxu0 0.0
  %953 = vmatmul.mubr.f32.gmra.mrb[0].mxu0 %v877
  %v954 = vpop.f32.mrb[0].mxu0
  %v955 = vadd.f32 0.0, %v954
  %v956 = vpop.f32.mrb[0].mxu0
  %957 = vmatprep.mubr.f32.mxu0 0.0
  %958 = vmatmul.mubr.f32.gmra.mrb[0].mxu0 %v880
  %v959 = vpop.f32.mrb[0].mxu0
  %v960 = vadd.f32 0.0, %v959
  %v961 = vpop.f32.mrb[0].mxu0
  %962 = vmatprep.mubr.f32.mxu0 0.0
  %963 = vmatmul.mubr.f32.gmra.mrb[0].mxu0 %v883
  %v964 = vpop.f32.mrb[0].mxu0
  %v965 = vadd.f32 0.0, %v964
  %v966 = vpop.f32.mrb[0].mxu0
  %967 = vmatprep.mubr.f32.mxu0 0.0
  %968 = vmatmul.mubr.f32.gmra.mrb[0].mxu0 %v886
  %v969 = vpop.f32.mrb[0].mxu0
  %v970 = vadd.f32 0.0, %v969
  %v971 = vpop.f32.mrb[0].mxu0
  %972 = vdwg.mxu0
  %v973 = vadd.f32 %v867, %v955
  %v974 = vadd.f32 %v868, %v960
  %v975 = vadd.f32 %v869, %v965
  %v976 = vadd.f32 %v870, %v970
  %s977 = scalar_lea.vmem %s4, 128
  %v978 = vld [vmem:[%s977] sm:$0xff]
  %v979 = vld [vmem:[%s977 + $0x8] sm:$0xff]
  %v980 = vld [vmem:[%s977 + $0x10] sm:$0xff]
  %v981 = vld [vmem:[%s977 + $0x18] sm:$0xff]
  %v983 = vsel %vm570, %v463, 0
  %v986 = vsel %vm570, %v468, 0
  %v989 = vsel %vm570, %v473, 0
  %v992 = vsel %vm570, %v478, 0
  %994 = vmatprep.subr.mxu0 0.0
  %995 = vmatpush1.msra.mxu0 %v978
  %996 = vmatprep.subr.mxu0 0.0
  %997 = vmatpush1.msra.mxu0 %v979
  %998 = vmatprep.subr.mxu0 0.0
  %999 = vmatpush1.msra.mxu0 %v980
  %1000 = vmatprep.subr.mxu0 0.0
  %1001 = vmatpush1.msra.mxu0 %v981
  %1002 = vmatprep.subr.mxu0 0.0
  %1003 = vmatpush1.msra.mxu0 0.0
  %1004 = vmatprep.subr.mxu0 0.0
  %1005 = vmatpush1.msra.mxu0 0.0
  %1006 = vmatprep.subr.mxu0 0.0
  %1007 = vmatpush1.msra.mxu0 0.0
  %1008 = vmatprep.subr.mxu0 0.0
  %1009 = vmatpush1.msra.mxu0 0.0
  %1010 = vmatprep.subr.mxu0 0.0
  %1011 = vmatpush1.msra.mxu0 0.0
  %1012 = vmatprep.subr.mxu0 0.0
  %1013 = vmatpush1.msra.mxu0 0.0
  %1014 = vmatprep.subr.mxu0 0.0
  %1015 = vmatpush1.msra.mxu0 0.0
  %1016 = vmatprep.subr.mxu0 0.0
  %1017 = vmatpush1.msra.mxu0 0.0
  %1018 = vmatprep.subr.mxu0 0.0
  %1019 = vmatpush1.msra.mxu0 0.0
  %1020 = vmatprep.subr.mxu0 0.0
  %1021 = vmatpush1.msra.mxu0 0.0
  %1022 = vmatprep.subr.mxu0 0.0
  %1023 = vmatpush1.msra.mxu0 0.0
  %1024 = vmatprep.subr.mxu0 0.0
  %1025 = vmatpush1.msra.mxu0 0.0
  %1026 = vmatprep.subr.mxu0 0.0
  %1027 = vmatpush1.msra.mxu0 0.0
  %1028 = vmatprep.subr.mxu0 0.0
  %1029 = vmatpush1.msra.mxu0 0.0
  %1030 = vmatprep.subr.mxu0 0.0
  %1031 = vmatpush1.msra.mxu0 0.0
  %1032 = vmatprep.subr.mxu0 0.0
  %1033 = vmatpush1.msra.mxu0 0.0
  %1034 = vmatprep.subr.mxu0 0.0
  %1035 = vmatpush1.msra.mxu0 0.0
  %1036 = vmatprep.subr.mxu0 0.0
  %1037 = vmatpush1.msra.mxu0 0.0
  %1038 = vmatprep.subr.mxu0 0.0
  %1039 = vmatpush1.msra.mxu0 0.0
  %1040 = vmatprep.subr.mxu0 0.0
  %1041 = vmatpush1.msra.mxu0 0.0
  %1042 = vmatprep.subr.mxu0 0.0
  %1043 = vmatpush1.msra.mxu0 0.0
  %1044 = vmatprep.subr.mxu0 0.0
  %1045 = vmatpush1.msra.mxu0 0.0
  %1046 = vmatprep.subr.mxu0 0.0
  %1047 = vmatpush1.msra.mxu0 0.0
  %1048 = vmatprep.subr.mxu0 0.0
  %1049 = vmatpush1.msra.mxu0 0.0
  %1050 = vmatprep.subr.mxu0 0.0
  %1051 = vmatpush1.msra.mxu0 0.0
  %1052 = vmatprep.subr.mxu0 0.0
  %1053 = vmatpush1.msra.mxu0 0.0
  %1054 = vmatprep.subr.mxu0 0.0
  %1055 = vmatpush1.msra.mxu0 0.0
  %1056 = vmatprep.subr.mxu0 0.0
  %1057 = vmatpush1.msra.mxu0 0.0
  %1058 = vmatprep.mubr.f32.mxu0 0.0
  %1059 = vmatmul.mubr.f32.gmra.mrb[0].mxu0 %v983
  %v1060 = vpop.f32.mrb[0].mxu0
  %v1061 = vadd.f32 0.0, %v1060
  %v1062 = vpop.f32.mrb[0].mxu0
  %1063 = vmatprep.mubr.f32.mxu0 0.0
  %1064 = vmatmul.mubr.f32.gmra.mrb[0].mxu0 %v986
  %v1065 = vpop.f32.mrb[0].mxu0
  %v1066 = vadd.f32 0.0, %v1065
  %v1067 = vpop.f32.mrb[0].mxu0
  %1068 = vmatprep.mubr.f32.mxu0 0.0
  %1069 = vmatmul.mubr.f32.gmra.mrb[0].mxu0 %v989
  %v1070 = vpop.f32.mrb[0].mxu0
  %v1071 = vadd.f32 0.0, %v1070
  %v1072 = vpop.f32.mrb[0].mxu0
  %1073 = vmatprep.mubr.f32.mxu0 0.0
  %1074 = vmatmul.mubr.f32.gmra.mrb[0].mxu0 %v992
  %v1075 = vpop.f32.mrb[0].mxu0
  %v1076 = vadd.f32 0.0, %v1075
  %v1077 = vpop.f32.mrb[0].mxu0
  %1078 = vdwg.mxu0
  %v1079 = vadd.f32 %v973, %v1061
  %v1080 = vadd.f32 %v974, %v1066
  %v1081 = vadd.f32 %v975, %v1071
  %v1082 = vadd.f32 %v976, %v1076
  %s1083 = scalar_lea.vmem %s4, 160
  %v1084 = vld [vmem:[%s1083] sm:$0xff]
  %v1085 = vld [vmem:[%s1083 + $0x8] sm:$0xff]
  %v1086 = vld [vmem:[%s1083 + $0x10] sm:$0xff]
  %v1087 = vld [vmem:[%s1083 + $0x18] sm:$0xff]
  %v1089 = vsel %vm570, %v483, 0
  %v1092 = vsel %vm570, %v488, 0
  %v1095 = vsel %vm570, %v493, 0
  %v1098 = vsel %vm570, %v498, 0
  %1100 = vmatprep.subr.mxu0 0.0
  %1101 = vmatpush1.msra.mxu0 %v1084
  %1102 = vmatprep.subr.mxu0 0.0
  %1103 = vmatpush1.msra.mxu0 %v1085
  %1104 = vmatprep.subr.mxu0 0.0
  %1105 = vmatpush1.msra.mxu0 %v1086
  %1106 = vmatprep.subr.mxu0 0.0
  %1107 = vmatpush1.msra.mxu0 %v1087
  %1108 = vmatprep.subr.mxu0 0.0
  %1109 = vmatpush1.msra.mxu0 0.0
  %1110 = vmatprep.subr.mxu0 0.0
  %1111 = vmatpush1.msra.mxu0 0.0
  %1112 = vmatprep.subr.mxu0 0.0
  %1113 = vmatpush1.msra.mxu0 0.0
  %1114 = vmatprep.subr.mxu0 0.0
  %1115 = vmatpush1.msra.mxu0 0.0
  %1116 = vmatprep.subr.mxu0 0.0
  %1117 = vmatpush1.msra.mxu0 0.0
  %1118 = vmatprep.subr.mxu0 0.0
  %1119 = vmatpush1.msra.mxu0 0.0
  %1120 = vmatprep.subr.mxu0 0.0
  %1121 = vmatpush1.msra.mxu0 0.0
  %1122 = vmatprep.subr.mxu0 0.0
  %1123 = vmatpush1.msra.mxu0 0.0
  %1124 = vmatprep.subr.mxu0 0.0
  %1125 = vmatpush1.msra.mxu0 0.0
  %1126 = vmatprep.subr.mxu0 0.0
  %1127 = vmatpush1.msra.mxu0 0.0
  %1128 = vmatprep.subr.mxu0 0.0
  %1129 = vmatpush1.msra.mxu0 0.0
  %1130 = vmatprep.subr.mxu0 0.0
  %1131 = vmatpush1.msra.mxu0 0.0
  %1132 = vmatprep.subr.mxu0 0.0
  %1133 = vmatpush1.msra.mxu0 0.0
  %1134 = vmatprep.subr.mxu0 0.0
  %1135 = vmatpush1.msra.mxu0 0.0
  %1136 = vmatprep.subr.mxu0 0.0
  %1137 = vmatpush1.msra.mxu0 0.0
  %1138 = vmatprep.subr.mxu0 0.0
  %1139 = vmatpush1.msra.mxu0 0.0
  %1140 = vmatprep.subr.mxu0 0.0
  %1141 = vmatpush1.msra.mxu0 0.0
  %1142 = vmatprep.subr.mxu0 0.0
  %1143 = vmatpush1.msra.mxu0 0.0
  %1144 = vmatprep.subr.mxu0 0.0
  %1145 = vmatpush1.msra.mxu0 0.0
  %1146 = vmatprep.subr.mxu0 0.0
  %1147 = vmatpush1.msra.mxu0 0.0
  %1148 = vmatprep.subr.mxu0 0.0
  %1149 = vmatpush1.msra.mxu0 0.0
  %1150 = vmatprep.subr.mxu0 0.0
  %1151 = vmatpush1.msra.mxu0 0.0
  %1152 = vmatprep.subr.mxu0 0.0
  %1153 = vmatpush1.msra.mxu0 0.0
  %1154 = vmatprep.subr.mxu0 0.0
  %1155 = vmatpush1.msra.mxu0 0.0
  %1156 = vmatprep.subr.mxu0 0.0
  %1157 = vmatpush1.msra.mxu0 0.0
  %1158 = vmatprep.subr.mxu0 0.0
  %1159 = vmatpush1.msra.mxu0 0.0
  %1160 = vmatprep.subr.mxu0 0.0
  %1161 = vmatpush1.msra.mxu0 0.0
  %1162 = vmatprep.subr.mxu0 0.0
  %1163 = vmatpush1.msra.mxu0 0.0
  %1164 = vmatprep.mubr.f32.mxu0 0.0
  %1165 = vmatmul.mubr.f32.gmra.mrb[0].mxu0 %v1089
  %v1166 = vpop.f32.mrb[0].mxu0
  %v1167 = vadd.f32 0.0, %v1166
  %v1168 = vpop.f32.mrb[0].mxu0
  %1169 = vmatprep.mubr.f32.mxu0 0.0
  %1170 = vmatmul.mubr.f32.gmra.mrb[0].mxu0 %v1092
  %v1171 = vpop.f32.mrb[0].mxu0
  %v1172 = vadd.f32 0.0, %v1171
  %v1173 = vpop.f32.mrb[0].mxu0
  %1174 = vmatprep.mubr.f32.mxu0 0.0
  %1175 = vmatmul.mubr.f32.gmra.mrb[0].mxu0 %v1095
  %v1176 = vpop.f32.mrb[0].mxu0
  %v1177 = vadd.f32 0.0, %v1176
  %v1178 = vpop.f32.mrb[0].mxu0
  %1179 = vmatprep.mubr.f32.mxu0 0.0
  %1180 = vmatmul.mubr.f32.gmra.mrb[0].mxu0 %v1098
  %v1181 = vpop.f32.mrb[0].mxu0
  %v1182 = vadd.f32 0.0, %v1181
  %v1183 = vpop.f32.mrb[0].mxu0
  %1184 = vdwg.mxu0
  %v1185 = vadd.f32 %v1079, %v1167
  %v1186 = vadd.f32 %v1080, %v1172
  %v1187 = vadd.f32 %v1081, %v1177
  %v1188 = vadd.f32 %v1082, %v1182
  %s1189 = scalar_lea.vmem %s4, 192
  %v1190 = vld [vmem:[%s1189] sm:$0xff]
  %v1191 = vld [vmem:[%s1189 + $0x8] sm:$0xff]
  %v1192 = vld [vmem:[%s1189 + $0x10] sm:$0xff]
  %v1193 = vld [vmem:[%s1189 + $0x18] sm:$0xff]
  %v1195 = vsel %vm570, %v503, 0
  %v1198 = vsel %vm570, %v508, 0
  %v1201 = vsel %vm570, %v513, 0
  %v1204 = vsel %vm570, %v518, 0
  %1206 = vmatprep.subr.mxu0 0.0
  %1207 = vmatpush1.msra.mxu0 %v1190
  %1208 = vmatprep.subr.mxu0 0.0
  %1209 = vmatpush1.msra.mxu0 %v1191
  %1210 = vmatprep.subr.mxu0 0.0
  %1211 = vmatpush1.msra.mxu0 %v1192
  %1212 = vmatprep.subr.mxu0 0.0
  %1213 = vmatpush1.msra.mxu0 %v1193
  %1214 = vmatprep.subr.mxu0 0.0
  %1215 = vmatpush1.msra.mxu0 0.0
  %1216 = vmatprep.subr.mxu0 0.0
  %1217 = vmatpush1.msra.mxu0 0.0
  %1218 = vmatprep.subr.mxu0 0.0
  %1219 = vmatpush1.msra.mxu0 0.0
  %1220 = vmatprep.subr.mxu0 0.0
  %1221 = vmatpush1.msra.mxu0 0.0
  %1222 = vmatprep.subr.mxu0 0.0
  %1223 = vmatpush1.msra.mxu0 0.0
  %1224 = vmatprep.subr.mxu0 0.0
  %1225 = vmatpush1.msra.mxu0 0.0
  %1226 = vmatprep.subr.mxu0 0.0
  %1227 = vmatpush1.msra.mxu0 0.0
  %1228 = vmatprep.subr.mxu0 0.0
  %1229 = vmatpush1.msra.mxu0 0.0
  %1230 = vmatprep.subr.mxu0 0.0
  %1231 = vmatpush1.msra.mxu0 0.0
  %1232 = vmatprep.subr.mxu0 0.0
  %1233 = vmatpush1.msra.mxu0 0.0
  %1234 = vmatprep.subr.mxu0 0.0
  %1235 = vmatpush1.msra.mxu0 0.0
  %1236 = vmatprep.subr.mxu0 0.0
  %1237 = vmatpush1.msra.mxu0 0.0
  %1238 = vmatprep.subr.mxu0 0.0
  %1239 = vmatpush1.msra.mxu0 0.0
  %1240 = vmatprep.subr.mxu0 0.0
  %1241 = vmatpush1.msra.mxu0 0.0
  %1242 = vmatprep.subr.mxu0 0.0
  %1243 = vmatpush1.msra.mxu0 0.0
  %1244 = vmatprep.subr.mxu0 0.0
  %1245 = vmatpush1.msra.mxu0 0.0
  %1246 = vmatprep.subr.mxu0 0.0
  %1247 = vmatpush1.msra.mxu0 0.0
  %1248 = vmatprep.subr.mxu0 0.0
  %1249 = vmatpush1.msra.mxu0 0.0
  %1250 = vmatprep.subr.mxu0 0.0
  %1251 = vmatpush1.msra.mxu0 0.0
  %1252 = vmatprep.subr.mxu0 0.0
  %1253 = vmatpush1.msra.mxu0 0.0
  %1254 = vmatprep.subr.mxu0 0.0
  %1255 = vmatpush1.msra.mxu0 0.0
  %1256 = vmatprep.subr.mxu0 0.0
  %1257 = vmatpush1.msra.mxu0 0.0
  %1258 = vmatprep.subr.mxu0 0.0
  %1259 = vmatpush1.msra.mxu0 0.0
  %1260 = vmatprep.subr.mxu0 0.0
  %1261 = vmatpush1.msra.mxu0 0.0
  %1262 = vmatprep.subr.mxu0 0.0
  %1263 = vmatpush1.msra.mxu0 0.0
  %1264 = vmatprep.subr.mxu0 0.0
  %1265 = vmatpush1.msra.mxu0 0.0
  %1266 = vmatprep.subr.mxu0 0.0
  %1267 = vmatpush1.msra.mxu0 0.0
  %1268 = vmatprep.subr.mxu0 0.0
  %1269 = vmatpush1.msra.mxu0 0.0
  %1270 = vmatprep.mubr.f32.mxu0 0.0
  %1271 = vmatmul.mubr.f32.gmra.mrb[0].mxu0 %v1195
  %v1272 = vpop.f32.mrb[0].mxu0
  %v1273 = vadd.f32 0.0, %v1272
  %v1274 = vpop.f32.mrb[0].mxu0
  %1275 = vmatprep.mubr.f32.mxu0 0.0
  %1276 = vmatmul.mubr.f32.gmra.mrb[0].mxu0 %v1198
  %v1277 = vpop.f32.mrb[0].mxu0
  %v1278 = vadd.f32 0.0, %v1277
  %v1279 = vpop.f32.mrb[0].mxu0
  %1280 = vmatprep.mubr.f32.mxu0 0.0
  %1281 = vmatmul.mubr.f32.gmra.mrb[0].mxu0 %v1201
  %v1282 = vpop.f32.mrb[0].mxu0
  %v1283 = vadd.f32 0.0, %v1282
  %v1284 = vpop.f32.mrb[0].mxu0
  %1285 = vmatprep.mubr.f32.mxu0 0.0
  %1286 = vmatmul.mubr.f32.gmra.mrb[0].mxu0 %v1204
  %v1287 = vpop.f32.mrb[0].mxu0
  %v1288 = vadd.f32 0.0, %v1287
  %v1289 = vpop.f32.mrb[0].mxu0
  %1290 = vdwg.mxu0
  %v1291 = vadd.f32 %v1185, %v1273
  %v1292 = vadd.f32 %v1186, %v1278
  %v1293 = vadd.f32 %v1187, %v1283
  %v1294 = vadd.f32 %v1188, %v1288
  %s1295 = scalar_lea.vmem %s4, 224
  %v1296 = vld [vmem:[%s1295] sm:$0xff]
  %v1297 = vld [vmem:[%s1295 + $0x8] sm:$0xff]
  %v1298 = vld [vmem:[%s1295 + $0x10] sm:$0xff]
  %v1299 = vld [vmem:[%s1295 + $0x18] sm:$0xff]
  %v1301 = vsel %vm570, %v523, 0
  %v1304 = vsel %vm570, %v528, 0
  %v1307 = vsel %vm570, %v533, 0
  %v1310 = vsel %vm570, %v538, 0
  %1312 = vmatprep.subr.mxu0 0.0
  %1313 = vmatpush1.msra.mxu0 %v1296
  %1314 = vmatprep.subr.mxu0 0.0
  %1315 = vmatpush1.msra.mxu0 %v1297
  %1316 = vmatprep.subr.mxu0 0.0
  %1317 = vmatpush1.msra.mxu0 %v1298
  %1318 = vmatprep.subr.mxu0 0.0
  %1319 = vmatpush1.msra.mxu0 %v1299
  %1320 = vmatprep.subr.mxu0 0.0
  %1321 = vmatpush1.msra.mxu0 0.0
  %1322 = vmatprep.subr.mxu0 0.0
  %1323 = vmatpush1.msra.mxu0 0.0
  %1324 = vmatprep.subr.mxu0 0.0
  %1325 = vmatpush1.msra.mxu0 0.0
  %1326 = vmatprep.subr.mxu0 0.0
  %1327 = vmatpush1.msra.mxu0 0.0
  %1328 = vmatprep.subr.mxu0 0.0
  %1329 = vmatpush1.msra.mxu0 0.0
  %1330 = vmatprep.subr.mxu0 0.0
  %1331 = vmatpush1.msra.mxu0 0.0
  %1332 = vmatprep.subr.mxu0 0.0
  %1333 = vmatpush1.msra.mxu0 0.0
  %1334 = vmatprep.subr.mxu0 0.0
  %1335 = vmatpush1.msra.mxu0 0.0
  %1336 = vmatprep.subr.mxu0 0.0
  %1337 = vmatpush1.msra.mxu0 0.0
  %1338 = vmatprep.subr.mxu0 0.0
  %1339 = vmatpush1.msra.mxu0 0.0
  %1340 = vmatprep.subr.mxu0 0.0
  %1341 = vmatpush1.msra.mxu0 0.0
  %1342 = vmatprep.subr.mxu0 0.0
  %1343 = vmatpush1.msra.mxu0 0.0
  %1344 = vmatprep.subr.mxu0 0.0
  %1345 = vmatpush1.msra.mxu0 0.0
  %1346 = vmatprep.subr.mxu0 0.0
  %1347 = vmatpush1.msra.mxu0 0.0
  %1348 = vmatprep.subr.mxu0 0.0
  %1349 = vmatpush1.msra.mxu0 0.0
  %1350 = vmatprep.subr.mxu0 0.0
  %1351 = vmatpush1.msra.mxu0 0.0
  %1352 = vmatprep.subr.mxu0 0.0
  %1353 = vmatpush1.msra.mxu0 0.0
  %1354 = vmatprep.subr.mxu0 0.0
  %1355 = vmatpush1.msra.mxu0 0.0
  %1356 = vmatprep.subr.mxu0 0.0
  %1357 = vmatpush1.msra.mxu0 0.0
  %1358 = vmatprep.subr.mxu0 0.0
  %1359 = vmatpush1.msra.mxu0 0.0
  %1360 = vmatprep.subr.mxu0 0.0
  %1361 = vmatpush1.msra.mxu0 0.0
  %1362 = vmatprep.subr.mxu0 0.0
  %1363 = vmatpush1.msra.mxu0 0.0
  %1364 = vmatprep.subr.mxu0 0.0
  %1365 = vmatpush1.msra.mxu0 0.0
  %1366 = vmatprep.subr.mxu0 0.0
  %1367 = vmatpush1.msra.mxu0 0.0
  %1368 = vmatprep.subr.mxu0 0.0
  %1369 = vmatpush1.msra.mxu0 0.0
  %1370 = vmatprep.subr.mxu0 0.0
  %1371 = vmatpush1.msra.mxu0 0.0
  %1372 = vmatprep.subr.mxu0 0.0
  %1373 = vmatpush1.msra.mxu0 0.0
  %1374 = vmatprep.subr.mxu0 0.0
  %1375 = vmatpush1.msra.mxu0 0.0
  %1376 = vmatprep.mubr.f32.mxu0 0.0
  %1377 = vmatmul.mubr.f32.gmra.mrb[0].mxu0 %v1301
  %v1378 = vpop.f32.mrb[0].mxu0
  %v1379 = vadd.f32 0.0, %v1378
  %v1380 = vpop.f32.mrb[0].mxu0
  %1381 = vmatprep.mubr.f32.mxu0 0.0
  %1382 = vmatmul.mubr.f32.gmra.mrb[0].mxu0 %v1304
  %v1383 = vpop.f32.mrb[0].mxu0
  %v1384 = vadd.f32 0.0, %v1383
  %v1385 = vpop.f32.mrb[0].mxu0
  %1386 = vmatprep.mubr.f32.mxu0 0.0
  %1387 = vmatmul.mubr.f32.gmra.mrb[0].mxu0 %v1307
  %v1388 = vpop.f32.mrb[0].mxu0
  %v1389 = vadd.f32 0.0, %v1388
  %v1390 = vpop.f32.mrb[0].mxu0
  %1391 = vmatprep.mubr.f32.mxu0 0.0
  %1392 = vmatmul.mubr.f32.gmra.mrb[0].mxu0 %v1310
  %v1393 = vpop.f32.mrb[0].mxu0
  %v1394 = vadd.f32 0.0, %v1393
  %v1395 = vpop.f32.mrb[0].mxu0
  %1396 = vdwg.mxu0
  %v1397 = vadd.f32 %v1291, %v1379
  %v1398 = vadd.f32 %v1292, %v1384
  %v1399 = vadd.f32 %v1293, %v1389
  %v1400 = vadd.f32 %v1294, %v1394
  %s1401 = scalar_lea.vmem %s4, 256
  %v1402 = vld [vmem:[%s1401] sm:$0xff]
  %v1403 = vld [vmem:[%s1401 + $0x8] sm:$0xff]
  %v1404 = vld [vmem:[%s1401 + $0x10] sm:$0xff]
  %v1405 = vld [vmem:[%s1401 + $0x18] sm:$0xff]
  %v1407 = vsel %vm570, %v543, 0
  %v1410 = vsel %vm570, %v548, 0
  %v1413 = vsel %vm570, %v553, 0
  %v1416 = vsel %vm570, %v558, 0
  %1418 = vmatprep.subr.mxu0 0.0
  %1419 = vmatpush1.msra.mxu0 %v1402
  %1420 = vmatprep.subr.mxu0 0.0
  %1421 = vmatpush1.msra.mxu0 %v1403
  %1422 = vmatprep.subr.mxu0 0.0
  %1423 = vmatpush1.msra.mxu0 %v1404
  %1424 = vmatprep.subr.mxu0 0.0
  %1425 = vmatpush1.msra.mxu0 %v1405
  %1426 = vmatprep.subr.mxu0 0.0
  %1427 = vmatpush1.msra.mxu0 0.0
  %1428 = vmatprep.subr.mxu0 0.0
  %1429 = vmatpush1.msra.mxu0 0.0
  %1430 = vmatprep.subr.mxu0 0.0
  %1431 = vmatpush1.msra.mxu0 0.0
  %1432 = vmatprep.subr.mxu0 0.0
  %1433 = vmatpush1.msra.mxu0 0.0
  %1434 = vmatprep.subr.mxu0 0.0
  %1435 = vmatpush1.msra.mxu0 0.0
  %1436 = vmatprep.subr.mxu0 0.0
  %1437 = vmatpush1.msra.mxu0 0.0
  %1438 = vmatprep.subr.mxu0 0.0
  %1439 = vmatpush1.msra.mxu0 0.0
  %1440 = vmatprep.subr.mxu0 0.0
  %1441 = vmatpush1.msra.mxu0 0.0
  %1442 = vmatprep.subr.mxu0 0.0
  %1443 = vmatpush1.msra.mxu0 0.0
  %1444 = vmatprep.subr.mxu0 0.0
  %1445 = vmatpush1.msra.mxu0 0.0
  %1446 = vmatprep.subr.mxu0 0.0
  %1447 = vmatpush1.msra.mxu0 0.0
  %1448 = vmatprep.subr.mxu0 0.0
  %1449 = vmatpush1.msra.mxu0 0.0
  %1450 = vmatprep.subr.mxu0 0.0
  %1451 = vmatpush1.msra.mxu0 0.0
  %1452 = vmatprep.subr.mxu0 0.0
  %1453 = vmatpush1.msra.mxu0 0.0
  %1454 = vmatprep.subr.mxu0 0.0
  %1455 = vmatpush1.msra.mxu0 0.0
  %1456 = vmatprep.subr.mxu0 0.0
  %1457 = vmatpush1.msra.mxu0 0.0
  %1458 = vmatprep.subr.mxu0 0.0
  %1459 = vmatpush1.msra.mxu0 0.0
  %1460 = vmatprep.subr.mxu0 0.0
  %1461 = vmatpush1.msra.mxu0 0.0
  %1462 = vmatprep.subr.mxu0 0.0
  %1463 = vmatpush1.msra.mxu0 0.0
  %1464 = vmatprep.subr.mxu0 0.0
  %1465 = vmatpush1.msra.mxu0 0.0
  %1466 = vmatprep.subr.mxu0 0.0
  %1467 = vmatpush1.msra.mxu0 0.0
  %1468 = vmatprep.subr.mxu0 0.0
  %1469 = vmatpush1.msra.mxu0 0.0
  %1470 = vmatprep.subr.mxu0 0.0
  %1471 = vmatpush1.msra.mxu0 0.0
  %1472 = vmatprep.subr.mxu0 0.0
  %1473 = vmatpush1.msra.mxu0 0.0
  %1474 = vmatprep.subr.mxu0 0.0
  %1475 = vmatpush1.msra.mxu0 0.0
  %1476 = vmatprep.subr.mxu0 0.0
  %1477 = vmatpush1.msra.mxu0 0.0
  %1478 = vmatprep.subr.mxu0 0.0
  %1479 = vmatpush1.msra.mxu0 0.0
  %1480 = vmatprep.subr.mxu0 0.0
  %1481 = vmatpush1.msra.mxu0 0.0
  %1482 = vmatprep.mubr.f32.mxu0 0.0
  %1483 = vmatmul.mubr.f32.gmra.mrb[0].mxu0 %v1407
  %v1484 = vpop.f32.mrb[0].mxu0
  %v1485 = vadd.f32 0.0, %v1484
  %v1486 = vpop.f32.mrb[0].mxu0
  %1487 = vmatprep.mubr.f32.mxu0 0.0
  %1488 = vmatmul.mubr.f32.gmra.mrb[0].mxu0 %v1410
  %v1489 = vpop.f32.mrb[0].mxu0
  %v1490 = vadd.f32 0.0, %v1489
  %v1491 = vpop.f32.mrb[0].mxu0
  %1492 = vmatprep.mubr.f32.mxu0 0.0
  %1493 = vmatmul.mubr.f32.gmra.mrb[0].mxu0 %v1413
  %v1494 = vpop.f32.mrb[0].mxu0
  %v1495 = vadd.f32 0.0, %v1494
  %v1496 = vpop.f32.mrb[0].mxu0
  %1497 = vmatprep.mubr.f32.mxu0 0.0
  %1498 = vmatmul.mubr.f32.gmra.mrb[0].mxu0 %v1416
  %v1499 = vpop.f32.mrb[0].mxu0
  %v1500 = vadd.f32 0.0, %v1499
  %v1501 = vpop.f32.mrb[0].mxu0
  %1502 = vdwg.mxu0
  %v1503 = vadd.f32 %v1397, %v1485
  %v1504 = vadd.f32 %v1398, %v1490
  %v1505 = vadd.f32 %v1399, %v1495
  %v1506 = vadd.f32 %v1400, %v1500
  %v1507 = vld [vmem:[%s5] sm:$0x1]
  %v1509 = vlaneseq
  %v1510 = vshrl.u32 %v1509, 7
  %v1511 = vsub.s32 0, %v1510
  %v1512 = vrot.slane %v1507, %v1511
  %v1514 = vadd.f32 %v1503, %v1512
  %v1515 = vadd.f32 %v1504, %v1512
  %v1516 = vadd.f32 %v1505, %v1512
  %v1517 = vadd.f32 %v1506, %v1512
  %v1518 = vmax.f32 %v1514, 0.0
  %v1519 = vmax.f32 %v1515, 0.0
  %v1520 = vmax.f32 %v1516, 0.0
  %v1521 = vmax.f32 %v1517, 0.0
  %v1522 = vld [vmem:[%s6] sm:$0xff]
  %v1523 = vld [vmem:[%s6 + $0x8] sm:$0xff]
  %v1524 = vld [vmem:[%s6 + $0x10] sm:$0xff]
  %v1525 = vld [vmem:[%s6 + $0x18] sm:$0xff]
  %v1526 = vld [vmem:[%s6 + $0x20] sm:$0xff]
  %v1527 = vld [vmem:[%s6 + $0x28] sm:$0xff]
  %v1528 = vld [vmem:[%s6 + $0x30] sm:$0xff]
  %v1529 = vld [vmem:[%s6 + $0x38] sm:$0xff]
  %v1530 = vld [vmem:[%s6 + $0x40] sm:$0xff]
  %v1531 = vld [vmem:[%s6 + $0x48] sm:$0xff]
  %v1532 = vld [vmem:[%s6 + $0x50] sm:$0xff]
  %v1533 = vld [vmem:[%s6 + $0x58] sm:$0xff]
  %v1534 = vld [vmem:[%s6 + $0x60] sm:$0xff]
  %v1535 = vld [vmem:[%s6 + $0x68] sm:$0xff]
  %v1536 = vld [vmem:[%s6 + $0x70] sm:$0xff]
  %v1537 = vld [vmem:[%s6 + $0x78] sm:$0xff]
  %v1538 = vld [vmem:[%s6 + $0x80] sm:$0xff]
  %v1539 = vld [vmem:[%s6 + $0x88] sm:$0xff]
  %v1541 = vsel %vm570, %v1522, 0
  %v1544 = vsel %vm570, %v1523, 0
  %v1547 = vsel %vm570, %v1524, 0
  %v1550 = vsel %vm570, %v1525, 0
  %v1553 = vsel %vm570, %v1526, 0
  %v1556 = vsel %vm570, %v1527, 0
  %v1559 = vsel %vm570, %v1528, 0
  %v1562 = vsel %vm570, %v1529, 0
  %v1565 = vsel %vm570, %v1530, 0
  %v1568 = vsel %vm570, %v1531, 0
  %v1571 = vsel %vm570, %v1532, 0
  %v1574 = vsel %vm570, %v1533, 0
  %v1577 = vsel %vm570, %v1534, 0
  %v1580 = vsel %vm570, %v1535, 0
  %v1583 = vsel %vm570, %v1536, 0
  %v1586 = vsel %vm570, %v1537, 0
  %v1589 = vsel %vm570, %v1538, 0
  %v1592 = vsel %vm570, %v1539, 0
  %1594 = vmatprep.subr.mxu0 0.0
  %1595 = vmatpush1.msra.mxu0 %v1518
  %1596 = vmatprep.subr.mxu0 0.0
  %1597 = vmatpush1.msra.mxu0 %v1519
  %1598 = vmatprep.subr.mxu0 0.0
  %1599 = vmatpush1.msra.mxu0 %v1520
  %1600 = vmatprep.subr.mxu0 0.0
  %1601 = vmatpush1.msra.mxu0 %v1521
  %1602 = vmatprep.subr.mxu0 0.0
  %1603 = vmatpush1.msra.mxu0 0.0
  %1604 = vmatprep.subr.mxu0 0.0
  %1605 = vmatpush1.msra.mxu0 0.0
  %1606 = vmatprep.subr.mxu0 0.0
  %1607 = vmatpush1.msra.mxu0 0.0
  %1608 = vmatprep.subr.mxu0 0.0
  %1609 = vmatpush1.msra.mxu0 0.0
  %1610 = vmatprep.subr.mxu0 0.0
  %1611 = vmatpush1.msra.mxu0 0.0
  %1612 = vmatprep.subr.mxu0 0.0
  %1613 = vmatpush1.msra.mxu0 0.0
  %1614 = vmatprep.subr.mxu0 0.0
  %1615 = vmatpush1.msra.mxu0 0.0
  %1616 = vmatprep.subr.mxu0 0.0
  %1617 = vmatpush1.msra.mxu0 0.0
  %1618 = vmatprep.subr.mxu0 0.0
  %1619 = vmatpush1.msra.mxu0 0.0
  %1620 = vmatprep.subr.mxu0 0.0
  %1621 = vmatpush1.msra.mxu0 0.0
  %1622 = vmatprep.subr.mxu0 0.0
  %1623 = vmatpush1.msra.mxu0 0.0
  %1624 = vmatprep.subr.mxu0 0.0
  %1625 = vmatpush1.msra.mxu0 0.0
  %1626 = vmatprep.subr.mxu0 0.0
  %1627 = vmatpush1.msra.mxu0 0.0
  %1628 = vmatprep.subr.mxu0 0.0
  %1629 = vmatpush1.msra.mxu0 0.0
  %1630 = vmatprep.subr.mxu0 0.0
  %1631 = vmatpush1.msra.mxu0 0.0
  %1632 = vmatprep.subr.mxu0 0.0
  %1633 = vmatpush1.msra.mxu0 0.0
  %1634 = vmatprep.subr.mxu0 0.0
  %1635 = vmatpush1.msra.mxu0 0.0
  %1636 = vmatprep.subr.mxu0 0.0
  %1637 = vmatpush1.msra.mxu0 0.0
  %1638 = vmatprep.subr.mxu0 0.0
  %1639 = vmatpush1.msra.mxu0 0.0
  %1640 = vmatprep.subr.mxu0 0.0
  %1641 = vmatpush1.msra.mxu0 0.0
  %1642 = vmatprep.subr.mxu0 0.0
  %1643 = vmatpush1.msra.mxu0 0.0
  %1644 = vmatprep.subr.mxu0 0.0
  %1645 = vmatpush1.msra.mxu0 0.0
  %1646 = vmatprep.subr.mxu0 0.0
  %1647 = vmatpush1.msra.mxu0 0.0
  %1648 = vmatprep.subr.mxu0 0.0
  %1649 = vmatpush1.msra.mxu0 0.0
  %1650 = vmatprep.subr.mxu0 0.0
  %1651 = vmatpush1.msra.mxu0 0.0
  %1652 = vmatprep.subr.mxu0 0.0
  %1653 = vmatpush1.msra.mxu0 0.0
  %1654 = vmatprep.subr.mxu0 0.0
  %1655 = vmatpush1.msra.mxu0 0.0
  %1656 = vmatprep.subr.mxu0 0.0
  %1657 = vmatpush1.msra.mxu0 0.0
  %1658 = vmatprep.mubr.f32.mxu0 0.0
  %1659 = vmatmul.mubr.f32.gmra.mrb[0].mxu0 %v1541
  %v1660 = vpop.f32.mrb[0].mxu0
  %v1661 = vadd.f32 0.0, %v1660
  %v1662 = vpop.f32.mrb[0].mxu0
  %1663 = vmatprep.mubr.f32.mxu0 0.0
  %1664 = vmatmul.mubr.f32.gmra.mrb[0].mxu0 %v1544
  %v1665 = vpop.f32.mrb[0].mxu0
  %v1666 = vadd.f32 0.0, %v1665
  %v1667 = vpop.f32.mrb[0].mxu0
  %1668 = vmatprep.mubr.f32.mxu0 0.0
  %1669 = vmatmul.mubr.f32.gmra.mrb[0].mxu0 %v1547
  %v1670 = vpop.f32.mrb[0].mxu0
  %v1671 = vadd.f32 0.0, %v1670
  %v1672 = vpop.f32.mrb[0].mxu0
  %1673 = vmatprep.mubr.f32.mxu0 0.0
  %1674 = vmatmul.mubr.f32.gmra.mrb[0].mxu0 %v1550
  %v1675 = vpop.f32.mrb[0].mxu0
  %v1676 = vadd.f32 0.0, %v1675
  %v1677 = vpop.f32.mrb[0].mxu0
  %1678 = vmatprep.mubr.f32.mxu0 0.0
  %1679 = vmatmul.mubr.f32.gmra.mrb[0].mxu0 %v1553
  %v1680 = vpop.f32.mrb[0].mxu0
  %v1681 = vadd.f32 0.0, %v1680
  %v1682 = vpop.f32.mrb[0].mxu0
  %1683 = vmatprep.mubr.f32.mxu0 0.0
  %1684 = vmatmul.mubr.f32.gmra.mrb[0].mxu0 %v1556
  %v1685 = vpop.f32.mrb[0].mxu0
  %v1686 = vadd.f32 0.0, %v1685
  %v1687 = vpop.f32.mrb[0].mxu0
  %1688 = vmatprep.mubr.f32.mxu0 0.0
  %1689 = vmatmul.mubr.f32.gmra.mrb[0].mxu0 %v1559
  %v1690 = vpop.f32.mrb[0].mxu0
  %v1691 = vadd.f32 0.0, %v1690
  %v1692 = vpop.f32.mrb[0].mxu0
  %1693 = vmatprep.mubr.f32.mxu0 0.0
  %1694 = vmatmul.mubr.f32.gmra.mrb[0].mxu0 %v1562
  %v1695 = vpop.f32.mrb[0].mxu0
  %v1696 = vadd.f32 0.0, %v1695
  %v1697 = vpop.f32.mrb[0].mxu0
  %1698 = vmatprep.mubr.f32.mxu0 0.0
  %1699 = vmatmul.mubr.f32.gmra.mrb[0].mxu0 %v1565
  %v1700 = vpop.f32.mrb[0].mxu0
  %v1701 = vadd.f32 0.0, %v1700
  %v1702 = vpop.f32.mrb[0].mxu0
  %1703 = vmatprep.mubr.f32.mxu0 0.0
  %1704 = vmatmul.mubr.f32.gmra.mrb[0].mxu0 %v1568
  %v1705 = vpop.f32.mrb[0].mxu0
  %v1706 = vadd.f32 0.0, %v1705
  %v1707 = vpop.f32.mrb[0].mxu0
  %1708 = vmatprep.mubr.f32.mxu0 0.0
  %1709 = vmatmul.mubr.f32.gmra.mrb[0].mxu0 %v1571
  %v1710 = vpop.f32.mrb[0].mxu0
  %v1711 = vadd.f32 0.0, %v1710
  %v1712 = vpop.f32.mrb[0].mxu0
  %1713 = vmatprep.mubr.f32.mxu0 0.0
  %1714 = vmatmul.mubr.f32.gmra.mrb[0].mxu0 %v1574
  %v1715 = vpop.f32.mrb[0].mxu0
  %v1716 = vadd.f32 0.0, %v1715
  %v1717 = vpop.f32.mrb[0].mxu0
  %1718 = vmatprep.mubr.f32.mxu0 0.0
  %1719 = vmatmul.mubr.f32.gmra.mrb[0].mxu0 %v1577
  %v1720 = vpop.f32.mrb[0].mxu0
  %v1721 = vadd.f32 0.0, %v1720
  %v1722 = vpop.f32.mrb[0].mxu0
  %1723 = vmatprep.mubr.f32.mxu0 0.0
  %1724 = vmatmul.mubr.f32.gmra.mrb[0].mxu0 %v1580
  %v1725 = vpop.f32.mrb[0].mxu0
  %v1726 = vadd.f32 0.0, %v1725
  %v1727 = vpop.f32.mrb[0].mxu0
  %1728 = vmatprep.mubr.f32.mxu0 0.0
  %1729 = vmatmul.mubr.f32.gmra.mrb[0].mxu0 %v1583
  %v1730 = vpop.f32.mrb[0].mxu0
  %v1731 = vadd.f32 0.0, %v1730
  %v1732 = vpop.f32.mrb[0].mxu0
  %1733 = vmatprep.mubr.f32.mxu0 0.0
  %1734 = vmatmul.mubr.f32.gmra.mrb[0].mxu0 %v1586
  %v1735 = vpop.f32.mrb[0].mxu0
  %v1736 = vadd.f32 0.0, %v1735
  %v1737 = vpop.f32.mrb[0].mxu0
  %1738 = vmatprep.mubr.f32.mxu0 0.0
  %1739 = vmatmul.mubr.f32.gmra.mrb[0].mxu0 %v1589
  %v1740 = vpop.f32.mrb[0].mxu0
  %v1741 = vadd.f32 0.0, %v1740
  %v1742 = vpop.f32.mrb[0].mxu0
  %1743 = vmatprep.mubr.f32.mxu0 0.0
  %1744 = vmatmul.mubr.f32.gmra.mrb[0].mxu0 %v1592
  %v1745 = vpop.f32.mrb[0].mxu0
  %v1746 = vadd.f32 0.0, %v1745
  %v1747 = vpop.f32.mrb[0].mxu0
  %1748 = vdwg.mxu0
  %v1749 = vld [vmem:[%s7] sm:$0xff]
  %v1750 = vld [vmem:[%s7 + $0x8] sm:$0xff]
  %v1751 = vld [vmem:[%s7 + $0x10] sm:$0xff]
  %v1752 = vld [vmem:[%s7 + $0x18] sm:$0xff]
  %s1753 = scalar_lea.vmem %s7, 32
  %v1754 = vld [vmem:[%s1753] sm:$0xff]
  %v1755 = vld [vmem:[%s1753 + $0x8] sm:$0xff]
  %v1756 = vld [vmem:[%s1753 + $0x10] sm:$0xff]
  %v1757 = vld [vmem:[%s1753 + $0x18] sm:$0xff]
  %v1759 = vsel %vm570, %v1671, 0
  %v1762 = vsel %vm570, %v1676, 0
  %1764 = vmatprep.subr.mxu0 0.0
  %1765 = vmatpush1.msra.mxu0 %v1754
  %1766 = vmatprep.subr.mxu0 0.0
  %1767 = vmatpush1.msra.mxu0 %v1755
  %1768 = vmatprep.subr.mxu0 0.0
  %1769 = vmatpush1.msra.mxu0 %v1756
  %1770 = vmatprep.subr.mxu0 0.0
  %1771 = vmatpush1.msra.mxu0 %v1757
  %1772 = vmatprep.subr.mxu0 0.0
  %1773 = vmatpush1.msra.mxu0 0.0
  %1774 = vmatprep.subr.mxu0 0.0
  %1775 = vmatpush1.msra.mxu0 0.0
  %1776 = vmatprep.subr.mxu0 0.0
  %1777 = vmatpush1.msra.mxu0 0.0
  %1778 = vmatprep.subr.mxu0 0.0
  %1779 = vmatpush1.msra.mxu0 0.0
  %1780 = vmatprep.subr.mxu0 0.0
  %1781 = vmatpush1.msra.mxu0 0.0
  %1782 = vmatprep.subr.mxu0 0.0
  %1783 = vmatpush1.msra.mxu0 0.0
  %1784 = vmatprep.subr.mxu0 0.0
  %1785 = vmatpush1.msra.mxu0 0.0
  %1786 = vmatprep.subr.mxu0 0.0
  %1787 = vmatpush1.msra.mxu0 0.0
  %1788 = vmatprep.subr.mxu0 0.0
  %1789 = vmatpush1.msra.mxu0 0.0
  %1790 = vmatprep.subr.mxu0 0.0
  %1791 = vmatpush1.msra.mxu0 0.0
  %1792 = vmatprep.subr.mxu0 0.0
  %1793 = vmatpush1.msra.mxu0 0.0
  %1794 = vmatprep.subr.mxu0 0.0
  %1795 = vmatpush1.msra.mxu0 0.0
  %1796 = vmatprep.subr.mxu0 0.0
  %1797 = vmatpush1.msra.mxu0 0.0
  %1798 = vmatprep.subr.mxu0 0.0
  %1799 = vmatpush1.msra.mxu0 0.0
  %1800 = vmatprep.subr.mxu0 0.0
  %1801 = vmatpush1.msra.mxu0 0.0
  %1802 = vmatprep.subr.mxu0 0.0
  %1803 = vmatpush1.msra.mxu0 0.0
  %1804 = vmatprep.subr.mxu0 0.0
  %1805 = vmatpush1.msra.mxu0 0.0
  %1806 = vmatprep.subr.mxu0 0.0
  %1807 = vmatpush1.msra.mxu0 0.0
  %1808 = vmatprep.subr.mxu0 0.0
  %1809 = vmatpush1.msra.mxu0 0.0
  %1810 = vmatprep.subr.mxu0 0.0
  %1811 = vmatpush1.msra.mxu0 0.0
  %1812 = vmatprep.subr.mxu0 0.0
  %1813 = vmatpush1.msra.mxu0 0.0
  %1814 = vmatprep.subr.mxu0 0.0
  %1815 = vmatpush1.msra.mxu0 0.0
  %1816 = vmatprep.subr.mxu0 0.0
  %1817 = vmatpush1.msra.mxu0 0.0
  %1818 = vmatprep.subr.mxu0 0.0
  %1819 = vmatpush1.msra.mxu0 0.0
  %1820 = vmatprep.subr.mxu0 0.0
  %1821 = vmatpush1.msra.mxu0 0.0
  %1822 = vmatprep.subr.mxu0 0.0
  %1823 = vmatpush1.msra.mxu0 0.0
  %1824 = vmatprep.subr.mxu0 0.0
  %1825 = vmatpush1.msra.mxu0 0.0
  %1826 = vmatprep.subr.mxu0 0.0
  %1827 = vmatpush1.msra.mxu0 0.0
  %1828 = vmatprep.mubr.f32.mxu0 0.0
  %1829 = vmatmul.mubr.f32.gmra.mrb[0].mxu0 %v1759
  %v1830 = vpop.f32.mrb[0].mxu0
  %v1831 = vadd.f32 0.0, %v1830
  %v1832 = vpop.f32.mrb[0].mxu0
  %1833 = vmatprep.mubr.f32.mxu0 0.0
  %1834 = vmatmul.mubr.f32.gmra.mrb[0].mxu0 %v1762
  %v1835 = vpop.f32.mrb[0].mxu0
  %v1836 = vadd.f32 0.0, %v1835
  %v1837 = vpop.f32.mrb[0].mxu0
  %1838 = vdwg.mxu0
  %v1840 = vsel %vm570, %v1661, 0
  %v1843 = vsel %vm570, %v1666, 0
  %1845 = vmatprep.subr.mxu0 0.0
  %1846 = vmatpush1.msra.mxu0 %v1749
  %1847 = vmatprep.subr.mxu0 0.0
  %1848 = vmatpush1.msra.mxu0 %v1750
  %1849 = vmatprep.subr.mxu0 0.0
  %1850 = vmatpush1.msra.mxu0 %v1751
  %1851 = vmatprep.subr.mxu0 0.0
  %1852 = vmatpush1.msra.mxu0 %v1752
  %1853 = vmatprep.subr.mxu0 0.0
  %1854 = vmatpush1.msra.mxu0 0.0
  %1855 = vmatprep.subr.mxu0 0.0
  %1856 = vmatpush1.msra.mxu0 0.0
  %1857 = vmatprep.subr.mxu0 0.0
  %1858 = vmatpush1.msra.mxu0 0.0
  %1859 = vmatprep.subr.mxu0 0.0
  %1860 = vmatpush1.msra.mxu0 0.0
  %1861 = vmatprep.subr.mxu0 0.0
  %1862 = vmatpush1.msra.mxu0 0.0
  %1863 = vmatprep.subr.mxu0 0.0
  %1864 = vmatpush1.msra.mxu0 0.0
  %1865 = vmatprep.subr.mxu0 0.0
  %1866 = vmatpush1.msra.mxu0 0.0
  %1867 = vmatprep.subr.mxu0 0.0
  %1868 = vmatpush1.msra.mxu0 0.0
  %1869 = vmatprep.subr.mxu0 0.0
  %1870 = vmatpush1.msra.mxu0 0.0
  %1871 = vmatprep.subr.mxu0 0.0
  %1872 = vmatpush1.msra.mxu0 0.0
  %1873 = vmatprep.subr.mxu0 0.0
  %1874 = vmatpush1.msra.mxu0 0.0
  %1875 = vmatprep.subr.mxu0 0.0
  %1876 = vmatpush1.msra.mxu0 0.0
  %1877 = vmatprep.subr.mxu0 0.0
  %1878 = vmatpush1.msra.mxu0 0.0
  %1879 = vmatprep.subr.mxu0 0.0
  %1880 = vmatpush1.msra.mxu0 0.0
  %1881 = vmatprep.subr.mxu0 0.0
  %1882 = vmatpush1.msra.mxu0 0.0
  %1883 = vmatprep.subr.mxu0 0.0
  %1884 = vmatpush1.msra.mxu0 0.0
  %1885 = vmatprep.subr.mxu0 0.0
  %1886 = vmatpush1.msra.mxu0 0.0
  %1887 = vmatprep.subr.mxu0 0.0
  %1888 = vmatpush1.msra.mxu0 0.0
  %1889 = vmatprep.subr.mxu0 0.0
  %1890 = vmatpush1.msra.mxu0 0.0
  %1891 = vmatprep.subr.mxu0 0.0
  %1892 = vmatpush1.msra.mxu0 0.0
  %1893 = vmatprep.subr.mxu0 0.0
  %1894 = vmatpush1.msra.mxu0 0.0
  %1895 = vmatprep.subr.mxu0 0.0
  %1896 = vmatpush1.msra.mxu0 0.0
  %1897 = vmatprep.subr.mxu0 0.0
  %1898 = vmatpush1.msra.mxu0 0.0
  %1899 = vmatprep.subr.mxu0 0.0
  %1900 = vmatpush1.msra.mxu0 0.0
  %1901 = vmatprep.subr.mxu0 0.0
  %1902 = vmatpush1.msra.mxu0 0.0
  %1903 = vmatprep.subr.mxu0 0.0
  %1904 = vmatpush1.msra.mxu0 0.0
  %1905 = vmatprep.subr.mxu0 0.0
  %1906 = vmatpush1.msra.mxu0 0.0
  %1907 = vmatprep.subr.mxu0 0.0
  %1908 = vmatpush1.msra.mxu0 0.0
  %1909 = vmatprep.mubr.f32.mxu0 0.0
  %1910 = vmatmul.mubr.f32.gmra.mrb[0].mxu0 %v1840
  %v1911 = vpop.f32.mrb[0].mxu0
  %v1912 = vadd.f32 %v1831, %v1911
  %v1913 = vpop.f32.mrb[0].mxu0
  %1914 = vmatprep.mubr.f32.mxu0 0.0
  %1915 = vmatmul.mubr.f32.gmra.mrb[0].mxu0 %v1843
  %v1916 = vpop.f32.mrb[0].mxu0
  %v1917 = vadd.f32 %v1836, %v1916
  %v1918 = vpop.f32.mrb[0].mxu0
  %1919 = vdwg.mxu0
  %s1920 = scalar_lea.vmem %s7, 64
  %v1921 = vld [vmem:[%s1920] sm:$0xff]
  %v1922 = vld [vmem:[%s1920 + $0x8] sm:$0xff]
  %v1923 = vld [vmem:[%s1920 + $0x10] sm:$0xff]
  %v1924 = vld [vmem:[%s1920 + $0x18] sm:$0xff]
  %v1926 = vsel %vm570, %v1681, 0
  %v1929 = vsel %vm570, %v1686, 0
  %1931 = vmatprep.subr.mxu0 0.0
  %1932 = vmatpush1.msra.mxu0 %v1921
  %1933 = vmatprep.subr.mxu0 0.0
  %1934 = vmatpush1.msra.mxu0 %v1922
  %1935 = vmatprep.subr.mxu0 0.0
  %1936 = vmatpush1.msra.mxu0 %v1923
  %1937 = vmatprep.subr.mxu0 0.0
  %1938 = vmatpush1.msra.mxu0 %v1924
  %1939 = vmatprep.subr.mxu0 0.0
  %1940 = vmatpush1.msra.mxu0 0.0
  %1941 = vmatprep.subr.mxu0 0.0
  %1942 = vmatpush1.msra.mxu0 0.0
  %1943 = vmatprep.subr.mxu0 0.0
  %1944 = vmatpush1.msra.mxu0 0.0
  %1945 = vmatprep.subr.mxu0 0.0
  %1946 = vmatpush1.msra.mxu0 0.0
  %1947 = vmatprep.subr.mxu0 0.0
  %1948 = vmatpush1.msra.mxu0 0.0
  %1949 = vmatprep.subr.mxu0 0.0
  %1950 = vmatpush1.msra.mxu0 0.0
  %1951 = vmatprep.subr.mxu0 0.0
  %1952 = vmatpush1.msra.mxu0 0.0
  %1953 = vmatprep.subr.mxu0 0.0
  %1954 = vmatpush1.msra.mxu0 0.0
  %1955 = vmatprep.subr.mxu0 0.0
  %1956 = vmatpush1.msra.mxu0 0.0
  %1957 = vmatprep.subr.mxu0 0.0
  %1958 = vmatpush1.msra.mxu0 0.0
  %1959 = vmatprep.subr.mxu0 0.0
  %1960 = vmatpush1.msra.mxu0 0.0
  %1961 = vmatprep.subr.mxu0 0.0
  %1962 = vmatpush1.msra.mxu0 0.0
  %1963 = vmatprep.subr.mxu0 0.0
  %1964 = vmatpush1.msra.mxu0 0.0
  %1965 = vmatprep.subr.mxu0 0.0
  %1966 = vmatpush1.msra.mxu0 0.0
  %1967 = vmatprep.subr.mxu0 0.0
  %1968 = vmatpush1.msra.mxu0 0.0
  %1969 = vmatprep.subr.mxu0 0.0
  %1970 = vmatpush1.msra.mxu0 0.0
  %1971 = vmatprep.subr.mxu0 0.0
  %1972 = vmatpush1.msra.mxu0 0.0
  %1973 = vmatprep.subr.mxu0 0.0
  %1974 = vmatpush1.msra.mxu0 0.0
  %1975 = vmatprep.subr.mxu0 0.0
  %1976 = vmatpush1.msra.mxu0 0.0
  %1977 = vmatprep.subr.mxu0 0.0
  %1978 = vmatpush1.msra.mxu0 0.0
  %1979 = vmatprep.subr.mxu0 0.0
  %1980 = vmatpush1.msra.mxu0 0.0
  %1981 = vmatprep.subr.mxu0 0.0
  %1982 = vmatpush1.msra.mxu0 0.0
  %1983 = vmatprep.subr.mxu0 0.0
  %1984 = vmatpush1.msra.mxu0 0.0
  %1985 = vmatprep.subr.mxu0 0.0
  %1986 = vmatpush1.msra.mxu0 0.0
  %1987 = vmatprep.subr.mxu0 0.0
  %1988 = vmatpush1.msra.mxu0 0.0
  %1989 = vmatprep.subr.mxu0 0.0
  %1990 = vmatpush1.msra.mxu0 0.0
  %1991 = vmatprep.subr.mxu0 0.0
  %1992 = vmatpush1.msra.mxu0 0.0
  %1993 = vmatprep.subr.mxu0 0.0
  %1994 = vmatpush1.msra.mxu0 0.0
  %1995 = vmatprep.mubr.f32.mxu0 0.0
  %1996 = vmatmul.mubr.f32.gmra.mrb[0].mxu0 %v1926
  %v1997 = vpop.f32.mrb[0].mxu0
  %v1998 = vadd.f32 0.0, %v1997
  %v1999 = vpop.f32.mrb[0].mxu0
  %2000 = vmatprep.mubr.f32.mxu0 0.0
  %2001 = vmatmul.mubr.f32.gmra.mrb[0].mxu0 %v1929
  %v2002 = vpop.f32.mrb[0].mxu0
  %v2003 = vadd.f32 0.0, %v2002
  %v2004 = vpop.f32.mrb[0].mxu0
  %2005 = vdwg.mxu0
  %v2006 = vadd.f32 %v1912, %v1998
  %v2007 = vadd.f32 %v1917, %v2003
  %s2008 = scalar_lea.vmem %s7, 96
  %v2009 = vld [vmem:[%s2008] sm:$0xff]
  %v2010 = vld [vmem:[%s2008 + $0x8] sm:$0xff]
  %v2011 = vld [vmem:[%s2008 + $0x10] sm:$0xff]
  %v2012 = vld [vmem:[%s2008 + $0x18] sm:$0xff]
  %v2014 = vsel %vm570, %v1691, 0
  %v2017 = vsel %vm570, %v1696, 0
  %2019 = vmatprep.subr.mxu0 0.0
  %2020 = vmatpush1.msra.mxu0 %v2009
  %2021 = vmatprep.subr.mxu0 0.0
  %2022 = vmatpush1.msra.mxu0 %v2010
  %2023 = vmatprep.subr.mxu0 0.0
  %2024 = vmatpush1.msra.mxu0 %v2011
  %2025 = vmatprep.subr.mxu0 0.0
  %2026 = vmatpush1.msra.mxu0 %v2012
  %2027 = vmatprep.subr.mxu0 0.0
  %2028 = vmatpush1.msra.mxu0 0.0
  %2029 = vmatprep.subr.mxu0 0.0
  %2030 = vmatpush1.msra.mxu0 0.0
  %2031 = vmatprep.subr.mxu0 0.0
  %2032 = vmatpush1.msra.mxu0 0.0
  %2033 = vmatprep.subr.mxu0 0.0
  %2034 = vmatpush1.msra.mxu0 0.0
  %2035 = vmatprep.subr.mxu0 0.0
  %2036 = vmatpush1.msra.mxu0 0.0
  %2037 = vmatprep.subr.mxu0 0.0
  %2038 = vmatpush1.msra.mxu0 0.0
  %2039 = vmatprep.subr.mxu0 0.0
  %2040 = vmatpush1.msra.mxu0 0.0
  %2041 = vmatprep.subr.mxu0 0.0
  %2042 = vmatpush1.msra.mxu0 0.0
  %2043 = vmatprep.subr.mxu0 0.0
  %2044 = vmatpush1.msra.mxu0 0.0
  %2045 = vmatprep.subr.mxu0 0.0
  %2046 = vmatpush1.msra.mxu0 0.0
  %2047 = vmatprep.subr.mxu0 0.0
  %2048 = vmatpush1.msra.mxu0 0.0
  %2049 = vmatprep.subr.mxu0 0.0
  %2050 = vmatpush1.msra.mxu0 0.0
  %2051 = vmatprep.subr.mxu0 0.0
  %2052 = vmatpush1.msra.mxu0 0.0
  %2053 = vmatprep.subr.mxu0 0.0
  %2054 = vmatpush1.msra.mxu0 0.0
  %2055 = vmatprep.subr.mxu0 0.0
  %2056 = vmatpush1.msra.mxu0 0.0
  %2057 = vmatprep.subr.mxu0 0.0
  %2058 = vmatpush1.msra.mxu0 0.0
  %2059 = vmatprep.subr.mxu0 0.0
  %2060 = vmatpush1.msra.mxu0 0.0
  %2061 = vmatprep.subr.mxu0 0.0
  %2062 = vmatpush1.msra.mxu0 0.0
  %2063 = vmatprep.subr.mxu0 0.0
  %2064 = vmatpush1.msra.mxu0 0.0
  %2065 = vmatprep.subr.mxu0 0.0
  %2066 = vmatpush1.msra.mxu0 0.0
  %2067 = vmatprep.subr.mxu0 0.0
  %2068 = vmatpush1.msra.mxu0 0.0
  %2069 = vmatprep.subr.mxu0 0.0
  %2070 = vmatpush1.msra.mxu0 0.0
  %2071 = vmatprep.subr.mxu0 0.0
  %2072 = vmatpush1.msra.mxu0 0.0
  %2073 = vmatprep.subr.mxu0 0.0
  %2074 = vmatpush1.msra.mxu0 0.0
  %2075 = vmatprep.subr.mxu0 0.0
  %2076 = vmatpush1.msra.mxu0 0.0
  %2077 = vmatprep.subr.mxu0 0.0
  %2078 = vmatpush1.msra.mxu0 0.0
  %2079 = vmatprep.subr.mxu0 0.0
  %2080 = vmatpush1.msra.mxu0 0.0
  %2081 = vmatprep.subr.mxu0 0.0
  %2082 = vmatpush1.msra.mxu0 0.0
  %2083 = vmatprep.mubr.f32.mxu0 0.0
  %2084 = vmatmul.mubr.f32.gmra.mrb[0].mxu0 %v2014
  %v2085 = vpop.f32.mrb[0].mxu0
  %v2086 = vadd.f32 0.0, %v2085
  %v2087 = vpop.f32.mrb[0].mxu0
  %2088 = vmatprep.mubr.f32.mxu0 0.0
  %2089 = vmatmul.mubr.f32.gmra.mrb[0].mxu0 %v2017
  %v2090 = vpop.f32.mrb[0].mxu0
  %v2091 = vadd.f32 0.0, %v2090
  %v2092 = vpop.f32.mrb[0].mxu0
  %2093 = vdwg.mxu0
  %v2094 = vadd.f32 %v2006, %v2086
  %v2095 = vadd.f32 %v2007, %v2091
  %s2096 = scalar_lea.vmem %s7, 128
  %v2097 = vld [vmem:[%s2096] sm:$0xff]
  %v2098 = vld [vmem:[%s2096 + $0x8] sm:$0xff]
  %v2099 = vld [vmem:[%s2096 + $0x10] sm:$0xff]
  %v2100 = vld [vmem:[%s2096 + $0x18] sm:$0xff]
  %v2102 = vsel %vm570, %v1701, 0
  %v2105 = vsel %vm570, %v1706, 0
  %2107 = vmatprep.subr.mxu0 0.0
  %2108 = vmatpush1.msra.mxu0 %v2097
  %2109 = vmatprep.subr.mxu0 0.0
  %2110 = vmatpush1.msra.mxu0 %v2098
  %2111 = vmatprep.subr.mxu0 0.0
  %2112 = vmatpush1.msra.mxu0 %v2099
  %2113 = vmatprep.subr.mxu0 0.0
  %2114 = vmatpush1.msra.mxu0 %v2100
  %2115 = vmatprep.subr.mxu0 0.0
  %2116 = vmatpush1.msra.mxu0 0.0
  %2117 = vmatprep.subr.mxu0 0.0
  %2118 = vmatpush1.msra.mxu0 0.0
  %2119 = vmatprep.subr.mxu0 0.0
  %2120 = vmatpush1.msra.mxu0 0.0
  %2121 = vmatprep.subr.mxu0 0.0
  %2122 = vmatpush1.msra.mxu0 0.0
  %2123 = vmatprep.subr.mxu0 0.0
  %2124 = vmatpush1.msra.mxu0 0.0
  %2125 = vmatprep.subr.mxu0 0.0
  %2126 = vmatpush1.msra.mxu0 0.0
  %2127 = vmatprep.subr.mxu0 0.0
  %2128 = vmatpush1.msra.mxu0 0.0
  %2129 = vmatprep.subr.mxu0 0.0
  %2130 = vmatpush1.msra.mxu0 0.0
  %2131 = vmatprep.subr.mxu0 0.0
  %2132 = vmatpush1.msra.mxu0 0.0
  %2133 = vmatprep.subr.mxu0 0.0
  %2134 = vmatpush1.msra.mxu0 0.0
  %2135 = vmatprep.subr.mxu0 0.0
  %2136 = vmatpush1.msra.mxu0 0.0
  %2137 = vmatprep.subr.mxu0 0.0
  %2138 = vmatpush1.msra.mxu0 0.0
  %2139 = vmatprep.subr.mxu0 0.0
  %2140 = vmatpush1.msra.mxu0 0.0
  %2141 = vmatprep.subr.mxu0 0.0
  %2142 = vmatpush1.msra.mxu0 0.0
  %2143 = vmatprep.subr.mxu0 0.0
  %2144 = vmatpush1.msra.mxu0 0.0
  %2145 = vmatprep.subr.mxu0 0.0
  %2146 = vmatpush1.msra.mxu0 0.0
  %2147 = vmatprep.subr.mxu0 0.0
  %2148 = vmatpush1.msra.mxu0 0.0
  %2149 = vmatprep.subr.mxu0 0.0
  %2150 = vmatpush1.msra.mxu0 0.0
  %2151 = vmatprep.subr.mxu0 0.0
  %2152 = vmatpush1.msra.mxu0 0.0
  %2153 = vmatprep.subr.mxu0 0.0
  %2154 = vmatpush1.msra.mxu0 0.0
  %2155 = vmatprep.subr.mxu0 0.0
  %2156 = vmatpush1.msra.mxu0 0.0
  %2157 = vmatprep.subr.mxu0 0.0
  %2158 = vmatpush1.msra.mxu0 0.0
  %2159 = vmatprep.subr.mxu0 0.0
  %2160 = vmatpush1.msra.mxu0 0.0
  %2161 = vmatprep.subr.mxu0 0.0
  %2162 = vmatpush1.msra.mxu0 0.0
  %2163 = vmatprep.subr.mxu0 0.0
  %2164 = vmatpush1.msra.mxu0 0.0
  %2165 = vmatprep.subr.mxu0 0.0
  %2166 = vmatpush1.msra.mxu0 0.0
  %2167 = vmatprep.subr.mxu0 0.0
  %2168 = vmatpush1.msra.mxu0 0.0
  %2169 = vmatprep.subr.mxu0 0.0
  %2170 = vmatpush1.msra.mxu0 0.0
  %2171 = vmatprep.mubr.f32.mxu0 0.0
  %2172 = vmatmul.mubr.f32.gmra.mrb[0].mxu0 %v2102
  %v2173 = vpop.f32.mrb[0].mxu0
  %v2174 = vadd.f32 0.0, %v2173
  %v2175 = vpop.f32.mrb[0].mxu0
  %2176 = vmatprep.mubr.f32.mxu0 0.0
  %2177 = vmatmul.mubr.f32.gmra.mrb[0].mxu0 %v2105
  %v2178 = vpop.f32.mrb[0].mxu0
  %v2179 = vadd.f32 0.0, %v2178
  %v2180 = vpop.f32.mrb[0].mxu0
  %2181 = vdwg.mxu0
  %v2182 = vadd.f32 %v2094, %v2174
  %v2183 = vadd.f32 %v2095, %v2179
  %s2184 = scalar_lea.vmem %s7, 160
  %v2185 = vld [vmem:[%s2184] sm:$0xff]
  %v2186 = vld [vmem:[%s2184 + $0x8] sm:$0xff]
  %v2187 = vld [vmem:[%s2184 + $0x10] sm:$0xff]
  %v2188 = vld [vmem:[%s2184 + $0x18] sm:$0xff]
  %v2190 = vsel %vm570, %v1711, 0
  %v2193 = vsel %vm570, %v1716, 0
  %2195 = vmatprep.subr.mxu0 0.0
  %2196 = vmatpush1.msra.mxu0 %v2185
  %2197 = vmatprep.subr.mxu0 0.0
  %2198 = vmatpush1.msra.mxu0 %v2186
  %2199 = vmatprep.subr.mxu0 0.0
  %2200 = vmatpush1.msra.mxu0 %v2187
  %2201 = vmatprep.subr.mxu0 0.0
  %2202 = vmatpush1.msra.mxu0 %v2188
  %2203 = vmatprep.subr.mxu0 0.0
  %2204 = vmatpush1.msra.mxu0 0.0
  %2205 = vmatprep.subr.mxu0 0.0
  %2206 = vmatpush1.msra.mxu0 0.0
  %2207 = vmatprep.subr.mxu0 0.0
  %2208 = vmatpush1.msra.mxu0 0.0
  %2209 = vmatprep.subr.mxu0 0.0
  %2210 = vmatpush1.msra.mxu0 0.0
  %2211 = vmatprep.subr.mxu0 0.0
  %2212 = vmatpush1.msra.mxu0 0.0
  %2213 = vmatprep.subr.mxu0 0.0
  %2214 = vmatpush1.msra.mxu0 0.0
  %2215 = vmatprep.subr.mxu0 0.0
  %2216 = vmatpush1.msra.mxu0 0.0
  %2217 = vmatprep.subr.mxu0 0.0
  %2218 = vmatpush1.msra.mxu0 0.0
  %2219 = vmatprep.subr.mxu0 0.0
  %2220 = vmatpush1.msra.mxu0 0.0
  %2221 = vmatprep.subr.mxu0 0.0
  %2222 = vmatpush1.msra.mxu0 0.0
  %2223 = vmatprep.subr.mxu0 0.0
  %2224 = vmatpush1.msra.mxu0 0.0
  %2225 = vmatprep.subr.mxu0 0.0
  %2226 = vmatpush1.msra.mxu0 0.0
  %2227 = vmatprep.subr.mxu0 0.0
  %2228 = vmatpush1.msra.mxu0 0.0
  %2229 = vmatprep.subr.mxu0 0.0
  %2230 = vmatpush1.msra.mxu0 0.0
  %2231 = vmatprep.subr.mxu0 0.0
  %2232 = vmatpush1.msra.mxu0 0.0
  %2233 = vmatprep.subr.mxu0 0.0
  %2234 = vmatpush1.msra.mxu0 0.0
  %2235 = vmatprep.subr.mxu0 0.0
  %2236 = vmatpush1.msra.mxu0 0.0
  %2237 = vmatprep.subr.mxu0 0.0
  %2238 = vmatpush1.msra.mxu0 0.0
  %2239 = vmatprep.subr.mxu0 0.0
  %2240 = vmatpush1.msra.mxu0 0.0
  %2241 = vmatprep.subr.mxu0 0.0
  %2242 = vmatpush1.msra.mxu0 0.0
  %2243 = vmatprep.subr.mxu0 0.0
  %2244 = vmatpush1.msra.mxu0 0.0
  %2245 = vmatprep.subr.mxu0 0.0
  %2246 = vmatpush1.msra.mxu0 0.0
  %2247 = vmatprep.subr.mxu0 0.0
  %2248 = vmatpush1.msra.mxu0 0.0
  %2249 = vmatprep.subr.mxu0 0.0
  %2250 = vmatpush1.msra.mxu0 0.0
  %2251 = vmatprep.subr.mxu0 0.0
  %2252 = vmatpush1.msra.mxu0 0.0
  %2253 = vmatprep.subr.mxu0 0.0
  %2254 = vmatpush1.msra.mxu0 0.0
  %2255 = vmatprep.subr.mxu0 0.0
  %2256 = vmatpush1.msra.mxu0 0.0
  %2257 = vmatprep.subr.mxu0 0.0
  %2258 = vmatpush1.msra.mxu0 0.0
  %2259 = vmatprep.mubr.f32.mxu0 0.0
  %2260 = vmatmul.mubr.f32.gmra.mrb[0].mxu0 %v2190
  %v2261 = vpop.f32.mrb[0].mxu0
  %v2262 = vadd.f32 0.0, %v2261
  %v2263 = vpop.f32.mrb[0].mxu0
  %2264 = vmatprep.mubr.f32.mxu0 0.0
  %2265 = vmatmul.mubr.f32.gmra.mrb[0].mxu0 %v2193
  %v2266 = vpop.f32.mrb[0].mxu0
  %v2267 = vadd.f32 0.0, %v2266
  %v2268 = vpop.f32.mrb[0].mxu0
  %2269 = vdwg.mxu0
  %v2270 = vadd.f32 %v2182, %v2262
  %v2271 = vadd.f32 %v2183, %v2267
  %s2272 = scalar_lea.vmem %s7, 192
  %v2273 = vld [vmem:[%s2272] sm:$0xff]
  %v2274 = vld [vmem:[%s2272 + $0x8] sm:$0xff]
  %v2275 = vld [vmem:[%s2272 + $0x10] sm:$0xff]
  %v2276 = vld [vmem:[%s2272 + $0x18] sm:$0xff]
  %v2278 = vsel %vm570, %v1721, 0
  %v2281 = vsel %vm570, %v1726, 0
  %2283 = vmatprep.subr.mxu0 0.0
  %2284 = vmatpush1.msra.mxu0 %v2273
  %2285 = vmatprep.subr.mxu0 0.0
  %2286 = vmatpush1.msra.mxu0 %v2274
  %2287 = vmatprep.subr.mxu0 0.0
  %2288 = vmatpush1.msra.mxu0 %v2275
  %2289 = vmatprep.subr.mxu0 0.0
  %2290 = vmatpush1.msra.mxu0 %v2276
  %2291 = vmatprep.subr.mxu0 0.0
  %2292 = vmatpush1.msra.mxu0 0.0
  %2293 = vmatprep.subr.mxu0 0.0
  %2294 = vmatpush1.msra.mxu0 0.0
  %2295 = vmatprep.subr.mxu0 0.0
  %2296 = vmatpush1.msra.mxu0 0.0
  %2297 = vmatprep.subr.mxu0 0.0
  %2298 = vmatpush1.msra.mxu0 0.0
  %2299 = vmatprep.subr.mxu0 0.0
  %2300 = vmatpush1.msra.mxu0 0.0
  %2301 = vmatprep.subr.mxu0 0.0
  %2302 = vmatpush1.msra.mxu0 0.0
  %2303 = vmatprep.subr.mxu0 0.0
  %2304 = vmatpush1.msra.mxu0 0.0
  %2305 = vmatprep.subr.mxu0 0.0
  %2306 = vmatpush1.msra.mxu0 0.0
  %2307 = vmatprep.subr.mxu0 0.0
  %2308 = vmatpush1.msra.mxu0 0.0
  %2309 = vmatprep.subr.mxu0 0.0
  %2310 = vmatpush1.msra.mxu0 0.0
  %2311 = vmatprep.subr.mxu0 0.0
  %2312 = vmatpush1.msra.mxu0 0.0
  %2313 = vmatprep.subr.mxu0 0.0
  %2314 = vmatpush1.msra.mxu0 0.0
  %2315 = vmatprep.subr.mxu0 0.0
  %2316 = vmatpush1.msra.mxu0 0.0
  %2317 = vmatprep.subr.mxu0 0.0
  %2318 = vmatpush1.msra.mxu0 0.0
  %2319 = vmatprep.subr.mxu0 0.0
  %2320 = vmatpush1.msra.mxu0 0.0
  %2321 = vmatprep.subr.mxu0 0.0
  %2322 = vmatpush1.msra.mxu0 0.0
  %2323 = vmatprep.subr.mxu0 0.0
  %2324 = vmatpush1.msra.mxu0 0.0
  %2325 = vmatprep.subr.mxu0 0.0
  %2326 = vmatpush1.msra.mxu0 0.0
  %2327 = vmatprep.subr.mxu0 0.0
  %2328 = vmatpush1.msra.mxu0 0.0
  %2329 = vmatprep.subr.mxu0 0.0
  %2330 = vmatpush1.msra.mxu0 0.0
  %2331 = vmatprep.subr.mxu0 0.0
  %2332 = vmatpush1.msra.mxu0 0.0
  %2333 = vmatprep.subr.mxu0 0.0
  %2334 = vmatpush1.msra.mxu0 0.0
  %2335 = vmatprep.subr.mxu0 0.0
  %2336 = vmatpush1.msra.mxu0 0.0
  %2337 = vmatprep.subr.mxu0 0.0
  %2338 = vmatpush1.msra.mxu0 0.0
  %2339 = vmatprep.subr.mxu0 0.0
  %2340 = vmatpush1.msra.mxu0 0.0
  %2341 = vmatprep.subr.mxu0 0.0
  %2342 = vmatpush1.msra.mxu0 0.0
  %2343 = vmatprep.subr.mxu0 0.0
  %2344 = vmatpush1.msra.mxu0 0.0
  %2345 = vmatprep.subr.mxu0 0.0
  %2346 = vmatpush1.msra.mxu0 0.0
  %2347 = vmatprep.mubr.f32.mxu0 0.0
  %2348 = vmatmul.mubr.f32.gmra.mrb[0].mxu0 %v2278
  %v2349 = vpop.f32.mrb[0].mxu0
  %v2350 = vadd.f32 0.0, %v2349
  %v2351 = vpop.f32.mrb[0].mxu0
  %2352 = vmatprep.mubr.f32.mxu0 0.0
  %2353 = vmatmul.mubr.f32.gmra.mrb[0].mxu0 %v2281
  %v2354 = vpop.f32.mrb[0].mxu0
  %v2355 = vadd.f32 0.0, %v2354
  %v2356 = vpop.f32.mrb[0].mxu0
  %2357 = vdwg.mxu0
  %v2358 = vadd.f32 %v2270, %v2350
  %v2359 = vadd.f32 %v2271, %v2355
  %s2360 = scalar_lea.vmem %s7, 224
  %v2361 = vld [vmem:[%s2360] sm:$0xff]
  %v2362 = vld [vmem:[%s2360 + $0x8] sm:$0xff]
  %v2363 = vld [vmem:[%s2360 + $0x10] sm:$0xff]
  %v2364 = vld [vmem:[%s2360 + $0x18] sm:$0xff]
  %v2366 = vsel %vm570, %v1731, 0
  %v2369 = vsel %vm570, %v1736, 0
  %2371 = vmatprep.subr.mxu0 0.0
  %2372 = vmatpush1.msra.mxu0 %v2361
  %2373 = vmatprep.subr.mxu0 0.0
  %2374 = vmatpush1.msra.mxu0 %v2362
  %2375 = vmatprep.subr.mxu0 0.0
  %2376 = vmatpush1.msra.mxu0 %v2363
  %2377 = vmatprep.subr.mxu0 0.0
  %2378 = vmatpush1.msra.mxu0 %v2364
  %2379 = vmatprep.subr.mxu0 0.0
  %2380 = vmatpush1.msra.mxu0 0.0
  %2381 = vmatprep.subr.mxu0 0.0
  %2382 = vmatpush1.msra.mxu0 0.0
  %2383 = vmatprep.subr.mxu0 0.0
  %2384 = vmatpush1.msra.mxu0 0.0
  %2385 = vmatprep.subr.mxu0 0.0
  %2386 = vmatpush1.msra.mxu0 0.0
  %2387 = vmatprep.subr.mxu0 0.0
  %2388 = vmatpush1.msra.mxu0 0.0
  %2389 = vmatprep.subr.mxu0 0.0
  %2390 = vmatpush1.msra.mxu0 0.0
  %2391 = vmatprep.subr.mxu0 0.0
  %2392 = vmatpush1.msra.mxu0 0.0
  %2393 = vmatprep.subr.mxu0 0.0
  %2394 = vmatpush1.msra.mxu0 0.0
  %2395 = vmatprep.subr.mxu0 0.0
  %2396 = vmatpush1.msra.mxu0 0.0
  %2397 = vmatprep.subr.mxu0 0.0
  %2398 = vmatpush1.msra.mxu0 0.0
  %2399 = vmatprep.subr.mxu0 0.0
  %2400 = vmatpush1.msra.mxu0 0.0
  %2401 = vmatprep.subr.mxu0 0.0
  %2402 = vmatpush1.msra.mxu0 0.0
  %2403 = vmatprep.subr.mxu0 0.0
  %2404 = vmatpush1.msra.mxu0 0.0
  %2405 = vmatprep.subr.mxu0 0.0
  %2406 = vmatpush1.msra.mxu0 0.0
  %2407 = vmatprep.subr.mxu0 0.0
  %2408 = vmatpush1.msra.mxu0 0.0
  %2409 = vmatprep.subr.mxu0 0.0
  %2410 = vmatpush1.msra.mxu0 0.0
  %2411 = vmatprep.subr.mxu0 0.0
  %2412 = vmatpush1.msra.mxu0 0.0
  %2413 = vmatprep.subr.mxu0 0.0
  %2414 = vmatpush1.msra.mxu0 0.0
  %2415 = vmatprep.subr.mxu0 0.0
  %2416 = vmatpush1.msra.mxu0 0.0
  %2417 = vmatprep.subr.mxu0 0.0
  %2418 = vmatpush1.msra.mxu0 0.0
  %2419 = vmatprep.subr.mxu0 0.0
  %2420 = vmatpush1.msra.mxu0 0.0
  %2421 = vmatprep.subr.mxu0 0.0
  %2422 = vmatpush1.msra.mxu0 0.0
  %2423 = vmatprep.subr.mxu0 0.0
  %2424 = vmatpush1.msra.mxu0 0.0
  %2425 = vmatprep.subr.mxu0 0.0
  %2426 = vmatpush1.msra.mxu0 0.0
  %2427 = vmatprep.subr.mxu0 0.0
  %2428 = vmatpush1.msra.mxu0 0.0
  %2429 = vmatprep.subr.mxu0 0.0
  %2430 = vmatpush1.msra.mxu0 0.0
  %2431 = vmatprep.subr.mxu0 0.0
  %2432 = vmatpush1.msra.mxu0 0.0
  %2433 = vmatprep.subr.mxu0 0.0
  %2434 = vmatpush1.msra.mxu0 0.0
  %2435 = vmatprep.mubr.f32.mxu0 0.0
  %2436 = vmatmul.mubr.f32.gmra.mrb[0].mxu0 %v2366
  %v2437 = vpop.f32.mrb[0].mxu0
  %v2438 = vadd.f32 0.0, %v2437
  %v2439 = vpop.f32.mrb[0].mxu0
  %2440 = vmatprep.mubr.f32.mxu0 0.0
  %2441 = vmatmul.mubr.f32.gmra.mrb[0].mxu0 %v2369
  %v2442 = vpop.f32.mrb[0].mxu0
  %v2443 = vadd.f32 0.0, %v2442
  %v2444 = vpop.f32.mrb[0].mxu0
  %2445 = vdwg.mxu0
  %v2446 = vadd.f32 %v2358, %v2438
  %v2447 = vadd.f32 %v2359, %v2443
  %s2448 = scalar_lea.vmem %s7, 256
  %v2449 = vld [vmem:[%s2448] sm:$0xff]
  %v2450 = vld [vmem:[%s2448 + $0x8] sm:$0xff]
  %v2451 = vld [vmem:[%s2448 + $0x10] sm:$0xff]
  %v2452 = vld [vmem:[%s2448 + $0x18] sm:$0xff]
  %v2454 = vsel %vm570, %v1741, 0
  %v2457 = vsel %vm570, %v1746, 0
  %2459 = vmatprep.subr.mxu0 0.0
  %2460 = vmatpush1.msra.mxu0 %v2449
  %2461 = vmatprep.subr.mxu0 0.0
  %2462 = vmatpush1.msra.mxu0 %v2450
  %2463 = vmatprep.subr.mxu0 0.0
  %2464 = vmatpush1.msra.mxu0 %v2451
  %2465 = vmatprep.subr.mxu0 0.0
  %2466 = vmatpush1.msra.mxu0 %v2452
  %2467 = vmatprep.subr.mxu0 0.0
  %2468 = vmatpush1.msra.mxu0 0.0
  %2469 = vmatprep.subr.mxu0 0.0
  %2470 = vmatpush1.msra.mxu0 0.0
  %2471 = vmatprep.subr.mxu0 0.0
  %2472 = vmatpush1.msra.mxu0 0.0
  %2473 = vmatprep.subr.mxu0 0.0
  %2474 = vmatpush1.msra.mxu0 0.0
  %2475 = vmatprep.subr.mxu0 0.0
  %2476 = vmatpush1.msra.mxu0 0.0
  %2477 = vmatprep.subr.mxu0 0.0
  %2478 = vmatpush1.msra.mxu0 0.0
  %2479 = vmatprep.subr.mxu0 0.0
  %2480 = vmatpush1.msra.mxu0 0.0
  %2481 = vmatprep.subr.mxu0 0.0
  %2482 = vmatpush1.msra.mxu0 0.0
  %2483 = vmatprep.subr.mxu0 0.0
  %2484 = vmatpush1.msra.mxu0 0.0
  %2485 = vmatprep.subr.mxu0 0.0
  %2486 = vmatpush1.msra.mxu0 0.0
  %2487 = vmatprep.subr.mxu0 0.0
  %2488 = vmatpush1.msra.mxu0 0.0
  %2489 = vmatprep.subr.mxu0 0.0
  %2490 = vmatpush1.msra.mxu0 0.0
  %2491 = vmatprep.subr.mxu0 0.0
  %2492 = vmatpush1.msra.mxu0 0.0
  %2493 = vmatprep.subr.mxu0 0.0
  %2494 = vmatpush1.msra.mxu0 0.0
  %2495 = vmatprep.subr.mxu0 0.0
  %2496 = vmatpush1.msra.mxu0 0.0
  %2497 = vmatprep.subr.mxu0 0.0
  %2498 = vmatpush1.msra.mxu0 0.0
  %2499 = vmatprep.subr.mxu0 0.0
  %2500 = vmatpush1.msra.mxu0 0.0
  %2501 = vmatprep.subr.mxu0 0.0
  %2502 = vmatpush1.msra.mxu0 0.0
  %2503 = vmatprep.subr.mxu0 0.0
  %2504 = vmatpush1.msra.mxu0 0.0
  %2505 = vmatprep.subr.mxu0 0.0
  %2506 = vmatpush1.msra.mxu0 0.0
  %2507 = vmatprep.subr.mxu0 0.0
  %2508 = vmatpush1.msra.mxu0 0.0
  %2509 = vmatprep.subr.mxu0 0.0
  %2510 = vmatpush1.msra.mxu0 0.0
  %2511 = vmatprep.subr.mxu0 0.0
  %2512 = vmatpush1.msra.mxu0 0.0
  %2513 = vmatprep.subr.mxu0 0.0
  %2514 = vmatpush1.msra.mxu0 0.0
  %2515 = vmatprep.subr.mxu0 0.0
  %2516 = vmatpush1.msra.mxu0 0.0
  %2517 = vmatprep.subr.mxu0 0.0
  %2518 = vmatpush1.msra.mxu0 0.0
  %2519 = vmatprep.subr.mxu0 0.0
  %2520 = vmatpush1.msra.mxu0 0.0
  %2521 = vmatprep.subr.mxu0 0.0
  %2522 = vmatpush1.msra.mxu0 0.0
  %2523 = vmatprep.mubr.f32.mxu0 0.0
  %2524 = vmatmul.mubr.f32.gmra.mrb[0].mxu0 %v2454
  %v2525 = vpop.f32.mrb[0].mxu0
  %v2526 = vadd.f32 0.0, %v2525
  %v2527 = vpop.f32.mrb[0].mxu0
  %2528 = vmatprep.mubr.f32.mxu0 0.0
  %2529 = vmatmul.mubr.f32.gmra.mrb[0].mxu0 %v2457
  %v2530 = vpop.f32.mrb[0].mxu0
  %v2531 = vadd.f32 0.0, %v2530
  %v2532 = vpop.f32.mrb[0].mxu0
  %2533 = vdwg.mxu0
  %v2534 = vadd.f32 %v2446, %v2526
  %v2535 = vadd.f32 %v2447, %v2531
  %v2536 = vld [vmem:[%s8] sm:$0x1]
  %v2538 = vlaneseq
  %v2539 = vshrl.u32 %v2538, 7
  %v2540 = vsub.s32 0, %v2539
  %v2541 = vrot.slane %v2536, %v2540
  %v2543 = vadd.f32 %v2534, %v2541
  %v2544 = vadd.f32 %v2535, %v2541
  %v2545 = vmax.f32 %v2543, 0.0
  %v2546 = vmax.f32 %v2544, 0.0
  %v2547 = vld [vmem:[%s9] sm:$0xff]
  %v2548 = vld [vmem:[%s9 + $0x8] sm:$0xff]
  %v2549 = vld [vmem:[%s9 + $0x10] sm:$0xff]
  %v2550 = vld [vmem:[%s9 + $0x18] sm:$0xff]
  %v2551 = vld [vmem:[%s9 + $0x20] sm:$0xff]
  %v2552 = vld [vmem:[%s9 + $0x28] sm:$0xff]
  %v2553 = vld [vmem:[%s9 + $0x30] sm:$0xff]
  %v2554 = vld [vmem:[%s9 + $0x38] sm:$0xff]
  %v2555 = vld [vmem:[%s9 + $0x40] sm:$0xff]
  %v2556 = vld [vmem:[%s9 + $0x48] sm:$0xff]
  %v2557 = vld [vmem:[%s9 + $0x50] sm:$0xff]
  %v2558 = vld [vmem:[%s9 + $0x58] sm:$0xff]
  %v2559 = vld [vmem:[%s9 + $0x60] sm:$0xff]
  %v2560 = vld [vmem:[%s9 + $0x68] sm:$0xff]
  %v2561 = vld [vmem:[%s9 + $0x70] sm:$0xff]
  %v2562 = vld [vmem:[%s9 + $0x78] sm:$0xff]
  %v2563 = vld [vmem:[%s9 + $0x80] sm:$0xff]
  %v2564 = vld [vmem:[%s9 + $0x88] sm:$0xff]
  %vm2565 = vcmask 130048
  %v2567 = vsel %vm2565, %v2547, 0
  %v2570 = vsel %vm2565, %v2548, 0
  %v2573 = vsel %vm2565, %v2549, 0
  %v2576 = vsel %vm2565, %v2550, 0
  %v2579 = vsel %vm2565, %v2551, 0
  %v2582 = vsel %vm2565, %v2552, 0
  %v2585 = vsel %vm2565, %v2553, 0
  %v2588 = vsel %vm2565, %v2554, 0
  %v2591 = vsel %vm2565, %v2555, 0
  %v2594 = vsel %vm2565, %v2556, 0
  %v2597 = vsel %vm2565, %v2557, 0
  %v2600 = vsel %vm2565, %v2558, 0
  %v2603 = vsel %vm2565, %v2559, 0
  %v2606 = vsel %vm2565, %v2560, 0
  %v2609 = vsel %vm2565, %v2561, 0
  %v2612 = vsel %vm2565, %v2562, 0
  %v2615 = vsel %vm2565, %v2563, 0
  %v2618 = vsel %vm2565, %v2564, 0
  %2620 = vmatprep.subr.mxu0 0.0
  %2621 = vmatpush1.msra.mxu0 %v2545
  %2622 = vmatprep.subr.mxu0 0.0
  %2623 = vmatpush1.msra.mxu0 %v2546
  %2624 = vmatprep.subr.mxu0 0.0
  %2625 = vmatpush1.msra.mxu0 0.0
  %2626 = vmatprep.subr.mxu0 0.0
  %2627 = vmatpush1.msra.mxu0 0.0
  %2628 = vmatprep.subr.mxu0 0.0
  %2629 = vmatpush1.msra.mxu0 0.0
  %2630 = vmatprep.subr.mxu0 0.0
  %2631 = vmatpush1.msra.mxu0 0.0
  %2632 = vmatprep.subr.mxu0 0.0
  %2633 = vmatpush1.msra.mxu0 0.0
  %2634 = vmatprep.subr.mxu0 0.0
  %2635 = vmatpush1.msra.mxu0 0.0
  %2636 = vmatprep.subr.mxu0 0.0
  %2637 = vmatpush1.msra.mxu0 0.0
  %2638 = vmatprep.subr.mxu0 0.0
  %2639 = vmatpush1.msra.mxu0 0.0
  %2640 = vmatprep.subr.mxu0 0.0
  %2641 = vmatpush1.msra.mxu0 0.0
  %2642 = vmatprep.subr.mxu0 0.0
  %2643 = vmatpush1.msra.mxu0 0.0
  %2644 = vmatprep.subr.mxu0 0.0
  %2645 = vmatpush1.msra.mxu0 0.0
  %2646 = vmatprep.subr.mxu0 0.0
  %2647 = vmatpush1.msra.mxu0 0.0
  %2648 = vmatprep.subr.mxu0 0.0
  %2649 = vmatpush1.msra.mxu0 0.0
  %2650 = vmatprep.subr.mxu0 0.0
  %2651 = vmatpush1.msra.mxu0 0.0
  %2652 = vmatprep.subr.mxu0 0.0
  %2653 = vmatpush1.msra.mxu0 0.0
  %2654 = vmatprep.subr.mxu0 0.0
  %2655 = vmatpush1.msra.mxu0 0.0
  %2656 = vmatprep.subr.mxu0 0.0
  %2657 = vmatpush1.msra.mxu0 0.0
  %2658 = vmatprep.subr.mxu0 0.0
  %2659 = vmatpush1.msra.mxu0 0.0
  %2660 = vmatprep.subr.mxu0 0.0
  %2661 = vmatpush1.msra.mxu0 0.0
  %2662 = vmatprep.subr.mxu0 0.0
  %2663 = vmatpush1.msra.mxu0 0.0
  %2664 = vmatprep.subr.mxu0 0.0
  %2665 = vmatpush1.msra.mxu0 0.0
  %2666 = vmatprep.subr.mxu0 0.0
  %2667 = vmatpush1.msra.mxu0 0.0
  %2668 = vmatprep.subr.mxu0 0.0
  %2669 = vmatpush1.msra.mxu0 0.0
  %2670 = vmatprep.subr.mxu0 0.0
  %2671 = vmatpush1.msra.mxu0 0.0
  %2672 = vmatprep.subr.mxu0 0.0
  %2673 = vmatpush1.msra.mxu0 0.0
  %2674 = vmatprep.subr.mxu0 0.0
  %2675 = vmatpush1.msra.mxu0 0.0
  %2676 = vmatprep.subr.mxu0 0.0
  %2677 = vmatpush1.msra.mxu0 0.0
  %2678 = vmatprep.subr.mxu0 0.0
  %2679 = vmatpush1.msra.mxu0 0.0
  %2680 = vmatprep.subr.mxu0 0.0
  %2681 = vmatpush1.msra.mxu0 0.0
  %2682 = vmatprep.subr.mxu0 0.0
  %2683 = vmatpush1.msra.mxu0 0.0
  %2684 = vmatprep.mubr.f32.mxu0 0.0
  %2685 = vmatmul.mubr.f32.gmra.mrb[0].mxu0 %v2567
  %v2686 = vpop.f32.mrb[0].mxu0
  %v2687 = vadd.f32 0.0, %v2686
  %v2688 = vpop.f32.mrb[0].mxu0
  %2689 = vmatprep.mubr.f32.mxu0 0.0
  %2690 = vmatmul.mubr.f32.gmra.mrb[0].mxu0 %v2570
  %v2691 = vpop.f32.mrb[0].mxu0
  %v2692 = vadd.f32 0.0, %v2691
  %v2693 = vpop.f32.mrb[0].mxu0
  %2694 = vmatprep.mubr.f32.mxu0 0.0
  %2695 = vmatmul.mubr.f32.gmra.mrb[0].mxu0 %v2573
  %v2696 = vpop.f32.mrb[0].mxu0
  %v2697 = vadd.f32 0.0, %v2696
  %v2698 = vpop.f32.mrb[0].mxu0
  %2699 = vmatprep.mubr.f32.mxu0 0.0
  %2700 = vmatmul.mubr.f32.gmra.mrb[0].mxu0 %v2576
  %v2701 = vpop.f32.mrb[0].mxu0
  %v2702 = vadd.f32 0.0, %v2701
  %v2703 = vpop.f32.mrb[0].mxu0
  %2704 = vmatprep.mubr.f32.mxu0 0.0
  %2705 = vmatmul.mubr.f32.gmra.mrb[0].mxu0 %v2579
  %v2706 = vpop.f32.mrb[0].mxu0
  %v2707 = vadd.f32 0.0, %v2706
  %v2708 = vpop.f32.mrb[0].mxu0
  %2709 = vmatprep.mubr.f32.mxu0 0.0
  %2710 = vmatmul.mubr.f32.gmra.mrb[0].mxu0 %v2582
  %v2711 = vpop.f32.mrb[0].mxu0
  %v2712 = vadd.f32 0.0, %v2711
  %v2713 = vpop.f32.mrb[0].mxu0
  %2714 = vmatprep.mubr.f32.mxu0 0.0
  %2715 = vmatmul.mubr.f32.gmra.mrb[0].mxu0 %v2585
  %v2716 = vpop.f32.mrb[0].mxu0
  %v2717 = vadd.f32 0.0, %v2716
  %v2718 = vpop.f32.mrb[0].mxu0
  %2719 = vmatprep.mubr.f32.mxu0 0.0
  %2720 = vmatmul.mubr.f32.gmra.mrb[0].mxu0 %v2588
  %v2721 = vpop.f32.mrb[0].mxu0
  %v2722 = vadd.f32 0.0, %v2721
  %v2723 = vpop.f32.mrb[0].mxu0
  %2724 = vmatprep.mubr.f32.mxu0 0.0
  %2725 = vmatmul.mubr.f32.gmra.mrb[0].mxu0 %v2591
  %v2726 = vpop.f32.mrb[0].mxu0
  %v2727 = vadd.f32 0.0, %v2726
  %v2728 = vpop.f32.mrb[0].mxu0
  %2729 = vmatprep.mubr.f32.mxu0 0.0
  %2730 = vmatmul.mubr.f32.gmra.mrb[0].mxu0 %v2594
  %v2731 = vpop.f32.mrb[0].mxu0
  %v2732 = vadd.f32 0.0, %v2731
  %v2733 = vpop.f32.mrb[0].mxu0
  %2734 = vmatprep.mubr.f32.mxu0 0.0
  %2735 = vmatmul.mubr.f32.gmra.mrb[0].mxu0 %v2597
  %v2736 = vpop.f32.mrb[0].mxu0
  %v2737 = vadd.f32 0.0, %v2736
  %v2738 = vpop.f32.mrb[0].mxu0
  %2739 = vmatprep.mubr.f32.mxu0 0.0
  %2740 = vmatmul.mubr.f32.gmra.mrb[0].mxu0 %v2600
  %v2741 = vpop.f32.mrb[0].mxu0
  %v2742 = vadd.f32 0.0, %v2741
  %v2743 = vpop.f32.mrb[0].mxu0
  %2744 = vmatprep.mubr.f32.mxu0 0.0
  %2745 = vmatmul.mubr.f32.gmra.mrb[0].mxu0 %v2603
  %v2746 = vpop.f32.mrb[0].mxu0
  %v2747 = vadd.f32 0.0, %v2746
  %v2748 = vpop.f32.mrb[0].mxu0
  %2749 = vmatprep.mubr.f32.mxu0 0.0
  %2750 = vmatmul.mubr.f32.gmra.mrb[0].mxu0 %v2606
  %v2751 = vpop.f32.mrb[0].mxu0
  %v2752 = vadd.f32 0.0, %v2751
  %v2753 = vpop.f32.mrb[0].mxu0
  %2754 = vmatprep.mubr.f32.mxu0 0.0
  %2755 = vmatmul.mubr.f32.gmra.mrb[0].mxu0 %v2609
  %v2756 = vpop.f32.mrb[0].mxu0
  %v2757 = vadd.f32 0.0, %v2756
  %v2758 = vpop.f32.mrb[0].mxu0
  %2759 = vmatprep.mubr.f32.mxu0 0.0
  %2760 = vmatmul.mubr.f32.gmra.mrb[0].mxu0 %v2612
  %v2761 = vpop.f32.mrb[0].mxu0
  %v2762 = vadd.f32 0.0, %v2761
  %v2763 = vpop.f32.mrb[0].mxu0
  %2764 = vmatprep.mubr.f32.mxu0 0.0
  %2765 = vmatmul.mubr.f32.gmra.mrb[0].mxu0 %v2615
  %v2766 = vpop.f32.mrb[0].mxu0
  %v2767 = vadd.f32 0.0, %v2766
  %v2768 = vpop.f32.mrb[0].mxu0
  %2769 = vmatprep.mubr.f32.mxu0 0.0
  %2770 = vmatmul.mubr.f32.gmra.mrb[0].mxu0 %v2618
  %v2771 = vpop.f32.mrb[0].mxu0
  %v2772 = vadd.f32 0.0, %v2771
  %v2773 = vpop.f32.mrb[0].mxu0
  %2774 = vdwg.mxu0
  %v2775 = vld [vmem:[%s10] sm:$0xff]
  %v2776 = vld [vmem:[%s10 + $0x8] sm:$0xff]
  %v2777 = vld [vmem:[%s10 + $0x10] sm:$0xff]
  %v2778 = vld [vmem:[%s10 + $0x18] sm:$0xff]
  %s2779 = scalar_lea.vmem %s10, 32
  %v2780 = vld [vmem:[%s2779] sm:$0xff]
  %v2781 = vld [vmem:[%s2779 + $0x8] sm:$0xff]
  %v2782 = vld [vmem:[%s2779 + $0x10] sm:$0xff]
  %v2783 = vld [vmem:[%s2779 + $0x18] sm:$0xff]
  %v2785 = vsel %vm570, %v2697, 0
  %v2788 = vsel %vm570, %v2702, 0
  %2790 = vmatprep.subr.mxu0 0.0
  %2791 = vmatpush1.msra.mxu0 %v2780
  %2792 = vmatprep.subr.mxu0 0.0
  %2793 = vmatpush1.msra.mxu0 %v2781
  %2794 = vmatprep.subr.mxu0 0.0
  %2795 = vmatpush1.msra.mxu0 %v2782
  %2796 = vmatprep.subr.mxu0 0.0
  %2797 = vmatpush1.msra.mxu0 %v2783
  %2798 = vmatprep.subr.mxu0 0.0
  %2799 = vmatpush1.msra.mxu0 0.0
  %2800 = vmatprep.subr.mxu0 0.0
  %2801 = vmatpush1.msra.mxu0 0.0
  %2802 = vmatprep.subr.mxu0 0.0
  %2803 = vmatpush1.msra.mxu0 0.0
  %2804 = vmatprep.subr.mxu0 0.0
  %2805 = vmatpush1.msra.mxu0 0.0
  %2806 = vmatprep.subr.mxu0 0.0
  %2807 = vmatpush1.msra.mxu0 0.0
  %2808 = vmatprep.subr.mxu0 0.0
  %2809 = vmatpush1.msra.mxu0 0.0
  %2810 = vmatprep.subr.mxu0 0.0
  %2811 = vmatpush1.msra.mxu0 0.0
  %2812 = vmatprep.subr.mxu0 0.0
  %2813 = vmatpush1.msra.mxu0 0.0
  %2814 = vmatprep.subr.mxu0 0.0
  %2815 = vmatpush1.msra.mxu0 0.0
  %2816 = vmatprep.subr.mxu0 0.0
  %2817 = vmatpush1.msra.mxu0 0.0
  %2818 = vmatprep.subr.mxu0 0.0
  %2819 = vmatpush1.msra.mxu0 0.0
  %2820 = vmatprep.subr.mxu0 0.0
  %2821 = vmatpush1.msra.mxu0 0.0
  %2822 = vmatprep.subr.mxu0 0.0
  %2823 = vmatpush1.msra.mxu0 0.0
  %2824 = vmatprep.subr.mxu0 0.0
  %2825 = vmatpush1.msra.mxu0 0.0
  %2826 = vmatprep.subr.mxu0 0.0
  %2827 = vmatpush1.msra.mxu0 0.0
  %2828 = vmatprep.subr.mxu0 0.0
  %2829 = vmatpush1.msra.mxu0 0.0
  %2830 = vmatprep.subr.mxu0 0.0
  %2831 = vmatpush1.msra.mxu0 0.0
  %2832 = vmatprep.subr.mxu0 0.0
  %2833 = vmatpush1.msra.mxu0 0.0
  %2834 = vmatprep.subr.mxu0 0.0
  %2835 = vmatpush1.msra.mxu0 0.0
  %2836 = vmatprep.subr.mxu0 0.0
  %2837 = vmatpush1.msra.mxu0 0.0
  %2838 = vmatprep.subr.mxu0 0.0
  %2839 = vmatpush1.msra.mxu0 0.0
  %2840 = vmatprep.subr.mxu0 0.0
  %2841 = vmatpush1.msra.mxu0 0.0
  %2842 = vmatprep.subr.mxu0 0.0
  %2843 = vmatpush1.msra.mxu0 0.0
  %2844 = vmatprep.subr.mxu0 0.0
  %2845 = vmatpush1.msra.mxu0 0.0
  %2846 = vmatprep.subr.mxu0 0.0
  %2847 = vmatpush1.msra.mxu0 0.0
  %2848 = vmatprep.subr.mxu0 0.0
  %2849 = vmatpush1.msra.mxu0 0.0
  %2850 = vmatprep.subr.mxu0 0.0
  %2851 = vmatpush1.msra.mxu0 0.0
  %2852 = vmatprep.subr.mxu0 0.0
  %2853 = vmatpush1.msra.mxu0 0.0
  %2854 = vmatprep.mubr.f32.mxu0 0.0
  %2855 = vmatmul.mubr.f32.gmra.mrb[0].mxu0 %v2785
  %v2856 = vpop.f32.mrb[0].mxu0
  %v2857 = vadd.f32 0.0, %v2856
  %v2858 = vpop.f32.mrb[0].mxu0
  %2859 = vmatprep.mubr.f32.mxu0 0.0
  %2860 = vmatmul.mubr.f32.gmra.mrb[0].mxu0 %v2788
  %v2861 = vpop.f32.mrb[0].mxu0
  %v2862 = vadd.f32 0.0, %v2861
  %v2863 = vpop.f32.mrb[0].mxu0
  %2864 = vdwg.mxu0
  %v2866 = vsel %vm570, %v2687, 0
  %v2869 = vsel %vm570, %v2692, 0
  %2871 = vmatprep.subr.mxu0 0.0
  %2872 = vmatpush1.msra.mxu0 %v2775
  %2873 = vmatprep.subr.mxu0 0.0
  %2874 = vmatpush1.msra.mxu0 %v2776
  %2875 = vmatprep.subr.mxu0 0.0
  %2876 = vmatpush1.msra.mxu0 %v2777
  %2877 = vmatprep.subr.mxu0 0.0
  %2878 = vmatpush1.msra.mxu0 %v2778
  %2879 = vmatprep.subr.mxu0 0.0
  %2880 = vmatpush1.msra.mxu0 0.0
  %2881 = vmatprep.subr.mxu0 0.0
  %2882 = vmatpush1.msra.mxu0 0.0
  %2883 = vmatprep.subr.mxu0 0.0
  %2884 = vmatpush1.msra.mxu0 0.0
  %2885 = vmatprep.subr.mxu0 0.0
  %2886 = vmatpush1.msra.mxu0 0.0
  %2887 = vmatprep.subr.mxu0 0.0
  %2888 = vmatpush1.msra.mxu0 0.0
  %2889 = vmatprep.subr.mxu0 0.0
  %2890 = vmatpush1.msra.mxu0 0.0
  %2891 = vmatprep.subr.mxu0 0.0
  %2892 = vmatpush1.msra.mxu0 0.0
  %2893 = vmatprep.subr.mxu0 0.0
  %2894 = vmatpush1.msra.mxu0 0.0
  %2895 = vmatprep.subr.mxu0 0.0
  %2896 = vmatpush1.msra.mxu0 0.0
  %2897 = vmatprep.subr.mxu0 0.0
  %2898 = vmatpush1.msra.mxu0 0.0
  %2899 = vmatprep.subr.mxu0 0.0
  %2900 = vmatpush1.msra.mxu0 0.0
  %2901 = vmatprep.subr.mxu0 0.0
  %2902 = vmatpush1.msra.mxu0 0.0
  %2903 = vmatprep.subr.mxu0 0.0
  %2904 = vmatpush1.msra.mxu0 0.0
  %2905 = vmatprep.subr.mxu0 0.0
  %2906 = vmatpush1.msra.mxu0 0.0
  %2907 = vmatprep.subr.mxu0 0.0
  %2908 = vmatpush1.msra.mxu0 0.0
  %2909 = vmatprep.subr.mxu0 0.0
  %2910 = vmatpush1.msra.mxu0 0.0
  %2911 = vmatprep.subr.mxu0 0.0
  %2912 = vmatpush1.msra.mxu0 0.0
  %2913 = vmatprep.subr.mxu0 0.0
  %2914 = vmatpush1.msra.mxu0 0.0
  %2915 = vmatprep.subr.mxu0 0.0
  %2916 = vmatpush1.msra.mxu0 0.0
  %2917 = vmatprep.subr.mxu0 0.0
  %2918 = vmatpush1.msra.mxu0 0.0
  %2919 = vmatprep.subr.mxu0 0.0
  %2920 = vmatpush1.msra.mxu0 0.0
  %2921 = vmatprep.subr.mxu0 0.0
  %2922 = vmatpush1.msra.mxu0 0.0
  %2923 = vmatprep.subr.mxu0 0.0
  %2924 = vmatpush1.msra.mxu0 0.0
  %2925 = vmatprep.subr.mxu0 0.0
  %2926 = vmatpush1.msra.mxu0 0.0
  %2927 = vmatprep.subr.mxu0 0.0
  %2928 = vmatpush1.msra.mxu0 0.0
  %2929 = vmatprep.subr.mxu0 0.0
  %2930 = vmatpush1.msra.mxu0 0.0
  %2931 = vmatprep.subr.mxu0 0.0
  %2932 = vmatpush1.msra.mxu0 0.0
  %2933 = vmatprep.subr.mxu0 0.0
  %2934 = vmatpush1.msra.mxu0 0.0
  %2935 = vmatprep.mubr.f32.mxu0 0.0
  %2936 = vmatmul.mubr.f32.gmra.mrb[0].mxu0 %v2866
  %v2937 = vpop.f32.mrb[0].mxu0
  %v2938 = vadd.f32 %v2857, %v2937
  %v2939 = vpop.f32.mrb[0].mxu0
  %2940 = vmatprep.mubr.f32.mxu0 0.0
  %2941 = vmatmul.mubr.f32.gmra.mrb[0].mxu0 %v2869
  %v2942 = vpop.f32.mrb[0].mxu0
  %v2943 = vadd.f32 %v2862, %v2942
  %v2944 = vpop.f32.mrb[0].mxu0
  %2945 = vdwg.mxu0
  %s2946 = scalar_lea.vmem %s10, 64
  %v2947 = vld [vmem:[%s2946] sm:$0xff]
  %v2948 = vld [vmem:[%s2946 + $0x8] sm:$0xff]
  %v2949 = vld [vmem:[%s2946 + $0x10] sm:$0xff]
  %v2950 = vld [vmem:[%s2946 + $0x18] sm:$0xff]
  %v2952 = vsel %vm570, %v2707, 0
  %v2955 = vsel %vm570, %v2712, 0
  %2957 = vmatprep.subr.mxu0 0.0
  %2958 = vmatpush1.msra.mxu0 %v2947
  %2959 = vmatprep.subr.mxu0 0.0
  %2960 = vmatpush1.msra.mxu0 %v2948
  %2961 = vmatprep.subr.mxu0 0.0
  %2962 = vmatpush1.msra.mxu0 %v2949
  %2963 = vmatprep.subr.mxu0 0.0
  %2964 = vmatpush1.msra.mxu0 %v2950
  %2965 = vmatprep.subr.mxu0 0.0
  %2966 = vmatpush1.msra.mxu0 0.0
  %2967 = vmatprep.subr.mxu0 0.0
  %2968 = vmatpush1.msra.mxu0 0.0
  %2969 = vmatprep.subr.mxu0 0.0
  %2970 = vmatpush1.msra.mxu0 0.0
  %2971 = vmatprep.subr.mxu0 0.0
  %2972 = vmatpush1.msra.mxu0 0.0
  %2973 = vmatprep.subr.mxu0 0.0
  %2974 = vmatpush1.msra.mxu0 0.0
  %2975 = vmatprep.subr.mxu0 0.0
  %2976 = vmatpush1.msra.mxu0 0.0
  %2977 = vmatprep.subr.mxu0 0.0
  %2978 = vmatpush1.msra.mxu0 0.0
  %2979 = vmatprep.subr.mxu0 0.0
  %2980 = vmatpush1.msra.mxu0 0.0
  %2981 = vmatprep.subr.mxu0 0.0
  %2982 = vmatpush1.msra.mxu0 0.0
  %2983 = vmatprep.subr.mxu0 0.0
  %2984 = vmatpush1.msra.mxu0 0.0
  %2985 = vmatprep.subr.mxu0 0.0
  %2986 = vmatpush1.msra.mxu0 0.0
  %2987 = vmatprep.subr.mxu0 0.0
  %2988 = vmatpush1.msra.mxu0 0.0
  %2989 = vmatprep.subr.mxu0 0.0
  %2990 = vmatpush1.msra.mxu0 0.0
  %2991 = vmatprep.subr.mxu0 0.0
  %2992 = vmatpush1.msra.mxu0 0.0
  %2993 = vmatprep.subr.mxu0 0.0
  %2994 = vmatpush1.msra.mxu0 0.0
  %2995 = vmatprep.subr.mxu0 0.0
  %2996 = vmatpush1.msra.mxu0 0.0
  %2997 = vmatprep.subr.mxu0 0.0
  %2998 = vmatpush1.msra.mxu0 0.0
  %2999 = vmatprep.subr.mxu0 0.0
  %3000 = vmatpush1.msra.mxu0 0.0
  %3001 = vmatprep.subr.mxu0 0.0
  %3002 = vmatpush1.msra.mxu0 0.0
  %3003 = vmatprep.subr.mxu0 0.0
  %3004 = vmatpush1.msra.mxu0 0.0
  %3005 = vmatprep.subr.mxu0 0.0
  %3006 = vmatpush1.msra.mxu0 0.0
  %3007 = vmatprep.subr.mxu0 0.0
  %3008 = vmatpush1.msra.mxu0 0.0
  %3009 = vmatprep.subr.mxu0 0.0
  %3010 = vmatpush1.msra.mxu0 0.0
  %3011 = vmatprep.subr.mxu0 0.0
  %3012 = vmatpush1.msra.mxu0 0.0
  %3013 = vmatprep.subr.mxu0 0.0
  %3014 = vmatpush1.msra.mxu0 0.0
  %3015 = vmatprep.subr.mxu0 0.0
  %3016 = vmatpush1.msra.mxu0 0.0
  %3017 = vmatprep.subr.mxu0 0.0
  %3018 = vmatpush1.msra.mxu0 0.0
  %3019 = vmatprep.subr.mxu0 0.0
  %3020 = vmatpush1.msra.mxu0 0.0
  %3021 = vmatprep.mubr.f32.mxu0 0.0
  %3022 = vmatmul.mubr.f32.gmra.mrb[0].mxu0 %v2952
  %v3023 = vpop.f32.mrb[0].mxu0
  %v3024 = vadd.f32 0.0, %v3023
  %v3025 = vpop.f32.mrb[0].mxu0
  %3026 = vmatprep.mubr.f32.mxu0 0.0
  %3027 = vmatmul.mubr.f32.gmra.mrb[0].mxu0 %v2955
  %v3028 = vpop.f32.mrb[0].mxu0
  %v3029 = vadd.f32 0.0, %v3028
  %v3030 = vpop.f32.mrb[0].mxu0
  %3031 = vdwg.mxu0
  %v3032 = vadd.f32 %v2938, %v3024
  %v3033 = vadd.f32 %v2943, %v3029
  %s3034 = scalar_lea.vmem %s10, 96
  %v3035 = vld [vmem:[%s3034] sm:$0xff]
  %v3036 = vld [vmem:[%s3034 + $0x8] sm:$0xff]
  %v3037 = vld [vmem:[%s3034 + $0x10] sm:$0xff]
  %v3038 = vld [vmem:[%s3034 + $0x18] sm:$0xff]
  %v3040 = vsel %vm570, %v2717, 0
  %v3043 = vsel %vm570, %v2722, 0
  %3045 = vmatprep.subr.mxu0 0.0
  %3046 = vmatpush1.msra.mxu0 %v3035
  %3047 = vmatprep.subr.mxu0 0.0
  %3048 = vmatpush1.msra.mxu0 %v3036
  %3049 = vmatprep.subr.mxu0 0.0
  %3050 = vmatpush1.msra.mxu0 %v3037
  %3051 = vmatprep.subr.mxu0 0.0
  %3052 = vmatpush1.msra.mxu0 %v3038
  %3053 = vmatprep.subr.mxu0 0.0
  %3054 = vmatpush1.msra.mxu0 0.0
  %3055 = vmatprep.subr.mxu0 0.0
  %3056 = vmatpush1.msra.mxu0 0.0
  %3057 = vmatprep.subr.mxu0 0.0
  %3058 = vmatpush1.msra.mxu0 0.0
  %3059 = vmatprep.subr.mxu0 0.0
  %3060 = vmatpush1.msra.mxu0 0.0
  %3061 = vmatprep.subr.mxu0 0.0
  %3062 = vmatpush1.msra.mxu0 0.0
  %3063 = vmatprep.subr.mxu0 0.0
  %3064 = vmatpush1.msra.mxu0 0.0
  %3065 = vmatprep.subr.mxu0 0.0
  %3066 = vmatpush1.msra.mxu0 0.0
  %3067 = vmatprep.subr.mxu0 0.0
  %3068 = vmatpush1.msra.mxu0 0.0
  %3069 = vmatprep.subr.mxu0 0.0
  %3070 = vmatpush1.msra.mxu0 0.0
  %3071 = vmatprep.subr.mxu0 0.0
  %3072 = vmatpush1.msra.mxu0 0.0
  %3073 = vmatprep.subr.mxu0 0.0
  %3074 = vmatpush1.msra.mxu0 0.0
  %3075 = vmatprep.subr.mxu0 0.0
  %3076 = vmatpush1.msra.mxu0 0.0
  %3077 = vmatprep.subr.mxu0 0.0
  %3078 = vmatpush1.msra.mxu0 0.0
  %3079 = vmatprep.subr.mxu0 0.0
  %3080 = vmatpush1.msra.mxu0 0.0
  %3081 = vmatprep.subr.mxu0 0.0
  %3082 = vmatpush1.msra.mxu0 0.0
  %3083 = vmatprep.subr.mxu0 0.0
  %3084 = vmatpush1.msra.mxu0 0.0
  %3085 = vmatprep.subr.mxu0 0.0
  %3086 = vmatpush1.msra.mxu0 0.0
  %3087 = vmatprep.subr.mxu0 0.0
  %3088 = vmatpush1.msra.mxu0 0.0
  %3089 = vmatprep.subr.mxu0 0.0
  %3090 = vmatpush1.msra.mxu0 0.0
  %3091 = vmatprep.subr.mxu0 0.0
  %3092 = vmatpush1.msra.mxu0 0.0
  %3093 = vmatprep.subr.mxu0 0.0
  %3094 = vmatpush1.msra.mxu0 0.0
  %3095 = vmatprep.subr.mxu0 0.0
  %3096 = vmatpush1.msra.mxu0 0.0
  %3097 = vmatprep.subr.mxu0 0.0
  %3098 = vmatpush1.msra.mxu0 0.0
  %3099 = vmatprep.subr.mxu0 0.0
  %3100 = vmatpush1.msra.mxu0 0.0
  %3101 = vmatprep.subr.mxu0 0.0
  %3102 = vmatpush1.msra.mxu0 0.0
  %3103 = vmatprep.subr.mxu0 0.0
  %3104 = vmatpush1.msra.mxu0 0.0
  %3105 = vmatprep.subr.mxu0 0.0
  %3106 = vmatpush1.msra.mxu0 0.0
  %3107 = vmatprep.subr.mxu0 0.0
  %3108 = vmatpush1.msra.mxu0 0.0
  %3109 = vmatprep.mubr.f32.mxu0 0.0
  %3110 = vmatmul.mubr.f32.gmra.mrb[0].mxu0 %v3040
  %v3111 = vpop.f32.mrb[0].mxu0
  %v3112 = vadd.f32 0.0, %v3111
  %v3113 = vpop.f32.mrb[0].mxu0
  %3114 = vmatprep.mubr.f32.mxu0 0.0
  %3115 = vmatmul.mubr.f32.gmra.mrb[0].mxu0 %v3043
  %v3116 = vpop.f32.mrb[0].mxu0
  %v3117 = vadd.f32 0.0, %v3116
  %v3118 = vpop.f32.mrb[0].mxu0
  %3119 = vdwg.mxu0
  %v3120 = vadd.f32 %v3032, %v3112
  %v3121 = vadd.f32 %v3033, %v3117
  %s3122 = scalar_lea.vmem %s10, 128
  %v3123 = vld [vmem:[%s3122] sm:$0xff]
  %v3124 = vld [vmem:[%s3122 + $0x8] sm:$0xff]
  %v3125 = vld [vmem:[%s3122 + $0x10] sm:$0xff]
  %v3126 = vld [vmem:[%s3122 + $0x18] sm:$0xff]
  %v3128 = vsel %vm570, %v2727, 0
  %v3131 = vsel %vm570, %v2732, 0
  %3133 = vmatprep.subr.mxu0 0.0
  %3134 = vmatpush1.msra.mxu0 %v3123
  %3135 = vmatprep.subr.mxu0 0.0
  %3136 = vmatpush1.msra.mxu0 %v3124
  %3137 = vmatprep.subr.mxu0 0.0
  %3138 = vmatpush1.msra.mxu0 %v3125
  %3139 = vmatprep.subr.mxu0 0.0
  %3140 = vmatpush1.msra.mxu0 %v3126
  %3141 = vmatprep.subr.mxu0 0.0
  %3142 = vmatpush1.msra.mxu0 0.0
  %3143 = vmatprep.subr.mxu0 0.0
  %3144 = vmatpush1.msra.mxu0 0.0
  %3145 = vmatprep.subr.mxu0 0.0
  %3146 = vmatpush1.msra.mxu0 0.0
  %3147 = vmatprep.subr.mxu0 0.0
  %3148 = vmatpush1.msra.mxu0 0.0
  %3149 = vmatprep.subr.mxu0 0.0
  %3150 = vmatpush1.msra.mxu0 0.0
  %3151 = vmatprep.subr.mxu0 0.0
  %3152 = vmatpush1.msra.mxu0 0.0
  %3153 = vmatprep.subr.mxu0 0.0
  %3154 = vmatpush1.msra.mxu0 0.0
  %3155 = vmatprep.subr.mxu0 0.0
  %3156 = vmatpush1.msra.mxu0 0.0
  %3157 = vmatprep.subr.mxu0 0.0
  %3158 = vmatpush1.msra.mxu0 0.0
  %3159 = vmatprep.subr.mxu0 0.0
  %3160 = vmatpush1.msra.mxu0 0.0
  %3161 = vmatprep.subr.mxu0 0.0
  %3162 = vmatpush1.msra.mxu0 0.0
  %3163 = vmatprep.subr.mxu0 0.0
  %3164 = vmatpush1.msra.mxu0 0.0
  %3165 = vmatprep.subr.mxu0 0.0
  %3166 = vmatpush1.msra.mxu0 0.0
  %3167 = vmatprep.subr.mxu0 0.0
  %3168 = vmatpush1.msra.mxu0 0.0
  %3169 = vmatprep.subr.mxu0 0.0
  %3170 = vmatpush1.msra.mxu0 0.0
  %3171 = vmatprep.subr.mxu0 0.0
  %3172 = vmatpush1.msra.mxu0 0.0
  %3173 = vmatprep.subr.mxu0 0.0
  %3174 = vmatpush1.msra.mxu0 0.0
  %3175 = vmatprep.subr.mxu0 0.0
  %3176 = vmatpush1.msra.mxu0 0.0
  %3177 = vmatprep.subr.mxu0 0.0
  %3178 = vmatpush1.msra.mxu0 0.0
  %3179 = vmatprep.subr.mxu0 0.0
  %3180 = vmatpush1.msra.mxu0 0.0
  %3181 = vmatprep.subr.mxu0 0.0
  %3182 = vmatpush1.msra.mxu0 0.0
  %3183 = vmatprep.subr.mxu0 0.0
  %3184 = vmatpush1.msra.mxu0 0.0
  %3185 = vmatprep.subr.mxu0 0.0
  %3186 = vmatpush1.msra.mxu0 0.0
  %3187 = vmatprep.subr.mxu0 0.0
  %3188 = vmatpush1.msra.mxu0 0.0
  %3189 = vmatprep.subr.mxu0 0.0
  %3190 = vmatpush1.msra.mxu0 0.0
  %3191 = vmatprep.subr.mxu0 0.0
  %3192 = vmatpush1.msra.mxu0 0.0
  %3193 = vmatprep.subr.mxu0 0.0
  %3194 = vmatpush1.msra.mxu0 0.0
  %3195 = vmatprep.subr.mxu0 0.0
  %3196 = vmatpush1.msra.mxu0 0.0
  %3197 = vmatprep.mubr.f32.mxu0 0.0
  %3198 = vmatmul.mubr.f32.gmra.mrb[0].mxu0 %v3128
  %v3199 = vpop.f32.mrb[0].mxu0
  %v3200 = vadd.f32 0.0, %v3199
  %v3201 = vpop.f32.mrb[0].mxu0
  %3202 = vmatprep.mubr.f32.mxu0 0.0
  %3203 = vmatmul.mubr.f32.gmra.mrb[0].mxu0 %v3131
  %v3204 = vpop.f32.mrb[0].mxu0
  %v3205 = vadd.f32 0.0, %v3204
  %v3206 = vpop.f32.mrb[0].mxu0
  %3207 = vdwg.mxu0
  %v3208 = vadd.f32 %v3120, %v3200
  %v3209 = vadd.f32 %v3121, %v3205
  %s3210 = scalar_lea.vmem %s10, 160
  %v3211 = vld [vmem:[%s3210] sm:$0xff]
  %v3212 = vld [vmem:[%s3210 + $0x8] sm:$0xff]
  %v3213 = vld [vmem:[%s3210 + $0x10] sm:$0xff]
  %v3214 = vld [vmem:[%s3210 + $0x18] sm:$0xff]
  %v3216 = vsel %vm570, %v2737, 0
  %v3219 = vsel %vm570, %v2742, 0
  %3221 = vmatprep.subr.mxu0 0.0
  %3222 = vmatpush1.msra.mxu0 %v3211
  %3223 = vmatprep.subr.mxu0 0.0
  %3224 = vmatpush1.msra.mxu0 %v3212
  %3225 = vmatprep.subr.mxu0 0.0
  %3226 = vmatpush1.msra.mxu0 %v3213
  %3227 = vmatprep.subr.mxu0 0.0
  %3228 = vmatpush1.msra.mxu0 %v3214
  %3229 = vmatprep.subr.mxu0 0.0
  %3230 = vmatpush1.msra.mxu0 0.0
  %3231 = vmatprep.subr.mxu0 0.0
  %3232 = vmatpush1.msra.mxu0 0.0
  %3233 = vmatprep.subr.mxu0 0.0
  %3234 = vmatpush1.msra.mxu0 0.0
  %3235 = vmatprep.subr.mxu0 0.0
  %3236 = vmatpush1.msra.mxu0 0.0
  %3237 = vmatprep.subr.mxu0 0.0
  %3238 = vmatpush1.msra.mxu0 0.0
  %3239 = vmatprep.subr.mxu0 0.0
  %3240 = vmatpush1.msra.mxu0 0.0
  %3241 = vmatprep.subr.mxu0 0.0
  %3242 = vmatpush1.msra.mxu0 0.0
  %3243 = vmatprep.subr.mxu0 0.0
  %3244 = vmatpush1.msra.mxu0 0.0
  %3245 = vmatprep.subr.mxu0 0.0
  %3246 = vmatpush1.msra.mxu0 0.0
  %3247 = vmatprep.subr.mxu0 0.0
  %3248 = vmatpush1.msra.mxu0 0.0
  %3249 = vmatprep.subr.mxu0 0.0
  %3250 = vmatpush1.msra.mxu0 0.0
  %3251 = vmatprep.subr.mxu0 0.0
  %3252 = vmatpush1.msra.mxu0 0.0
  %3253 = vmatprep.subr.mxu0 0.0
  %3254 = vmatpush1.msra.mxu0 0.0
  %3255 = vmatprep.subr.mxu0 0.0
  %3256 = vmatpush1.msra.mxu0 0.0
  %3257 = vmatprep.subr.mxu0 0.0
  %3258 = vmatpush1.msra.mxu0 0.0
  %3259 = vmatprep.subr.mxu0 0.0
  %3260 = vmatpush1.msra.mxu0 0.0
  %3261 = vmatprep.subr.mxu0 0.0
  %3262 = vmatpush1.msra.mxu0 0.0
  %3263 = vmatprep.subr.mxu0 0.0
  %3264 = vmatpush1.msra.mxu0 0.0
  %3265 = vmatprep.subr.mxu0 0.0
  %3266 = vmatpush1.msra.mxu0 0.0
  %3267 = vmatprep.subr.mxu0 0.0
  %3268 = vmatpush1.msra.mxu0 0.0
  %3269 = vmatprep.subr.mxu0 0.0
  %3270 = vmatpush1.msra.mxu0 0.0
  %3271 = vmatprep.subr.mxu0 0.0
  %3272 = vmatpush1.msra.mxu0 0.0
  %3273 = vmatprep.subr.mxu0 0.0
  %3274 = vmatpush1.msra.mxu0 0.0
  %3275 = vmatprep.subr.mxu0 0.0
  %3276 = vmatpush1.msra.mxu0 0.0
  %3277 = vmatprep.subr.mxu0 0.0
  %3278 = vmatpush1.msra.mxu0 0.0
  %3279 = vmatprep.subr.mxu0 0.0
  %3280 = vmatpush1.msra.mxu0 0.0
  %3281 = vmatprep.subr.mxu0 0.0
  %3282 = vmatpush1.msra.mxu0 0.0
  %3283 = vmatprep.subr.mxu0 0.0
  %3284 = vmatpush1.msra.mxu0 0.0
  %3285 = vmatprep.mubr.f32.mxu0 0.0
  %3286 = vmatmul.mubr.f32.gmra.mrb[0].mxu0 %v3216
  %v3287 = vpop.f32.mrb[0].mxu0
  %v3288 = vadd.f32 0.0, %v3287
  %v3289 = vpop.f32.mrb[0].mxu0
  %3290 = vmatprep.mubr.f32.mxu0 0.0
  %3291 = vmatmul.mubr.f32.gmra.mrb[0].mxu0 %v3219
  %v3292 = vpop.f32.mrb[0].mxu0
  %v3293 = vadd.f32 0.0, %v3292
  %v3294 = vpop.f32.mrb[0].mxu0
  %3295 = vdwg.mxu0
  %v3296 = vadd.f32 %v3208, %v3288
  %v3297 = vadd.f32 %v3209, %v3293
  %s3298 = scalar_lea.vmem %s10, 192
  %v3299 = vld [vmem:[%s3298] sm:$0xff]
  %v3300 = vld [vmem:[%s3298 + $0x8] sm:$0xff]
  %v3301 = vld [vmem:[%s3298 + $0x10] sm:$0xff]
  %v3302 = vld [vmem:[%s3298 + $0x18] sm:$0xff]
  %v3304 = vsel %vm570, %v2747, 0
  %v3307 = vsel %vm570, %v2752, 0
  %3309 = vmatprep.subr.mxu0 0.0
  %3310 = vmatpush1.msra.mxu0 %v3299
  %3311 = vmatprep.subr.mxu0 0.0
  %3312 = vmatpush1.msra.mxu0 %v3300
  %3313 = vmatprep.subr.mxu0 0.0
  %3314 = vmatpush1.msra.mxu0 %v3301
  %3315 = vmatprep.subr.mxu0 0.0
  %3316 = vmatpush1.msra.mxu0 %v3302
  %3317 = vmatprep.subr.mxu0 0.0
  %3318 = vmatpush1.msra.mxu0 0.0
  %3319 = vmatprep.subr.mxu0 0.0
  %3320 = vmatpush1.msra.mxu0 0.0
  %3321 = vmatprep.subr.mxu0 0.0
  %3322 = vmatpush1.msra.mxu0 0.0
  %3323 = vmatprep.subr.mxu0 0.0
  %3324 = vmatpush1.msra.mxu0 0.0
  %3325 = vmatprep.subr.mxu0 0.0
  %3326 = vmatpush1.msra.mxu0 0.0
  %3327 = vmatprep.subr.mxu0 0.0
  %3328 = vmatpush1.msra.mxu0 0.0
  %3329 = vmatprep.subr.mxu0 0.0
  %3330 = vmatpush1.msra.mxu0 0.0
  %3331 = vmatprep.subr.mxu0 0.0
  %3332 = vmatpush1.msra.mxu0 0.0
  %3333 = vmatprep.subr.mxu0 0.0
  %3334 = vmatpush1.msra.mxu0 0.0
  %3335 = vmatprep.subr.mxu0 0.0
  %3336 = vmatpush1.msra.mxu0 0.0
  %3337 = vmatprep.subr.mxu0 0.0
  %3338 = vmatpush1.msra.mxu0 0.0
  %3339 = vmatprep.subr.mxu0 0.0
  %3340 = vmatpush1.msra.mxu0 0.0
  %3341 = vmatprep.subr.mxu0 0.0
  %3342 = vmatpush1.msra.mxu0 0.0
  %3343 = vmatprep.subr.mxu0 0.0
  %3344 = vmatpush1.msra.mxu0 0.0
  %3345 = vmatprep.subr.mxu0 0.0
  %3346 = vmatpush1.msra.mxu0 0.0
  %3347 = vmatprep.subr.mxu0 0.0
  %3348 = vmatpush1.msra.mxu0 0.0
  %3349 = vmatprep.subr.mxu0 0.0
  %3350 = vmatpush1.msra.mxu0 0.0
  %3351 = vmatprep.subr.mxu0 0.0
  %3352 = vmatpush1.msra.mxu0 0.0
  %3353 = vmatprep.subr.mxu0 0.0
  %3354 = vmatpush1.msra.mxu0 0.0
  %3355 = vmatprep.subr.mxu0 0.0
  %3356 = vmatpush1.msra.mxu0 0.0
  %3357 = vmatprep.subr.mxu0 0.0
  %3358 = vmatpush1.msra.mxu0 0.0
  %3359 = vmatprep.subr.mxu0 0.0
  %3360 = vmatpush1.msra.mxu0 0.0
  %3361 = vmatprep.subr.mxu0 0.0
  %3362 = vmatpush1.msra.mxu0 0.0
  %3363 = vmatprep.subr.mxu0 0.0
  %3364 = vmatpush1.msra.mxu0 0.0
  %3365 = vmatprep.subr.mxu0 0.0
  %3366 = vmatpush1.msra.mxu0 0.0
  %3367 = vmatprep.subr.mxu0 0.0
  %3368 = vmatpush1.msra.mxu0 0.0
  %3369 = vmatprep.subr.mxu0 0.0
  %3370 = vmatpush1.msra.mxu0 0.0
  %3371 = vmatprep.subr.mxu0 0.0
  %3372 = vmatpush1.msra.mxu0 0.0
  %3373 = vmatprep.mubr.f32.mxu0 0.0
  %3374 = vmatmul.mubr.f32.gmra.mrb[0].mxu0 %v3304
  %v3375 = vpop.f32.mrb[0].mxu0
  %v3376 = vadd.f32 0.0, %v3375
  %v3377 = vpop.f32.mrb[0].mxu0
  %3378 = vmatprep.mubr.f32.mxu0 0.0
  %3379 = vmatmul.mubr.f32.gmra.mrb[0].mxu0 %v3307
  %v3380 = vpop.f32.mrb[0].mxu0
  %v3381 = vadd.f32 0.0, %v3380
  %v3382 = vpop.f32.mrb[0].mxu0
  %3383 = vdwg.mxu0
  %v3384 = vadd.f32 %v3296, %v3376
  %v3385 = vadd.f32 %v3297, %v3381
  %s3386 = scalar_lea.vmem %s10, 224
  %v3387 = vld [vmem:[%s3386] sm:$0xff]
  %v3388 = vld [vmem:[%s3386 + $0x8] sm:$0xff]
  %v3389 = vld [vmem:[%s3386 + $0x10] sm:$0xff]
  %v3390 = vld [vmem:[%s3386 + $0x18] sm:$0xff]
  %v3392 = vsel %vm570, %v2757, 0
  %v3395 = vsel %vm570, %v2762, 0
  %3397 = vmatprep.subr.mxu0 0.0
  %3398 = vmatpush1.msra.mxu0 %v3387
  %3399 = vmatprep.subr.mxu0 0.0
  %3400 = vmatpush1.msra.mxu0 %v3388
  %3401 = vmatprep.subr.mxu0 0.0
  %3402 = vmatpush1.msra.mxu0 %v3389
  %3403 = vmatprep.subr.mxu0 0.0
  %3404 = vmatpush1.msra.mxu0 %v3390
  %3405 = vmatprep.subr.mxu0 0.0
  %3406 = vmatpush1.msra.mxu0 0.0
  %3407 = vmatprep.subr.mxu0 0.0
  %3408 = vmatpush1.msra.mxu0 0.0
  %3409 = vmatprep.subr.mxu0 0.0
  %3410 = vmatpush1.msra.mxu0 0.0
  %3411 = vmatprep.subr.mxu0 0.0
  %3412 = vmatpush1.msra.mxu0 0.0
  %3413 = vmatprep.subr.mxu0 0.0
  %3414 = vmatpush1.msra.mxu0 0.0
  %3415 = vmatprep.subr.mxu0 0.0
  %3416 = vmatpush1.msra.mxu0 0.0
  %3417 = vmatprep.subr.mxu0 0.0
  %3418 = vmatpush1.msra.mxu0 0.0
  %3419 = vmatprep.subr.mxu0 0.0
  %3420 = vmatpush1.msra.mxu0 0.0
  %3421 = vmatprep.subr.mxu0 0.0
  %3422 = vmatpush1.msra.mxu0 0.0
  %3423 = vmatprep.subr.mxu0 0.0
  %3424 = vmatpush1.msra.mxu0 0.0
  %3425 = vmatprep.subr.mxu0 0.0
  %3426 = vmatpush1.msra.mxu0 0.0
  %3427 = vmatprep.subr.mxu0 0.0
  %3428 = vmatpush1.msra.mxu0 0.0
  %3429 = vmatprep.subr.mxu0 0.0
  %3430 = vmatpush1.msra.mxu0 0.0
  %3431 = vmatprep.subr.mxu0 0.0
  %3432 = vmatpush1.msra.mxu0 0.0
  %3433 = vmatprep.subr.mxu0 0.0
  %3434 = vmatpush1.msra.mxu0 0.0
  %3435 = vmatprep.subr.mxu0 0.0
  %3436 = vmatpush1.msra.mxu0 0.0
  %3437 = vmatprep.subr.mxu0 0.0
  %3438 = vmatpush1.msra.mxu0 0.0
  %3439 = vmatprep.subr.mxu0 0.0
  %3440 = vmatpush1.msra.mxu0 0.0
  %3441 = vmatprep.subr.mxu0 0.0
  %3442 = vmatpush1.msra.mxu0 0.0
  %3443 = vmatprep.subr.mxu0 0.0
  %3444 = vmatpush1.msra.mxu0 0.0
  %3445 = vmatprep.subr.mxu0 0.0
  %3446 = vmatpush1.msra.mxu0 0.0
  %3447 = vmatprep.subr.mxu0 0.0
  %3448 = vmatpush1.msra.mxu0 0.0
  %3449 = vmatprep.subr.mxu0 0.0
  %3450 = vmatpush1.msra.mxu0 0.0
  %3451 = vmatprep.subr.mxu0 0.0
  %3452 = vmatpush1.msra.mxu0 0.0
  %3453 = vmatprep.subr.mxu0 0.0
  %3454 = vmatpush1.msra.mxu0 0.0
  %3455 = vmatprep.subr.mxu0 0.0
  %3456 = vmatpush1.msra.mxu0 0.0
  %3457 = vmatprep.subr.mxu0 0.0
  %3458 = vmatpush1.msra.mxu0 0.0
  %3459 = vmatprep.subr.mxu0 0.0
  %3460 = vmatpush1.msra.mxu0 0.0
  %3461 = vmatprep.mubr.f32.mxu0 0.0
  %3462 = vmatmul.mubr.f32.gmra.mrb[0].mxu0 %v3392
  %v3463 = vpop.f32.mrb[0].mxu0
  %v3464 = vadd.f32 0.0, %v3463
  %v3465 = vpop.f32.mrb[0].mxu0
  %3466 = vmatprep.mubr.f32.mxu0 0.0
  %3467 = vmatmul.mubr.f32.gmra.mrb[0].mxu0 %v3395
  %v3468 = vpop.f32.mrb[0].mxu0
  %v3469 = vadd.f32 0.0, %v3468
  %v3470 = vpop.f32.mrb[0].mxu0
  %3471 = vdwg.mxu0
  %v3472 = vadd.f32 %v3384, %v3464
  %v3473 = vadd.f32 %v3385, %v3469
  %s3474 = scalar_lea.vmem %s10, 256
  %v3475 = vld [vmem:[%s3474] sm:$0xff]
  %v3476 = vld [vmem:[%s3474 + $0x8] sm:$0xff]
  %v3477 = vld [vmem:[%s3474 + $0x10] sm:$0xff]
  %v3478 = vld [vmem:[%s3474 + $0x18] sm:$0xff]
  %v3480 = vsel %vm570, %v2767, 0
  %v3483 = vsel %vm570, %v2772, 0
  %3485 = vmatprep.subr.mxu0 0.0
  %3486 = vmatpush1.msra.mxu0 %v3475
  %3487 = vmatprep.subr.mxu0 0.0
  %3488 = vmatpush1.msra.mxu0 %v3476
  %3489 = vmatprep.subr.mxu0 0.0
  %3490 = vmatpush1.msra.mxu0 %v3477
  %3491 = vmatprep.subr.mxu0 0.0
  %3492 = vmatpush1.msra.mxu0 %v3478
  %3493 = vmatprep.subr.mxu0 0.0
  %3494 = vmatpush1.msra.mxu0 0.0
  %3495 = vmatprep.subr.mxu0 0.0
  %3496 = vmatpush1.msra.mxu0 0.0
  %3497 = vmatprep.subr.mxu0 0.0
  %3498 = vmatpush1.msra.mxu0 0.0
  %3499 = vmatprep.subr.mxu0 0.0
  %3500 = vmatpush1.msra.mxu0 0.0
  %3501 = vmatprep.subr.mxu0 0.0
  %3502 = vmatpush1.msra.mxu0 0.0
  %3503 = vmatprep.subr.mxu0 0.0
  %3504 = vmatpush1.msra.mxu0 0.0
  %3505 = vmatprep.subr.mxu0 0.0
  %3506 = vmatpush1.msra.mxu0 0.0
  %3507 = vmatprep.subr.mxu0 0.0
  %3508 = vmatpush1.msra.mxu0 0.0
  %3509 = vmatprep.subr.mxu0 0.0
  %3510 = vmatpush1.msra.mxu0 0.0
  %3511 = vmatprep.subr.mxu0 0.0
  %3512 = vmatpush1.msra.mxu0 0.0
  %3513 = vmatprep.subr.mxu0 0.0
  %3514 = vmatpush1.msra.mxu0 0.0
  %3515 = vmatprep.subr.mxu0 0.0
  %3516 = vmatpush1.msra.mxu0 0.0
  %3517 = vmatprep.subr.mxu0 0.0
  %3518 = vmatpush1.msra.mxu0 0.0
  %3519 = vmatprep.subr.mxu0 0.0
  %3520 = vmatpush1.msra.mxu0 0.0
  %3521 = vmatprep.subr.mxu0 0.0
  %3522 = vmatpush1.msra.mxu0 0.0
  %3523 = vmatprep.subr.mxu0 0.0
  %3524 = vmatpush1.msra.mxu0 0.0
  %3525 = vmatprep.subr.mxu0 0.0
  %3526 = vmatpush1.msra.mxu0 0.0
  %3527 = vmatprep.subr.mxu0 0.0
  %3528 = vmatpush1.msra.mxu0 0.0
  %3529 = vmatprep.subr.mxu0 0.0
  %3530 = vmatpush1.msra.mxu0 0.0
  %3531 = vmatprep.subr.mxu0 0.0
  %3532 = vmatpush1.msra.mxu0 0.0
  %3533 = vmatprep.subr.mxu0 0.0
  %3534 = vmatpush1.msra.mxu0 0.0
  %3535 = vmatprep.subr.mxu0 0.0
  %3536 = vmatpush1.msra.mxu0 0.0
  %3537 = vmatprep.subr.mxu0 0.0
  %3538 = vmatpush1.msra.mxu0 0.0
  %3539 = vmatprep.subr.mxu0 0.0
  %3540 = vmatpush1.msra.mxu0 0.0
  %3541 = vmatprep.subr.mxu0 0.0
  %3542 = vmatpush1.msra.mxu0 0.0
  %3543 = vmatprep.subr.mxu0 0.0
  %3544 = vmatpush1.msra.mxu0 0.0
  %3545 = vmatprep.subr.mxu0 0.0
  %3546 = vmatpush1.msra.mxu0 0.0
  %3547 = vmatprep.subr.mxu0 0.0
  %3548 = vmatpush1.msra.mxu0 0.0
  %3549 = vmatprep.mubr.f32.mxu0 0.0
  %3550 = vmatmul.mubr.f32.gmra.mrb[0].mxu0 %v3480
  %v3551 = vpop.f32.mrb[0].mxu0
  %v3552 = vadd.f32 0.0, %v3551
  %v3553 = vpop.f32.mrb[0].mxu0
  %3554 = vmatprep.mubr.f32.mxu0 0.0
  %3555 = vmatmul.mubr.f32.gmra.mrb[0].mxu0 %v3483
  %v3556 = vpop.f32.mrb[0].mxu0
  %v3557 = vadd.f32 0.0, %v3556
  %v3558 = vpop.f32.mrb[0].mxu0
  %3559 = vdwg.mxu0
  %v3560 = vadd.f32 %v3472, %v3552
  %v3561 = vadd.f32 %v3473, %v3557
  %v3562 = vld [vmem:[%s11] sm:$0x1]
  %v3564 = vlaneseq
  %v3565 = vshrl.u32 %v3564, 7
  %v3566 = vsub.s32 0, %v3565
  %v3567 = vrot.slane %v3562, %v3566
  %v3569 = vadd.f32 %v3560, %v3567
  %v3570 = vadd.f32 %v3561, %v3567
  %v3571 = vmax.f32 %v3569, 0.0
  %v3572 = vmax.f32 %v3570, 0.0
  %vm3573 = vcmask 80896
  %3574 = vst.msk [vmem:[%s12] sm:$0xff] %vm3573, %v3571
  %3575 = vst.msk [vmem:[%s12 + $0x8] sm:$0xff] %vm3573, %v3572
  // Predicated region
  $region50: #{encoder_forward.1} parent=0 // pred_check
    _
  $region51: #{encoder_forward.1} parent=0 // pred_check_branch
    %3577 = sbr.rel (0) target = $region53
  $region52: #{encoder_forward.1} parent=0 // pred_region
    _
  $region53: #{encoder_forward.1} parent=0 // pred_fallthru
    _
  // Predicated region
  $region54: #{encoder_forward.1} parent=0 // pred_check
    _
  $region55: #{encoder_forward.1} parent=0 // pred_check_branch
    %3579 = sbr.rel (0) target = $region57
  $region56: #{encoder_forward.1} parent=0 // pred_region
    _
  $region57: #{encoder_forward.1} parent=0 // pred_fallthru
    _

</llo_original>
